<compile_context>
chip_gen: v6e
topology: v6e:2x2x1
jax: 0.10.0
libtpu: 0.0.40
codegen_flags: <defaults>
</compile_context>

<pallas_src>
import numpy as np
import jax
import jax.numpy as jnp
from jax import lax
from jax.experimental import pallas as pl
from jax.experimental.pallas import tpu as pltpu

# ---- small, forward-consistent configuration ----
BATCH = 2
TX = 8            # input sequence length
INPUT_SIZE = 16
N_CLASSES = 10
TY = 4            # decoder output length
PROJECT = 25      # attention projection size
PROJECT_PAD = 32  # lane-padded projection size used inside the kernel
OUT_PAD = 128     # lane-dense logits width (sliced back to N_CLASSES)
ENC_H = 32        # encoder hidden size (per direction)
DEC_H = 32        # decoder hidden size
PACK_W = 128      # lane width of the packed-weights array


def _pad8(n):
    return ((n + 7) // 8) * 8


# Packed-weight layout: (name, rows, cols). Every field starts at an 8-aligned
# sublane offset of a single (PACK_ROWS, 128) f32 array, so the whole parameter
# set moves HBM->VMEM in one DMA and is pulled out with static slices in-kernel.
_PACK_FIELDS = (
    ("wih1", 2 * INPUT_SIZE, 4 * ENC_H),   # [Wih1_f ; Wih1_b] block rows
    ("b1",   2 * BATCH,      4 * ENC_H),   # per-direction bias rows
    ("whh1", 2 * ENC_H,      4 * ENC_H),   # [Whh1_f ; Whh1_b] block rows
    ("wih2", 4 * ENC_H,      4 * ENC_H),
    ("b2",   2 * BATCH,      4 * ENC_H),
    ("whh2", 2 * ENC_H,      4 * ENC_H),
    ("wa1e", 2 * ENC_H,      PROJECT_PAD),
    ("wa1s", DEC_H,          PROJECT_PAD),
    ("ba1",  1,              PROJECT_PAD),
    ("wa2",  PROJECT_PAD,    1),
    ("ba2",  1,              1),
    ("wdc",  2 * ENC_H,      4 * DEC_H),
    ("wds",  DEC_H,          4 * DEC_H),
    ("bd",   1,              4 * DEC_H),
    ("wfc",  DEC_H,          OUT_PAD),
    ("bfc",  1,              OUT_PAD),
)


def _pack_offsets():
    offs, row = {}, 0
    for name, r, c in _PACK_FIELDS:
        offs[name] = (row, r, c)
        row += _pad8(r)
    return offs, row


_PACK_OFFS, PACK_ROWS = _pack_offsets()


# --------------------------------------------------------------------------
# Kernel
# --------------------------------------------------------------------------
def _lstm_gates(gates, c_prev, H):
    """LSTM nonlinearity with gate column order [i, f, o, g].

    gates: (N, 4H), c_prev: (N, H). One sigmoid over 3H + one tanh over H.
    """
    ifo = jax.nn.sigmoid(gates[:, :3 * H])
    g = jnp.tanh(gates[:, 3 * H:])
    i_ = ifo[:, :H]
    f_ = ifo[:, H:2 * H]
    o_ = ifo[:, 2 * H:]
    c_new = f_ * c_prev + i_ * g
    h_new = o_ * jnp.tanh(c_new)
    return h_new, c_new


def speech_rnn_kernel(xblk_ref, w_ref, out_ref, l1_ref, enc_ref):
    """SpeechRNN forward.

    xblk_ref : (Tx*2B, 2D)  block-diagonal encoder-layer-1 input
               (block i: rows [:B] = x[t=i] in lanes [:D],
                         rows [B:] = x[t=Tx-1-i] in lanes [D:])
    w_ref    : (PACK_ROWS, 128) packed weights/biases (see _PACK_FIELDS)
    out_ref  : (Ty*B, OUT_PAD) lane-dense logits
    l1_ref   : (Tx*2B, 4H) scratch — block-diagonal layer-2 input
    enc_ref  : (Tx*B, 2H)  scratch — time-major encoder outputs
    """
    f32 = jnp.float32
    B, Tx, Ty = BATCH, TX, TY
    H, Hd = ENC_H, DEC_H
    E2 = 2 * H

    def w(name):
        off, r, c = _PACK_OFFS[name]
        return w_ref[off:off + r, :c]

    # direction mask for the padded recurrent state: rows [:B] keep lanes [:H]
    # (forward h), rows [B:] keep lanes [H:] (backward h).
    ones = jnp.ones((B, H), f32)
    zeros = jnp.zeros((B, H), f32)
    dirmask = jnp.concatenate(
        [jnp.concatenate([ones, zeros], axis=1),
         jnp.concatenate([zeros, ones], axis=1)], axis=0)          # (2B, 2H)

    def bi_lstm(x_blk, wih_name, b_name, whh_name, emit):
        """Fused fwd/bwd LSTM layer on a block-diagonal input.

        x_blk: (Tx*2B, 2*in); per step i, rows [:B] carry the forward-time-i
        input in lanes [:in] (zeros elsewhere) and rows [B:] the backward-time
        (Tx-1-i) input in lanes [in:].  emit(i, h_new) stores the step outputs
        (fwd output at time i = h_new[:B], bwd output at time Tx-1-i = h_new[B:]).
        """
        whh_bd = w(whh_name)                                       # (2H, 4H)
        b_bd = w(b_name)                                           # (2B, 4H)
        gih = jnp.dot(x_blk, w(wih_name), preferred_element_type=f32)  # (Tx*2B,4H)
        # per-step gate blocks with bias folded in — independent of recurrence,
        # so the scheduler keeps them off the serial chain
        gih_blk = [gih[i * 2 * B:(i + 1) * 2 * B, :] + b_bd for i in range(Tx)]

        h_pad = jnp.zeros((2 * B, E2), f32)   # fwd h in lanes [:H], bwd in [H:]
        c = jnp.zeros((2 * B, H), f32)
        for i in range(Tx):                   # fully unrolled, static slices
            hg = jnp.dot(h_pad, whh_bd, preferred_element_type=f32)   # (2B, 4H)
            gates = gih_blk[i] + hg
            h_new, c = _lstm_gates(gates, c, H)
            h_pad = jnp.concatenate([h_new, h_new], axis=1) * dirmask
            emit(i, h_new)

    # ---- encoder layer 1: outputs stored straight into the block-diagonal
    #      layer-2 input scratch (stores overlap the recurrence matmuls) ----
    l1_ref[...] = jnp.zeros(l1_ref.shape, f32)   # zero the cross-direction lanes

    def emit_l1(i, h_new):
        j = Tx - 1 - i
        fwd_h = h_new[:B]                     # layer-1 fwd output at time i
        bwd_h = h_new[B:]                     # layer-1 bwd output at time j
        l1_ref[2 * B * i:2 * B * i + B,             0:H] = fwd_h
        l1_ref[2 * B * j + B:2 * B * j + 2 * B,     E2:E2 + H] = fwd_h
        l1_ref[2 * B * j:2 * B * j + B,             H:E2] = bwd_h
        l1_ref[2 * B * i + B:2 * B * i + 2 * B,     E2 + H:2 * E2] = bwd_h

    bi_lstm(xblk_ref[...], "wih1", "b1", "whh1", emit_l1)

    # ---- encoder layer 2: outputs stored time-major for the attention ----
    def emit_l2(i, h_new):
        j = Tx - 1 - i
        enc_ref[i * B:(i + 1) * B, 0:H] = h_new[:B]        # fwd output at t=i
        enc_ref[j * B:(j + 1) * B, H:E2] = h_new[B:]       # bwd output at t=j

    bi_lstm(l1_ref[...], "wih2", "b2", "whh2", emit_l2)

    enc = enc_ref[...]                        # (Tx*B, 2H) time-major
    enc3 = enc.reshape(Tx, B, E2)

    # ---- attention decoder ----
    # encoder projection (+ bias) is decoder-step invariant -> hoisted
    enc_proj = (jnp.dot(enc, w("wa1e"), preferred_element_type=f32)
                + w("ba1"))                                        # (Tx*B, Pp)
    Pp = enc_proj.shape[1]
    wa1s = w("wa1s")
    wa2 = w("wa2")
    ba2 = w("ba2")
    wd_ctx = w("wdc")
    wd_s = w("wds")
    bd = w("bd")

    s = jnp.zeros((B, Hd), f32)
    c = jnp.zeros((B, Hd), f32)
    s_steps = []
    for _ in range(Ty):                       # fully unrolled
        # projections of the previous state issue at the top of the step and
        # overlap the attention sub-chain (split decoder weight)
        sg = jnp.dot(s, wd_s, preferred_element_type=f32) + bd      # (B, 4Hd)
        s_proj = jnp.dot(s, wa1s, preferred_element_type=f32)       # (B, Pp)
        s_bc = jnp.broadcast_to(s_proj[None, :, :], (Tx, B, Pp)).reshape(Tx * B, Pp)
        e = jnp.tanh(enc_proj + s_bc)                               # (Tx*B, Pp)
        energies = jax.nn.relu(
            jnp.dot(e, wa2, preferred_element_type=f32) + ba2)      # (Tx*B, 1)
        alphas = jax.nn.softmax(energies.reshape(Tx, B, 1), axis=0)  # over Tx
        context = jnp.sum(alphas * enc3, axis=0)                    # (B, 2H)
        gates_d = jnp.dot(context, wd_ctx, preferred_element_type=f32) + sg
        s, c = _lstm_gates(gates_d, c, Hd)
        s_steps.append(s)

    # batched output projection: one matmul, one lane-dense (128-wide) store
    s_all = jnp.concatenate(s_steps, axis=0)                        # (Ty*B, Hd)
    out_ref[...] = (jnp.dot(s_all, w("wfc"), preferred_element_type=f32)
                    + w("bfc"))


# --------------------------------------------------------------------------
# One-time weight preparation (kernel layout)
# --------------------------------------------------------------------------
def _reorder_gates(w, h):
    """Reorder the 4H gate axis from PyTorch [i, f, g, o] to kernel [i, f, o, g]."""
    return jnp.concatenate([w[..., :2 * h], w[..., 3 * h:], w[..., 2 * h:3 * h]],
                           axis=-1)


def prepare_weights(params):
    """Pack all parameters (kernel layout) into one (PACK_ROWS, 128) f32 array.

    Called ONCE at init; the per-call forward only builds the block-diagonal x.
    """
    (wih1f, whh1f, b1f, wih1b, whh1b, b1b,
     wih2f, whh2f, b2f, wih2b, whh2b, b2b,
     wa1, ba1, wa2, ba2,
     wihd, whhd, bd, wfc, bfc) = params
    H, Hd, B = ENC_H, DEC_H, BATCH
    ro = _reorder_gates
    ppad = PROJECT_PAD - PROJECT

    def bias_rows(bf, bb):
        return jnp.concatenate(
            [jnp.broadcast_to(ro(bf, H), (B, 4 * H)),
             jnp.broadcast_to(ro(bb, H), (B, 4 * H))], axis=0)      # (2B, 4H)

    tensors = {
        "wih1": jnp.concatenate([ro(wih1f, H), ro(wih1b, H)], axis=0),
        "b1":   bias_rows(b1f, b1b),
        "whh1": jnp.concatenate([ro(whh1f, H), ro(whh1b, H)], axis=0),
        "wih2": jnp.concatenate([ro(wih2f, H), ro(wih2b, H)], axis=0),
        "b2":   bias_rows(b2f, b2b),
        "whh2": jnp.concatenate([ro(whh2f, H), ro(whh2b, H)], axis=0),
        "wa1e": jnp.pad(wa1[:2 * H], ((0, 0), (0, ppad))),
        "wa1s": jnp.pad(wa1[2 * H:], ((0, 0), (0, ppad))),
        "ba1":  jnp.pad(ba1, ((0, 0), (0, ppad))),
        "wa2":  jnp.pad(wa2, ((0, ppad), (0, 0))),
        "ba2":  ba2,
        "wdc":  ro(wihd, Hd),
        "wds":  ro(whhd, Hd),
        "bd":   ro(bd, Hd),
        "wfc":  jnp.pad(wfc, ((0, 0), (0, OUT_PAD - N_CLASSES))),
        "bfc":  jnp.pad(bfc, ((0, 0), (0, OUT_PAD - N_CLASSES))),
    }
    blocks = []
    for name, r, c in _PACK_FIELDS:
        t = tensors[name].astype(jnp.float32)
        assert t.shape == (r, c), (name, t.shape, (r, c))
        blocks.append(jnp.pad(t, ((0, _pad8(r) - r), (0, PACK_W - c))))
    return jnp.concatenate(blocks, axis=0)                          # (PACK_ROWS, 128)


# --------------------------------------------------------------------------
# Forward wrapper
# --------------------------------------------------------------------------
def _pallas_forward(x_blk, wpack):
    vmem = pl.BlockSpec(memory_space=pltpu.MemorySpace.VMEM)
    return pl.pallas_call(
        speech_rnn_kernel,
        out_shape=jax.ShapeDtypeStruct((TY * BATCH, OUT_PAD), jnp.float32),
        in_specs=[vmem, vmem],
        out_specs=vmem,
        scratch_shapes=[
            pltpu.VMEM((2 * TX * BATCH, 4 * ENC_H), jnp.float32),   # layer-2 blocked input
            pltpu.VMEM((TX * BATCH, 2 * ENC_H), jnp.float32),       # encoder outputs
        ],
    )(x_blk, wpack)


@jax.jit
def speech_rnn_forward(x, wpack):
    """x: (B, Tx, input_size), wpack: packed weights -> (B, Ty, n_classes) logits."""
    B, Tx, D = x.shape
    xt = jnp.transpose(x, (1, 0, 2)).astype(jnp.float32)            # (Tx, B, D)
    # block-diagonal layer-1 input: block i rows [:B] = x[t=i] in lanes [:D],
    #                               rows [B:] = x[t=Tx-1-i] in lanes [D:]
    fwd = jnp.pad(xt, ((0, 0), (0, 0), (0, D)))
    bwd = jnp.pad(xt[::-1], ((0, 0), (0, 0), (D, 0)))
    x_blk = jnp.concatenate([fwd, bwd], axis=1).reshape(Tx * 2 * B, 2 * D)
    out2d = _pallas_forward(x_blk, wpack)                           # (Ty*B, OUT_PAD)
    out = out2d[:, :N_CLASSES].reshape(TY, B, N_CLASSES)
    return jnp.transpose(out, (1, 0, 2))


# --------------------------------------------------------------------------
# Parameters & pure-JAX reference (PyTorch gate order [i, f, g, o])
# --------------------------------------------------------------------------
def init_params(key):
    """Deterministic synthetic parameters matching the module's shapes."""
    keys = jax.random.split(key, 16)
    it = iter(keys)

    def uni(k, shape, scale):
        return jax.random.uniform(k, shape, jnp.float32, minval=-scale, maxval=scale)

    def lstm_dir(k, in_size, hidden):
        k1, k2, k3, k4 = jax.random.split(k, 4)
        s = 1.0 / float(np.sqrt(hidden))
        wih = uni(k1, (4 * hidden, in_size), s)     # PyTorch weight_ih
        whh = uni(k2, (4 * hidden, hidden), s)      # PyTorch weight_hh
        bih = uni(k3, (4 * hidden,), s)
        bhh = uni(k4, (4 * hidden,), s)
        # pre-transpose and sum biases
        return [wih.T, whh.T, (bih + bhh).reshape(1, 4 * hidden)]

    params = []
    params += lstm_dir(next(it), INPUT_SIZE, ENC_H)        # enc layer1 fwd
    params += lstm_dir(next(it), INPUT_SIZE, ENC_H)        # enc layer1 bwd
    params += lstm_dir(next(it), 2 * ENC_H, ENC_H)         # enc layer2 fwd
    params += lstm_dir(next(it), 2 * ENC_H, ENC_H)         # enc layer2 bwd
    s_a1 = 1.0 / float(np.sqrt(2 * ENC_H + DEC_H))
    params.append(uni(next(it), (2 * ENC_H + DEC_H, PROJECT), s_a1))   # wa1
    params.append(uni(next(it), (1, PROJECT), s_a1))                   # ba1
    s_a2 = 1.0 / float(np.sqrt(PROJECT))
    params.append(uni(next(it), (PROJECT, 1), s_a2))                   # wa2
    params.append(uni(next(it), (1, 1), s_a2))                         # ba2
    params += lstm_dir(next(it), 2 * ENC_H, DEC_H)                     # decoder LSTM
    s_fc = 1.0 / float(np.sqrt(DEC_H))
    params.append(uni(next(it), (DEC_H, N_CLASSES), s_fc))             # wfc
    params.append(uni(next(it), (1, N_CLASSES), s_fc))                 # bfc
    return params


def reference_forward(x, params):
    """Pure-JAX reference with PyTorch-faithful math (for validation)."""
    (wih1f, whh1f, b1f, wih1b, whh1b, b1b,
     wih2f, whh2f, b2f, wih2b, whh2b, b2b,
     wa1, ba1, wa2, ba2,
     wihd, whhd, bd, wfc, bfc) = params
    B, Tx, _ = x.shape
    xt = jnp.transpose(x, (1, 0, 2))

    def cell(xv, h, c, wih, whh, b):
        H = whh.shape[0]
        gates = xv @ wih + h @ whh + b
        i = jax.nn.sigmoid(gates[:, :H])
        f = jax.nn.sigmoid(gates[:, H:2 * H])
        g = jnp.tanh(gates[:, 2 * H:3 * H])
        o = jax.nn.sigmoid(gates[:, 3 * H:])
        c = f * c + i * g
        h = o * jnp.tanh(c)
        return h, c

    def run(seq, wih, whh, b, reverse):
        H = whh.shape[0]
        def step(carry, xv):
            h, c = cell(xv, carry[0], carry[1], wih, whh, b)
            return (h, c), h
        init = (jnp.zeros((B, H), jnp.float32), jnp.zeros((B, H), jnp.float32))
        _, hs = lax.scan(step, init, seq, reverse=reverse)
        return hs

    l1 = jnp.concatenate([run(xt, wih1f, whh1f, b1f, False),
                          run(xt, wih1b, whh1b, b1b, True)], axis=-1)
    enc = jnp.concatenate([run(l1, wih2f, whh2f, b2f, False),
                           run(l1, wih2b, whh2b, b2b, True)], axis=-1)
    E2 = enc.shape[-1]
    Hd = whhd.shape[0]
    s = jnp.zeros((B, Hd), jnp.float32)
    c = jnp.zeros((B, Hd), jnp.float32)
    outs = []
    for _ in range(TY):
        e = jnp.tanh(enc @ wa1[:E2] + (s @ wa1[E2:])[None] + ba1)
        energies = jax.nn.relu(e @ wa2 + ba2)
        alphas = jax.nn.softmax(energies, axis=0)
        context = jnp.sum(alphas * enc, axis=0)
        s, c = cell(context, s, c, wihd, whhd, bd)
        outs.append(s @ wfc + bfc)
    return jnp.stack(outs, axis=1)


if __name__ == "__main__":
    key = jax.random.PRNGKey(0)
    pkey, xkey = jax.random.split(key)
    params = init_params(pkey)
    wpack = jax.block_until_ready(prepare_weights(params))   # one-time weight prep
    x = jax.random.normal(xkey, (BATCH, TX, INPUT_SIZE), jnp.float32)

    out = speech_rnn_forward(x, wpack)
    out = jax.block_until_ready(out)
    assert out.shape == (BATCH, TY, N_CLASSES), out.shape

    ref = reference_forward(x, params)
    np.testing.assert_allclose(np.asarray(out), np.asarray(ref), rtol=1e-4, atol=1e-4)
    print("KERNEL_OK")
</pallas_src>

<mosaic_0001>
module attributes {stable_mosaic.version = 11 : i64} {
  func.func @speech_rnn_kernel(%arg0: memref<32x32xf32, #tpu.memory_space<vmem>>, %arg1: memref<592x128xf32, #tpu.memory_space<vmem>>, %arg2: memref<8x128xf32, #tpu.memory_space<vmem>>, %arg3: memref<32x128xf32, #tpu.memory_space<vmem>>, %arg4: memref<16x64xf32, #tpu.memory_space<vmem>>) attributes {dimension_semantics = [], scalar_prefetch = 0 : i64, scratch_operands = 2 : i64, tpu.core_type = #tpu.core_type<tc>} {
    %cst = arith.constant 1.000000e+00 : f32
    %0 = vector.broadcast %cst : f32 to vector<2x32xf32>
    %cst_0 = arith.constant 0.000000e+00 : f32
    %1 = vector.broadcast %cst_0 : f32 to vector<2x32xf32>
    %2 = tpu.concatenate %0, %1 in 1 : vector<2x32xf32>, vector<2x32xf32> -> vector<2x64xf32>
    %3 = tpu.concatenate %1, %0 in 1 : vector<2x32xf32>, vector<2x32xf32> -> vector<2x64xf32>
    %4 = tpu.concatenate %2, %3 in 0 : vector<2x64xf32>, vector<2x64xf32> -> vector<4x64xf32>
    %cst_1 = arith.constant 0.000000e+00 : f32
    %5 = vector.broadcast %cst_1 : f32 to vector<32x128xf32>
    %c0 = arith.constant 0 : index
    %c0_2 = arith.constant 0 : index
    %6 = vector.load %arg3[%c0, %c0_2] : memref<32x128xf32, #tpu.memory_space<vmem>>, vector<32x128xf32>
    tpu.vector_store %arg3[%c0, %c0_2], %5 {strides = array<i32>} : memref<32x128xf32, #tpu.memory_space<vmem>>, vector<32x128xf32>,
    %c0_3 = arith.constant 0 : index
    %c0_4 = arith.constant 0 : index
    %7 = vector.load %arg0[%c0_3, %c0_4] : memref<32x32xf32, #tpu.memory_space<vmem>>, vector<32x32xf32>
    %c40 = arith.constant 40 : index
    %c0_5 = arith.constant 0 : index
    %8 = vector.load %arg1[%c40, %c0_5] : memref<592x128xf32, #tpu.memory_space<vmem>>, vector<64x128xf32>
    %c32 = arith.constant 32 : index
    %c0_6 = arith.constant 0 : index
    %9 = vector.load %arg1[%c32, %c0_6] : memref<592x128xf32, #tpu.memory_space<vmem>>, vector<4x128xf32>
    %c0_7 = arith.constant 0 : index
    %c0_8 = arith.constant 0 : index
    %10 = vector.load %arg1[%c0_7, %c0_8] : memref<592x128xf32, #tpu.memory_space<vmem>>, vector<32x128xf32>
    %cst_9 = arith.constant dense<0.000000e+00> : vector<32x128xf32>
    %11 = tpu.matmul %7, %10, %cst_9 {dimension_numbers = #tpu.dot_dimension_numbers<[1], [0], [0], [1], [0, 0, 1, 1], [], []>} : vector<32x32xf32>, vector<32x128xf32>, vector<32x128xf32> -> vector<32x128xf32>
    %12 = vector.extract_strided_slice %11 {offsets = [0, 0], sizes = [4, 128], strides = [1, 1]} : vector<32x128xf32> to vector<4x128xf32>
    %13 = arith.addf %12, %9 : vector<4x128xf32>
    %14 = vector.extract_strided_slice %11 {offsets = [4, 0], sizes = [4, 128], strides = [1, 1]} : vector<32x128xf32> to vector<4x128xf32>
    %15 = arith.addf %14, %9 : vector<4x128xf32>
    %16 = vector.extract_strided_slice %11 {offsets = [8, 0], sizes = [4, 128], strides = [1, 1]} : vector<32x128xf32> to vector<4x128xf32>
    %17 = arith.addf %16, %9 : vector<4x128xf32>
    %18 = vector.extract_strided_slice %11 {offsets = [12, 0], sizes = [4, 128], strides = [1, 1]} : vector<32x128xf32> to vector<4x128xf32>
    %19 = arith.addf %18, %9 : vector<4x128xf32>
    %20 = vector.extract_strided_slice %11 {offsets = [16, 0], sizes = [4, 128], strides = [1, 1]} : vector<32x128xf32> to vector<4x128xf32>
    %21 = arith.addf %20, %9 : vector<4x128xf32>
    %22 = vector.extract_strided_slice %11 {offsets = [20, 0], sizes = [4, 128], strides = [1, 1]} : vector<32x128xf32> to vector<4x128xf32>
    %23 = arith.addf %22, %9 : vector<4x128xf32>
    %24 = vector.extract_strided_slice %11 {offsets = [24, 0], sizes = [4, 128], strides = [1, 1]} : vector<32x128xf32> to vector<4x128xf32>
    %25 = arith.addf %24, %9 : vector<4x128xf32>
    %26 = vector.extract_strided_slice %11 {offsets = [28, 0], sizes = [4, 128], strides = [1, 1]} : vector<32x128xf32> to vector<4x128xf32>
    %27 = arith.addf %26, %9 : vector<4x128xf32>
    %cst_10 = arith.constant 0.000000e+00 : f32
    %28 = vector.broadcast %cst_10 : f32 to vector<4x64xf32>
    %cst_11 = arith.constant 0.000000e+00 : f32
    %29 = vector.broadcast %cst_11 : f32 to vector<4x32xf32>
    %cst_12 = arith.constant dense<0.000000e+00> : vector<4x128xf32>
    %30 = tpu.matmul %28, %8, %cst_12 {dimension_numbers = #tpu.dot_dimension_numbers<[1], [0], [0], [1], [0, 0, 1, 1], [], []>} : vector<4x64xf32>, vector<64x128xf32>, vector<4x128xf32> -> vector<4x128xf32>
    %31 = arith.addf %13, %30 : vector<4x128xf32>
    %32 = vector.extract_strided_slice %31 {offsets = [0, 0], sizes = [4, 96], strides = [1, 1]} : vector<4x128xf32> to vector<4x96xf32>
    %33 = arith.negf %32 : vector<4x96xf32>
    %34 = math.exp %33 : vector<4x96xf32>
    %cst_13 = arith.constant 1.000000e+00 : f32
    %35 = vector.broadcast %cst_13 : f32 to vector<4x96xf32>
    %36 = arith.addf %35, %34 : vector<4x96xf32>
    %37 = arith.divf %35, %36 : vector<4x96xf32>
    %38 = vector.extract_strided_slice %31 {offsets = [0, 96], sizes = [4, 32], strides = [1, 1]} : vector<4x128xf32> to vector<4x32xf32>
    %39 = math.tanh %38 : vector<4x32xf32>
    %40 = vector.extract_strided_slice %37 {offsets = [0, 0], sizes = [4, 32], strides = [1, 1]} : vector<4x96xf32> to vector<4x32xf32>
    %41 = vector.extract_strided_slice %37 {offsets = [0, 32], sizes = [4, 32], strides = [1, 1]} : vector<4x96xf32> to vector<4x32xf32>
    %42 = vector.extract_strided_slice %37 {offsets = [0, 64], sizes = [4, 32], strides = [1, 1]} : vector<4x96xf32> to vector<4x32xf32>
    %43 = arith.mulf %41, %29 : vector<4x32xf32>
    %44 = arith.mulf %40, %39 : vector<4x32xf32>
    %45 = arith.addf %43, %44 : vector<4x32xf32>
    %46 = math.tanh %45 : vector<4x32xf32>
    %47 = arith.mulf %42, %46 : vector<4x32xf32>
    %48 = tpu.concatenate %47, %47 in 1 : vector<4x32xf32>, vector<4x32xf32> -> vector<4x64xf32>
    %49 = arith.mulf %48, %4 : vector<4x64xf32>
    %50 = vector.extract_strided_slice %47 {offsets = [0, 0], sizes = [2, 32], strides = [1, 1]} : vector<4x32xf32> to vector<2x32xf32>
    %51 = vector.extract_strided_slice %47 {offsets = [2, 0], sizes = [2, 32], strides = [1, 1]} : vector<4x32xf32> to vector<2x32xf32>
    %c0_14 = arith.constant 0 : index
    %c0_15 = arith.constant 0 : index
    %52 = vector.load %arg3[%c0_14, %c0_15] : memref<32x128xf32, #tpu.memory_space<vmem>>, vector<2x32xf32>
    tpu.vector_store %arg3[%c0_14, %c0_15], %50 {strides = array<i32>} : memref<32x128xf32, #tpu.memory_space<vmem>>, vector<2x32xf32>,
    %c30 = arith.constant 30 : index
    %c64 = arith.constant 64 : index
    %53 = vector.load %arg3[%c30, %c64] : memref<32x128xf32, #tpu.memory_space<vmem>>, vector<2x32xf32>
    tpu.vector_store %arg3[%c30, %c64], %50 {strides = array<i32>} : memref<32x128xf32, #tpu.memory_space<vmem>>, vector<2x32xf32>,
    %c28 = arith.constant 28 : index
    %c32_16 = arith.constant 32 : index
    %54 = vector.load %arg3[%c28, %c32_16] : memref<32x128xf32, #tpu.memory_space<vmem>>, vector<2x32xf32>
    tpu.vector_store %arg3[%c28, %c32_16], %51 {strides = array<i32>} : memref<32x128xf32, #tpu.memory_space<vmem>>, vector<2x32xf32>,
    %c2 = arith.constant 2 : index
    %c96 = arith.constant 96 : index
    %55 = vector.load %arg3[%c2, %c96] : memref<32x128xf32, #tpu.memory_space<vmem>>, vector<2x32xf32>
    tpu.vector_store %arg3[%c2, %c96], %51 {strides = array<i32>} : memref<32x128xf32, #tpu.memory_space<vmem>>, vector<2x32xf32>,
    %cst_17 = arith.constant dense<0.000000e+00> : vector<4x128xf32>
    %56 = tpu.matmul %49, %8, %cst_17 {dimension_numbers = #tpu.dot_dimension_numbers<[1], [0], [0], [1], [0, 0, 1, 1], [], []>} : vector<4x64xf32>, vector<64x128xf32>, vector<4x128xf32> -> vector<4x128xf32>
    %57 = arith.addf %15, %56 : vector<4x128xf32>
    %58 = vector.extract_strided_slice %57 {offsets = [0, 0], sizes = [4, 96], strides = [1, 1]} : vector<4x128xf32> to vector<4x96xf32>
    %59 = arith.negf %58 : vector<4x96xf32>
    %60 = math.exp %59 : vector<4x96xf32>
    %cst_18 = arith.constant 1.000000e+00 : f32
    %61 = vector.broadcast %cst_18 : f32 to vector<4x96xf32>
    %62 = arith.addf %61, %60 : vector<4x96xf32>
    %63 = arith.divf %61, %62 : vector<4x96xf32>
    %64 = vector.extract_strided_slice %57 {offsets = [0, 96], sizes = [4, 32], strides = [1, 1]} : vector<4x128xf32> to vector<4x32xf32>
    %65 = math.tanh %64 : vector<4x32xf32>
    %66 = vector.extract_strided_slice %63 {offsets = [0, 0], sizes = [4, 32], strides = [1, 1]} : vector<4x96xf32> to vector<4x32xf32>
    %67 = vector.extract_strided_slice %63 {offsets = [0, 32], sizes = [4, 32], strides = [1, 1]} : vector<4x96xf32> to vector<4x32xf32>
    %68 = vector.extract_strided_slice %63 {offsets = [0, 64], sizes = [4, 32], strides = [1, 1]} : vector<4x96xf32> to vector<4x32xf32>
    %69 = arith.mulf %67, %45 : vector<4x32xf32>
    %70 = arith.mulf %66, %65 : vector<4x32xf32>
    %71 = arith.addf %69, %70 : vector<4x32xf32>
    %72 = math.tanh %71 : vector<4x32xf32>
    %73 = arith.mulf %68, %72 : vector<4x32xf32>
    %74 = tpu.concatenate %73, %73 in 1 : vector<4x32xf32>, vector<4x32xf32> -> vector<4x64xf32>
    %75 = arith.mulf %74, %4 : vector<4x64xf32>
    %76 = vector.extract_strided_slice %73 {offsets = [0, 0], sizes = [2, 32], strides = [1, 1]} : vector<4x32xf32> to vector<2x32xf32>
    %77 = vector.extract_strided_slice %73 {offsets = [2, 0], sizes = [2, 32], strides = [1, 1]} : vector<4x32xf32> to vector<2x32xf32>
    %c4 = arith.constant 4 : index
    %c0_19 = arith.constant 0 : index
    %78 = vector.load %arg3[%c4, %c0_19] : memref<32x128xf32, #tpu.memory_space<vmem>>, vector<2x32xf32>
    tpu.vector_store %arg3[%c4, %c0_19], %76 {strides = array<i32>} : memref<32x128xf32, #tpu.memory_space<vmem>>, vector<2x32xf32>,
    %c26 = arith.constant 26 : index
    %c64_20 = arith.constant 64 : index
    %79 = vector.load %arg3[%c26, %c64_20] : memref<32x128xf32, #tpu.memory_space<vmem>>, vector<2x32xf32>
    tpu.vector_store %arg3[%c26, %c64_20], %76 {strides = array<i32>} : memref<32x128xf32, #tpu.memory_space<vmem>>, vector<2x32xf32>,
    %c24 = arith.constant 24 : index
    %c32_21 = arith.constant 32 : index
    %80 = vector.load %arg3[%c24, %c32_21] : memref<32x128xf32, #tpu.memory_space<vmem>>, vector<2x32xf32>
    tpu.vector_store %arg3[%c24, %c32_21], %77 {strides = array<i32>} : memref<32x128xf32, #tpu.memory_space<vmem>>, vector<2x32xf32>,
    %c6 = arith.constant 6 : index
    %c96_22 = arith.constant 96 : index
    %81 = vector.load %arg3[%c6, %c96_22] : memref<32x128xf32, #tpu.memory_space<vmem>>, vector<2x32xf32>
    tpu.vector_store %arg3[%c6, %c96_22], %77 {strides = array<i32>} : memref<32x128xf32, #tpu.memory_space<vmem>>, vector<2x32xf32>,
    %cst_23 = arith.constant dense<0.000000e+00> : vector<4x128xf32>
    %82 = tpu.matmul %75, %8, %cst_23 {dimension_numbers = #tpu.dot_dimension_numbers<[1], [0], [0], [1], [0, 0, 1, 1], [], []>} : vector<4x64xf32>, vector<64x128xf32>, vector<4x128xf32> -> vector<4x128xf32>
    %83 = arith.addf %17, %82 : vector<4x128xf32>
    %84 = vector.extract_strided_slice %83 {offsets = [0, 0], sizes = [4, 96], strides = [1, 1]} : vector<4x128xf32> to vector<4x96xf32>
    %85 = arith.negf %84 : vector<4x96xf32>
    %86 = math.exp %85 : vector<4x96xf32>
    %cst_24 = arith.constant 1.000000e+00 : f32
    %87 = vector.broadcast %cst_24 : f32 to vector<4x96xf32>
    %88 = arith.addf %87, %86 : vector<4x96xf32>
    %89 = arith.divf %87, %88 : vector<4x96xf32>
    %90 = vector.extract_strided_slice %83 {offsets = [0, 96], sizes = [4, 32], strides = [1, 1]} : vector<4x128xf32> to vector<4x32xf32>
    %91 = math.tanh %90 : vector<4x32xf32>
    %92 = vector.extract_strided_slice %89 {offsets = [0, 0], sizes = [4, 32], strides = [1, 1]} : vector<4x96xf32> to vector<4x32xf32>
    %93 = vector.extract_strided_slice %89 {offsets = [0, 32], sizes = [4, 32], strides = [1, 1]} : vector<4x96xf32> to vector<4x32xf32>
    %94 = vector.extract_strided_slice %89 {offsets = [0, 64], sizes = [4, 32], strides = [1, 1]} : vector<4x96xf32> to vector<4x32xf32>
    %95 = arith.mulf %93, %71 : vector<4x32xf32>
    %96 = arith.mulf %92, %91 : vector<4x32xf32>
    %97 = arith.addf %95, %96 : vector<4x32xf32>
    %98 = math.tanh %97 : vector<4x32xf32>
    %99 = arith.mulf %94, %98 : vector<4x32xf32>
    %100 = tpu.concatenate %99, %99 in 1 : vector<4x32xf32>, vector<4x32xf32> -> vector<4x64xf32>
    %101 = arith.mulf %100, %4 : vector<4x64xf32>
    %102 = vector.extract_strided_slice %99 {offsets = [0, 0], sizes = [2, 32], strides = [1, 1]} : vector<4x32xf32> to vector<2x32xf32>
    %103 = vector.extract_strided_slice %99 {offsets = [2, 0], sizes = [2, 32], strides = [1, 1]} : vector<4x32xf32> to vector<2x32xf32>
    %c8 = arith.constant 8 : index
    %c0_25 = arith.constant 0 : index
    %104 = vector.load %arg3[%c8, %c0_25] : memref<32x128xf32, #tpu.memory_space<vmem>>, vector<2x32xf32>
    tpu.vector_store %arg3[%c8, %c0_25], %102 {strides = array<i32>} : memref<32x128xf32, #tpu.memory_space<vmem>>, vector<2x32xf32>,
    %c22 = arith.constant 22 : index
    %c64_26 = arith.constant 64 : index
    %105 = vector.load %arg3[%c22, %c64_26] : memref<32x128xf32, #tpu.memory_space<vmem>>, vector<2x32xf32>
    tpu.vector_store %arg3[%c22, %c64_26], %102 {strides = array<i32>} : memref<32x128xf32, #tpu.memory_space<vmem>>, vector<2x32xf32>,
    %c20 = arith.constant 20 : index
    %c32_27 = arith.constant 32 : index
    %106 = vector.load %arg3[%c20, %c32_27] : memref<32x128xf32, #tpu.memory_space<vmem>>, vector<2x32xf32>
    tpu.vector_store %arg3[%c20, %c32_27], %103 {strides = array<i32>} : memref<32x128xf32, #tpu.memory_space<vmem>>, vector<2x32xf32>,
    %c10 = arith.constant 10 : index
    %c96_28 = arith.constant 96 : index
    %107 = vector.load %arg3[%c10, %c96_28] : memref<32x128xf32, #tpu.memory_space<vmem>>, vector<2x32xf32>
    tpu.vector_store %arg3[%c10, %c96_28], %103 {strides = array<i32>} : memref<32x128xf32, #tpu.memory_space<vmem>>, vector<2x32xf32>,
    %cst_29 = arith.constant dense<0.000000e+00> : vector<4x128xf32>
    %108 = tpu.matmul %101, %8, %cst_29 {dimension_numbers = #tpu.dot_dimension_numbers<[1], [0], [0], [1], [0, 0, 1, 1], [], []>} : vector<4x64xf32>, vector<64x128xf32>, vector<4x128xf32> -> vector<4x128xf32>
    %109 = arith.addf %19, %108 : vector<4x128xf32>
    %110 = vector.extract_strided_slice %109 {offsets = [0, 0], sizes = [4, 96], strides = [1, 1]} : vector<4x128xf32> to vector<4x96xf32>
    %111 = arith.negf %110 : vector<4x96xf32>
    %112 = math.exp %111 : vector<4x96xf32>
    %cst_30 = arith.constant 1.000000e+00 : f32
    %113 = vector.broadcast %cst_30 : f32 to vector<4x96xf32>
    %114 = arith.addf %113, %112 : vector<4x96xf32>
    %115 = arith.divf %113, %114 : vector<4x96xf32>
    %116 = vector.extract_strided_slice %109 {offsets = [0, 96], sizes = [4, 32], strides = [1, 1]} : vector<4x128xf32> to vector<4x32xf32>
    %117 = math.tanh %116 : vector<4x32xf32>
    %118 = vector.extract_strided_slice %115 {offsets = [0, 0], sizes = [4, 32], strides = [1, 1]} : vector<4x96xf32> to vector<4x32xf32>
    %119 = vector.extract_strided_slice %115 {offsets = [0, 32], sizes = [4, 32], strides = [1, 1]} : vector<4x96xf32> to vector<4x32xf32>
    %120 = vector.extract_strided_slice %115 {offsets = [0, 64], sizes = [4, 32], strides = [1, 1]} : vector<4x96xf32> to vector<4x32xf32>
    %121 = arith.mulf %119, %97 : vector<4x32xf32>
    %122 = arith.mulf %118, %117 : vector<4x32xf32>
    %123 = arith.addf %121, %122 : vector<4x32xf32>
    %124 = math.tanh %123 : vector<4x32xf32>
    %125 = arith.mulf %120, %124 : vector<4x32xf32>
    %126 = tpu.concatenate %125, %125 in 1 : vector<4x32xf32>, vector<4x32xf32> -> vector<4x64xf32>
    %127 = arith.mulf %126, %4 : vector<4x64xf32>
    %128 = vector.extract_strided_slice %125 {offsets = [0, 0], sizes = [2, 32], strides = [1, 1]} : vector<4x32xf32> to vector<2x32xf32>
    %129 = vector.extract_strided_slice %125 {offsets = [2, 0], sizes = [2, 32], strides = [1, 1]} : vector<4x32xf32> to vector<2x32xf32>
    %c12 = arith.constant 12 : index
    %c0_31 = arith.constant 0 : index
    %130 = vector.load %arg3[%c12, %c0_31] : memref<32x128xf32, #tpu.memory_space<vmem>>, vector<2x32xf32>
    tpu.vector_store %arg3[%c12, %c0_31], %128 {strides = array<i32>} : memref<32x128xf32, #tpu.memory_space<vmem>>, vector<2x32xf32>,
    %c18 = arith.constant 18 : index
    %c64_32 = arith.constant 64 : index
    %131 = vector.load %arg3[%c18, %c64_32] : memref<32x128xf32, #tpu.memory_space<vmem>>, vector<2x32xf32>
    tpu.vector_store %arg3[%c18, %c64_32], %128 {strides = array<i32>} : memref<32x128xf32, #tpu.memory_space<vmem>>, vector<2x32xf32>,
    %c16 = arith.constant 16 : index
    %c32_33 = arith.constant 32 : index
    %132 = vector.load %arg3[%c16, %c32_33] : memref<32x128xf32, #tpu.memory_space<vmem>>, vector<2x32xf32>
    tpu.vector_store %arg3[%c16, %c32_33], %129 {strides = array<i32>} : memref<32x128xf32, #tpu.memory_space<vmem>>, vector<2x32xf32>,
    %c14 = arith.constant 14 : index
    %c96_34 = arith.constant 96 : index
    %133 = vector.load %arg3[%c14, %c96_34] : memref<32x128xf32, #tpu.memory_space<vmem>>, vector<2x32xf32>
    tpu.vector_store %arg3[%c14, %c96_34], %129 {strides = array<i32>} : memref<32x128xf32, #tpu.memory_space<vmem>>, vector<2x32xf32>,
    %cst_35 = arith.constant dense<0.000000e+00> : vector<4x128xf32>
    %134 = tpu.matmul %127, %8, %cst_35 {dimension_numbers = #tpu.dot_dimension_numbers<[1], [0], [0], [1], [0, 0, 1, 1], [], []>} : vector<4x64xf32>, vector<64x128xf32>, vector<4x128xf32> -> vector<4x128xf32>
    %135 = arith.addf %21, %134 : vector<4x128xf32>
    %136 = vector.extract_strided_slice %135 {offsets = [0, 0], sizes = [4, 96], strides = [1, 1]} : vector<4x128xf32> to vector<4x96xf32>
    %137 = arith.negf %136 : vector<4x96xf32>
    %138 = math.exp %137 : vector<4x96xf32>
    %cst_36 = arith.constant 1.000000e+00 : f32
    %139 = vector.broadcast %cst_36 : f32 to vector<4x96xf32>
    %140 = arith.addf %139, %138 : vector<4x96xf32>
    %141 = arith.divf %139, %140 : vector<4x96xf32>
    %142 = vector.extract_strided_slice %135 {offsets = [0, 96], sizes = [4, 32], strides = [1, 1]} : vector<4x128xf32> to vector<4x32xf32>
    %143 = math.tanh %142 : vector<4x32xf32>
    %144 = vector.extract_strided_slice %141 {offsets = [0, 0], sizes = [4, 32], strides = [1, 1]} : vector<4x96xf32> to vector<4x32xf32>
    %145 = vector.extract_strided_slice %141 {offsets = [0, 32], sizes = [4, 32], strides = [1, 1]} : vector<4x96xf32> to vector<4x32xf32>
    %146 = vector.extract_strided_slice %141 {offsets = [0, 64], sizes = [4, 32], strides = [1, 1]} : vector<4x96xf32> to vector<4x32xf32>
    %147 = arith.mulf %145, %123 : vector<4x32xf32>
    %148 = arith.mulf %144, %143 : vector<4x32xf32>
    %149 = arith.addf %147, %148 : vector<4x32xf32>
    %150 = math.tanh %149 : vector<4x32xf32>
    %151 = arith.mulf %146, %150 : vector<4x32xf32>
    %152 = tpu.concatenate %151, %151 in 1 : vector<4x32xf32>, vector<4x32xf32> -> vector<4x64xf32>
    %153 = arith.mulf %152, %4 : vector<4x64xf32>
    %154 = vector.extract_strided_slice %151 {offsets = [0, 0], sizes = [2, 32], strides = [1, 1]} : vector<4x32xf32> to vector<2x32xf32>
    %155 = vector.extract_strided_slice %151 {offsets = [2, 0], sizes = [2, 32], strides = [1, 1]} : vector<4x32xf32> to vector<2x32xf32>
    %c16_37 = arith.constant 16 : index
    %c0_38 = arith.constant 0 : index
    %156 = vector.load %arg3[%c16_37, %c0_38] : memref<32x128xf32, #tpu.memory_space<vmem>>, vector<2x32xf32>
    tpu.vector_store %arg3[%c16_37, %c0_38], %154 {strides = array<i32>} : memref<32x128xf32, #tpu.memory_space<vmem>>, vector<2x32xf32>,
    %c14_39 = arith.constant 14 : index
    %c64_40 = arith.constant 64 : index
    %157 = vector.load %arg3[%c14_39, %c64_40] : memref<32x128xf32, #tpu.memory_space<vmem>>, vector<2x32xf32>
    tpu.vector_store %arg3[%c14_39, %c64_40], %154 {strides = array<i32>} : memref<32x128xf32, #tpu.memory_space<vmem>>, vector<2x32xf32>,
    %c12_41 = arith.constant 12 : index
    %c32_42 = arith.constant 32 : index
    %158 = vector.load %arg3[%c12_41, %c32_42] : memref<32x128xf32, #tpu.memory_space<vmem>>, vector<2x32xf32>
    tpu.vector_store %arg3[%c12_41, %c32_42], %155 {strides = array<i32>} : memref<32x128xf32, #tpu.memory_space<vmem>>, vector<2x32xf32>,
    %c18_43 = arith.constant 18 : index
    %c96_44 = arith.constant 96 : index
    %159 = vector.load %arg3[%c18_43, %c96_44] : memref<32x128xf32, #tpu.memory_space<vmem>>, vector<2x32xf32>
    tpu.vector_store %arg3[%c18_43, %c96_44], %155 {strides = array<i32>} : memref<32x128xf32, #tpu.memory_space<vmem>>, vector<2x32xf32>,
    %cst_45 = arith.constant dense<0.000000e+00> : vector<4x128xf32>
    %160 = tpu.matmul %153, %8, %cst_45 {dimension_numbers = #tpu.dot_dimension_numbers<[1], [0], [0], [1], [0, 0, 1, 1], [], []>} : vector<4x64xf32>, vector<64x128xf32>, vector<4x128xf32> -> vector<4x128xf32>
    %161 = arith.addf %23, %160 : vector<4x128xf32>
    %162 = vector.extract_strided_slice %161 {offsets = [0, 0], sizes = [4, 96], strides = [1, 1]} : vector<4x128xf32> to vector<4x96xf32>
    %163 = arith.negf %162 : vector<4x96xf32>
    %164 = math.exp %163 : vector<4x96xf32>
    %cst_46 = arith.constant 1.000000e+00 : f32
    %165 = vector.broadcast %cst_46 : f32 to vector<4x96xf32>
    %166 = arith.addf %165, %164 : vector<4x96xf32>
    %167 = arith.divf %165, %166 : vector<4x96xf32>
    %168 = vector.extract_strided_slice %161 {offsets = [0, 96], sizes = [4, 32], strides = [1, 1]} : vector<4x128xf32> to vector<4x32xf32>
    %169 = math.tanh %168 : vector<4x32xf32>
    %170 = vector.extract_strided_slice %167 {offsets = [0, 0], sizes = [4, 32], strides = [1, 1]} : vector<4x96xf32> to vector<4x32xf32>
    %171 = vector.extract_strided_slice %167 {offsets = [0, 32], sizes = [4, 32], strides = [1, 1]} : vector<4x96xf32> to vector<4x32xf32>
    %172 = vector.extract_strided_slice %167 {offsets = [0, 64], sizes = [4, 32], strides = [1, 1]} : vector<4x96xf32> to vector<4x32xf32>
    %173 = arith.mulf %171, %149 : vector<4x32xf32>
    %174 = arith.mulf %170, %169 : vector<4x32xf32>
    %175 = arith.addf %173, %174 : vector<4x32xf32>
    %176 = math.tanh %175 : vector<4x32xf32>
    %177 = arith.mulf %172, %176 : vector<4x32xf32>
    %178 = tpu.concatenate %177, %177 in 1 : vector<4x32xf32>, vector<4x32xf32> -> vector<4x64xf32>
    %179 = arith.mulf %178, %4 : vector<4x64xf32>
    %180 = vector.extract_strided_slice %177 {offsets = [0, 0], sizes = [2, 32], strides = [1, 1]} : vector<4x32xf32> to vector<2x32xf32>
    %181 = vector.extract_strided_slice %177 {offsets = [2, 0], sizes = [2, 32], strides = [1, 1]} : vector<4x32xf32> to vector<2x32xf32>
    %c20_47 = arith.constant 20 : index
    %c0_48 = arith.constant 0 : index
    %182 = vector.load %arg3[%c20_47, %c0_48] : memref<32x128xf32, #tpu.memory_space<vmem>>, vector<2x32xf32>
    tpu.vector_store %arg3[%c20_47, %c0_48], %180 {strides = array<i32>} : memref<32x128xf32, #tpu.memory_space<vmem>>, vector<2x32xf32>,
    %c10_49 = arith.constant 10 : index
    %c64_50 = arith.constant 64 : index
    %183 = vector.load %arg3[%c10_49, %c64_50] : memref<32x128xf32, #tpu.memory_space<vmem>>, vector<2x32xf32>
    tpu.vector_store %arg3[%c10_49, %c64_50], %180 {strides = array<i32>} : memref<32x128xf32, #tpu.memory_space<vmem>>, vector<2x32xf32>,
    %c8_51 = arith.constant 8 : index
    %c32_52 = arith.constant 32 : index
    %184 = vector.load %arg3[%c8_51, %c32_52] : memref<32x128xf32, #tpu.memory_space<vmem>>, vector<2x32xf32>
    tpu.vector_store %arg3[%c8_51, %c32_52], %181 {strides = array<i32>} : memref<32x128xf32, #tpu.memory_space<vmem>>, vector<2x32xf32>,
    %c22_53 = arith.constant 22 : index
    %c96_54 = arith.constant 96 : index
    %185 = vector.load %arg3[%c22_53, %c96_54] : memref<32x128xf32, #tpu.memory_space<vmem>>, vector<2x32xf32>
    tpu.vector_store %arg3[%c22_53, %c96_54], %181 {strides = array<i32>} : memref<32x128xf32, #tpu.memory_space<vmem>>, vector<2x32xf32>,
    %cst_55 = arith.constant dense<0.000000e+00> : vector<4x128xf32>
    %186 = tpu.matmul %179, %8, %cst_55 {dimension_numbers = #tpu.dot_dimension_numbers<[1], [0], [0], [1], [0, 0, 1, 1], [], []>} : vector<4x64xf32>, vector<64x128xf32>, vector<4x128xf32> -> vector<4x128xf32>
    %187 = arith.addf %25, %186 : vector<4x128xf32>
    %188 = vector.extract_strided_slice %187 {offsets = [0, 0], sizes = [4, 96], strides = [1, 1]} : vector<4x128xf32> to vector<4x96xf32>
    %189 = arith.negf %188 : vector<4x96xf32>
    %190 = math.exp %189 : vector<4x96xf32>
    %cst_56 = arith.constant 1.000000e+00 : f32
    %191 = vector.broadcast %cst_56 : f32 to vector<4x96xf32>
    %192 = arith.addf %191, %190 : vector<4x96xf32>
    %193 = arith.divf %191, %192 : vector<4x96xf32>
    %194 = vector.extract_strided_slice %187 {offsets = [0, 96], sizes = [4, 32], strides = [1, 1]} : vector<4x128xf32> to vector<4x32xf32>
    %195 = math.tanh %194 : vector<4x32xf32>
    %196 = vector.extract_strided_slice %193 {offsets = [0, 0], sizes = [4, 32], strides = [1, 1]} : vector<4x96xf32> to vector<4x32xf32>
    %197 = vector.extract_strided_slice %193 {offsets = [0, 32], sizes = [4, 32], strides = [1, 1]} : vector<4x96xf32> to vector<4x32xf32>
    %198 = vector.extract_strided_slice %193 {offsets = [0, 64], sizes = [4, 32], strides = [1, 1]} : vector<4x96xf32> to vector<4x32xf32>
    %199 = arith.mulf %197, %175 : vector<4x32xf32>
    %200 = arith.mulf %196, %195 : vector<4x32xf32>
    %201 = arith.addf %199, %200 : vector<4x32xf32>
    %202 = math.tanh %201 : vector<4x32xf32>
    %203 = arith.mulf %198, %202 : vector<4x32xf32>
    %204 = tpu.concatenate %203, %203 in 1 : vector<4x32xf32>, vector<4x32xf32> -> vector<4x64xf32>
    %205 = arith.mulf %204, %4 : vector<4x64xf32>
    %206 = vector.extract_strided_slice %203 {offsets = [0, 0], sizes = [2, 32], strides = [1, 1]} : vector<4x32xf32> to vector<2x32xf32>
    %207 = vector.extract_strided_slice %203 {offsets = [2, 0], sizes = [2, 32], strides = [1, 1]} : vector<4x32xf32> to vector<2x32xf32>
    %c24_57 = arith.constant 24 : index
    %c0_58 = arith.constant 0 : index
    %208 = vector.load %arg3[%c24_57, %c0_58] : memref<32x128xf32, #tpu.memory_space<vmem>>, vector<2x32xf32>
    tpu.vector_store %arg3[%c24_57, %c0_58], %206 {strides = array<i32>} : memref<32x128xf32, #tpu.memory_space<vmem>>, vector<2x32xf32>,
    %c6_59 = arith.constant 6 : index
    %c64_60 = arith.constant 64 : index
    %209 = vector.load %arg3[%c6_59, %c64_60] : memref<32x128xf32, #tpu.memory_space<vmem>>, vector<2x32xf32>
    tpu.vector_store %arg3[%c6_59, %c64_60], %206 {strides = array<i32>} : memref<32x128xf32, #tpu.memory_space<vmem>>, vector<2x32xf32>,
    %c4_61 = arith.constant 4 : index
    %c32_62 = arith.constant 32 : index
    %210 = vector.load %arg3[%c4_61, %c32_62] : memref<32x128xf32, #tpu.memory_space<vmem>>, vector<2x32xf32>
    tpu.vector_store %arg3[%c4_61, %c32_62], %207 {strides = array<i32>} : memref<32x128xf32, #tpu.memory_space<vmem>>, vector<2x32xf32>,
    %c26_63 = arith.constant 26 : index
    %c96_64 = arith.constant 96 : index
    %211 = vector.load %arg3[%c26_63, %c96_64] : memref<32x128xf32, #tpu.memory_space<vmem>>, vector<2x32xf32>
    tpu.vector_store %arg3[%c26_63, %c96_64], %207 {strides = array<i32>} : memref<32x128xf32, #tpu.memory_space<vmem>>, vector<2x32xf32>,
    %cst_65 = arith.constant dense<0.000000e+00> : vector<4x128xf32>
    %212 = tpu.matmul %205, %8, %cst_65 {dimension_numbers = #tpu.dot_dimension_numbers<[1], [0], [0], [1], [0, 0, 1, 1], [], []>} : vector<4x64xf32>, vector<64x128xf32>, vector<4x128xf32> -> vector<4x128xf32>
    %213 = arith.addf %27, %212 : vector<4x128xf32>
    %214 = vector.extract_strided_slice %213 {offsets = [0, 0], sizes = [4, 96], strides = [1, 1]} : vector<4x128xf32> to vector<4x96xf32>
    %215 = arith.negf %214 : vector<4x96xf32>
    %216 = math.exp %215 : vector<4x96xf32>
    %cst_66 = arith.constant 1.000000e+00 : f32
    %217 = vector.broadcast %cst_66 : f32 to vector<4x96xf32>
    %218 = arith.addf %217, %216 : vector<4x96xf32>
    %219 = arith.divf %217, %218 : vector<4x96xf32>
    %220 = vector.extract_strided_slice %213 {offsets = [0, 96], sizes = [4, 32], strides = [1, 1]} : vector<4x128xf32> to vector<4x32xf32>
    %221 = math.tanh %220 : vector<4x32xf32>
    %222 = vector.extract_strided_slice %219 {offsets = [0, 0], sizes = [4, 32], strides = [1, 1]} : vector<4x96xf32> to vector<4x32xf32>
    %223 = vector.extract_strided_slice %219 {offsets = [0, 32], sizes = [4, 32], strides = [1, 1]} : vector<4x96xf32> to vector<4x32xf32>
    %224 = vector.extract_strided_slice %219 {offsets = [0, 64], sizes = [4, 32], strides = [1, 1]} : vector<4x96xf32> to vector<4x32xf32>
    %225 = arith.mulf %223, %201 : vector<4x32xf32>
    %226 = arith.mulf %222, %221 : vector<4x32xf32>
    %227 = arith.addf %225, %226 : vector<4x32xf32>
    %228 = math.tanh %227 : vector<4x32xf32>
    %229 = arith.mulf %224, %228 : vector<4x32xf32>
    %230 = vector.extract_strided_slice %229 {offsets = [0, 0], sizes = [2, 32], strides = [1, 1]} : vector<4x32xf32> to vector<2x32xf32>
    %231 = vector.extract_strided_slice %229 {offsets = [2, 0], sizes = [2, 32], strides = [1, 1]} : vector<4x32xf32> to vector<2x32xf32>
    %c28_67 = arith.constant 28 : index
    %c0_68 = arith.constant 0 : index
    %232 = vector.load %arg3[%c28_67, %c0_68] : memref<32x128xf32, #tpu.memory_space<vmem>>, vector<2x32xf32>
    tpu.vector_store %arg3[%c28_67, %c0_68], %230 {strides = array<i32>} : memref<32x128xf32, #tpu.memory_space<vmem>>, vector<2x32xf32>,
    %c2_69 = arith.constant 2 : index
    %c64_70 = arith.constant 64 : index
    %233 = vector.load %arg3[%c2_69, %c64_70] : memref<32x128xf32, #tpu.memory_space<vmem>>, vector<2x32xf32>
    tpu.vector_store %arg3[%c2_69, %c64_70], %230 {strides = array<i32>} : memref<32x128xf32, #tpu.memory_space<vmem>>, vector<2x32xf32>,
    %c0_71 = arith.constant 0 : index
    %c32_72 = arith.constant 32 : index
    %234 = vector.load %arg3[%c0_71, %c32_72] : memref<32x128xf32, #tpu.memory_space<vmem>>, vector<2x32xf32>
    tpu.vector_store %arg3[%c0_71, %c32_72], %231 {strides = array<i32>} : memref<32x128xf32, #tpu.memory_space<vmem>>, vector<2x32xf32>,
    %c30_73 = arith.constant 30 : index
    %c96_74 = arith.constant 96 : index
    %235 = vector.load %arg3[%c30_73, %c96_74] : memref<32x128xf32, #tpu.memory_space<vmem>>, vector<2x32xf32>
    tpu.vector_store %arg3[%c30_73, %c96_74], %231 {strides = array<i32>} : memref<32x128xf32, #tpu.memory_space<vmem>>, vector<2x32xf32>,
    %c0_75 = arith.constant 0 : index
    %c0_76 = arith.constant 0 : index
    %236 = vector.load %arg3[%c0_75, %c0_76] : memref<32x128xf32, #tpu.memory_space<vmem>>, vector<32x128xf32>
    %c240 = arith.constant 240 : index
    %c0_77 = arith.constant 0 : index
    %237 = vector.load %arg1[%c240, %c0_77] : memref<592x128xf32, #tpu.memory_space<vmem>>, vector<64x128xf32>
    %c232 = arith.constant 232 : index
    %c0_78 = arith.constant 0 : index
    %238 = vector.load %arg1[%c232, %c0_78] : memref<592x128xf32, #tpu.memory_space<vmem>>, vector<4x128xf32>
    %c104 = arith.constant 104 : index
    %c0_79 = arith.constant 0 : index
    %239 = vector.load %arg1[%c104, %c0_79] : memref<592x128xf32, #tpu.memory_space<vmem>>, vector<128x128xf32>
    %cst_80 = arith.constant dense<0.000000e+00> : vector<32x128xf32>
    %240 = tpu.matmul %236, %239, %cst_80 {dimension_numbers = #tpu.dot_dimension_numbers<[1], [0], [0], [1], [0, 0, 1, 1], [], []>} : vector<32x128xf32>, vector<128x128xf32>, vector<32x128xf32> -> vector<32x128xf32>
    %241 = vector.extract_strided_slice %240 {offsets = [0, 0], sizes = [4, 128], strides = [1, 1]} : vector<32x128xf32> to vector<4x128xf32>
    %242 = arith.addf %241, %238 : vector<4x128xf32>
    %243 = vector.extract_strided_slice %240 {offsets = [4, 0], sizes = [4, 128], strides = [1, 1]} : vector<32x128xf32> to vector<4x128xf32>
    %244 = arith.addf %243, %238 : vector<4x128xf32>
    %245 = vector.extract_strided_slice %240 {offsets = [8, 0], sizes = [4, 128], strides = [1, 1]} : vector<32x128xf32> to vector<4x128xf32>
    %246 = arith.addf %245, %238 : vector<4x128xf32>
    %247 = vector.extract_strided_slice %240 {offsets = [12, 0], sizes = [4, 128], strides = [1, 1]} : vector<32x128xf32> to vector<4x128xf32>
    %248 = arith.addf %247, %238 : vector<4x128xf32>
    %249 = vector.extract_strided_slice %240 {offsets = [16, 0], sizes = [4, 128], strides = [1, 1]} : vector<32x128xf32> to vector<4x128xf32>
    %250 = arith.addf %249, %238 : vector<4x128xf32>
    %251 = vector.extract_strided_slice %240 {offsets = [20, 0], sizes = [4, 128], strides = [1, 1]} : vector<32x128xf32> to vector<4x128xf32>
    %252 = arith.addf %251, %238 : vector<4x128xf32>
    %253 = vector.extract_strided_slice %240 {offsets = [24, 0], sizes = [4, 128], strides = [1, 1]} : vector<32x128xf32> to vector<4x128xf32>
    %254 = arith.addf %253, %238 : vector<4x128xf32>
    %255 = vector.extract_strided_slice %240 {offsets = [28, 0], sizes = [4, 128], strides = [1, 1]} : vector<32x128xf32> to vector<4x128xf32>
    %256 = arith.addf %255, %238 : vector<4x128xf32>
    %cst_81 = arith.constant 0.000000e+00 : f32
    %257 = vector.broadcast %cst_81 : f32 to vector<4x64xf32>
    %cst_82 = arith.constant 0.000000e+00 : f32
    %258 = vector.broadcast %cst_82 : f32 to vector<4x32xf32>
    %cst_83 = arith.constant dense<0.000000e+00> : vector<4x128xf32>
    %259 = tpu.matmul %257, %237, %cst_83 {dimension_numbers = #tpu.dot_dimension_numbers<[1], [0], [0], [1], [0, 0, 1, 1], [], []>} : vector<4x64xf32>, vector<64x128xf32>, vector<4x128xf32> -> vector<4x128xf32>
    %260 = arith.addf %242, %259 : vector<4x128xf32>
    %261 = vector.extract_strided_slice %260 {offsets = [0, 0], sizes = [4, 96], strides = [1, 1]} : vector<4x128xf32> to vector<4x96xf32>
    %262 = arith.negf %261 : vector<4x96xf32>
    %263 = math.exp %262 : vector<4x96xf32>
    %cst_84 = arith.constant 1.000000e+00 : f32
    %264 = vector.broadcast %cst_84 : f32 to vector<4x96xf32>
    %265 = arith.addf %264, %263 : vector<4x96xf32>
    %266 = arith.divf %264, %265 : vector<4x96xf32>
    %267 = vector.extract_strided_slice %260 {offsets = [0, 96], sizes = [4, 32], strides = [1, 1]} : vector<4x128xf32> to vector<4x32xf32>
    %268 = math.tanh %267 : vector<4x32xf32>
    %269 = vector.extract_strided_slice %266 {offsets = [0, 0], sizes = [4, 32], strides = [1, 1]} : vector<4x96xf32> to vector<4x32xf32>
    %270 = vector.extract_strided_slice %266 {offsets = [0, 32], sizes = [4, 32], strides = [1, 1]} : vector<4x96xf32> to vector<4x32xf32>
    %271 = vector.extract_strided_slice %266 {offsets = [0, 64], sizes = [4, 32], strides = [1, 1]} : vector<4x96xf32> to vector<4x32xf32>
    %272 = arith.mulf %270, %258 : vector<4x32xf32>
    %273 = arith.mulf %269, %268 : vector<4x32xf32>
    %274 = arith.addf %272, %273 : vector<4x32xf32>
    %275 = math.tanh %274 : vector<4x32xf32>
    %276 = arith.mulf %271, %275 : vector<4x32xf32>
    %277 = tpu.concatenate %276, %276 in 1 : vector<4x32xf32>, vector<4x32xf32> -> vector<4x64xf32>
    %278 = arith.mulf %277, %4 : vector<4x64xf32>
    %279 = vector.extract_strided_slice %276 {offsets = [0, 0], sizes = [2, 32], strides = [1, 1]} : vector<4x32xf32> to vector<2x32xf32>
    %c0_85 = arith.constant 0 : index
    %c0_86 = arith.constant 0 : index
    %280 = vector.load %arg4[%c0_85, %c0_86] : memref<16x64xf32, #tpu.memory_space<vmem>>, vector<2x32xf32>
    tpu.vector_store %arg4[%c0_85, %c0_86], %279 {strides = array<i32>} : memref<16x64xf32, #tpu.memory_space<vmem>>, vector<2x32xf32>,
    %281 = vector.extract_strided_slice %276 {offsets = [2, 0], sizes = [2, 32], strides = [1, 1]} : vector<4x32xf32> to vector<2x32xf32>
    %c14_87 = arith.constant 14 : index
    %c32_88 = arith.constant 32 : index
    %282 = vector.load %arg4[%c14_87, %c32_88] : memref<16x64xf32, #tpu.memory_space<vmem>>, vector<2x32xf32>
    tpu.vector_store %arg4[%c14_87, %c32_88], %281 {strides = array<i32>} : memref<16x64xf32, #tpu.memory_space<vmem>>, vector<2x32xf32>,
    %cst_89 = arith.constant dense<0.000000e+00> : vector<4x128xf32>
    %283 = tpu.matmul %278, %237, %cst_89 {dimension_numbers = #tpu.dot_dimension_numbers<[1], [0], [0], [1], [0, 0, 1, 1], [], []>} : vector<4x64xf32>, vector<64x128xf32>, vector<4x128xf32> -> vector<4x128xf32>
    %284 = arith.addf %244, %283 : vector<4x128xf32>
    %285 = vector.extract_strided_slice %284 {offsets = [0, 0], sizes = [4, 96], strides = [1, 1]} : vector<4x128xf32> to vector<4x96xf32>
    %286 = arith.negf %285 : vector<4x96xf32>
    %287 = math.exp %286 : vector<4x96xf32>
    %cst_90 = arith.constant 1.000000e+00 : f32
    %288 = vector.broadcast %cst_90 : f32 to vector<4x96xf32>
    %289 = arith.addf %288, %287 : vector<4x96xf32>
    %290 = arith.divf %288, %289 : vector<4x96xf32>
    %291 = vector.extract_strided_slice %284 {offsets = [0, 96], sizes = [4, 32], strides = [1, 1]} : vector<4x128xf32> to vector<4x32xf32>
    %292 = math.tanh %291 : vector<4x32xf32>
    %293 = vector.extract_strided_slice %290 {offsets = [0, 0], sizes = [4, 32], strides = [1, 1]} : vector<4x96xf32> to vector<4x32xf32>
    %294 = vector.extract_strided_slice %290 {offsets = [0, 32], sizes = [4, 32], strides = [1, 1]} : vector<4x96xf32> to vector<4x32xf32>
    %295 = vector.extract_strided_slice %290 {offsets = [0, 64], sizes = [4, 32], strides = [1, 1]} : vector<4x96xf32> to vector<4x32xf32>
    %296 = arith.mulf %294, %274 : vector<4x32xf32>
    %297 = arith.mulf %293, %292 : vector<4x32xf32>
    %298 = arith.addf %296, %297 : vector<4x32xf32>
    %299 = math.tanh %298 : vector<4x32xf32>
    %300 = arith.mulf %295, %299 : vector<4x32xf32>
    %301 = tpu.concatenate %300, %300 in 1 : vector<4x32xf32>, vector<4x32xf32> -> vector<4x64xf32>
    %302 = arith.mulf %301, %4 : vector<4x64xf32>
    %303 = vector.extract_strided_slice %300 {offsets = [0, 0], sizes = [2, 32], strides = [1, 1]} : vector<4x32xf32> to vector<2x32xf32>
    %c2_91 = arith.constant 2 : index
    %c0_92 = arith.constant 0 : index
    %304 = vector.load %arg4[%c2_91, %c0_92] : memref<16x64xf32, #tpu.memory_space<vmem>>, vector<2x32xf32>
    tpu.vector_store %arg4[%c2_91, %c0_92], %303 {strides = array<i32>} : memref<16x64xf32, #tpu.memory_space<vmem>>, vector<2x32xf32>,
    %305 = vector.extract_strided_slice %300 {offsets = [2, 0], sizes = [2, 32], strides = [1, 1]} : vector<4x32xf32> to vector<2x32xf32>
    %c12_93 = arith.constant 12 : index
    %c32_94 = arith.constant 32 : index
    %306 = vector.load %arg4[%c12_93, %c32_94] : memref<16x64xf32, #tpu.memory_space<vmem>>, vector<2x32xf32>
    tpu.vector_store %arg4[%c12_93, %c32_94], %305 {strides = array<i32>} : memref<16x64xf32, #tpu.memory_space<vmem>>, vector<2x32xf32>,
    %cst_95 = arith.constant dense<0.000000e+00> : vector<4x128xf32>
    %307 = tpu.matmul %302, %237, %cst_95 {dimension_numbers = #tpu.dot_dimension_numbers<[1], [0], [0], [1], [0, 0, 1, 1], [], []>} : vector<4x64xf32>, vector<64x128xf32>, vector<4x128xf32> -> vector<4x128xf32>
    %308 = arith.addf %246, %307 : vector<4x128xf32>
    %309 = vector.extract_strided_slice %308 {offsets = [0, 0], sizes = [4, 96], strides = [1, 1]} : vector<4x128xf32> to vector<4x96xf32>
    %310 = arith.negf %309 : vector<4x96xf32>
    %311 = math.exp %310 : vector<4x96xf32>
    %cst_96 = arith.constant 1.000000e+00 : f32
    %312 = vector.broadcast %cst_96 : f32 to vector<4x96xf32>
    %313 = arith.addf %312, %311 : vector<4x96xf32>
    %314 = arith.divf %312, %313 : vector<4x96xf32>
    %315 = vector.extract_strided_slice %308 {offsets = [0, 96], sizes = [4, 32], strides = [1, 1]} : vector<4x128xf32> to vector<4x32xf32>
    %316 = math.tanh %315 : vector<4x32xf32>
    %317 = vector.extract_strided_slice %314 {offsets = [0, 0], sizes = [4, 32], strides = [1, 1]} : vector<4x96xf32> to vector<4x32xf32>
    %318 = vector.extract_strided_slice %314 {offsets = [0, 32], sizes = [4, 32], strides = [1, 1]} : vector<4x96xf32> to vector<4x32xf32>
    %319 = vector.extract_strided_slice %314 {offsets = [0, 64], sizes = [4, 32], strides = [1, 1]} : vector<4x96xf32> to vector<4x32xf32>
    %320 = arith.mulf %318, %298 : vector<4x32xf32>
    %321 = arith.mulf %317, %316 : vector<4x32xf32>
    %322 = arith.addf %320, %321 : vector<4x32xf32>
    %323 = math.tanh %322 : vector<4x32xf32>
    %324 = arith.mulf %319, %323 : vector<4x32xf32>
    %325 = tpu.concatenate %324, %324 in 1 : vector<4x32xf32>, vector<4x32xf32> -> vector<4x64xf32>
    %326 = arith.mulf %325, %4 : vector<4x64xf32>
    %327 = vector.extract_strided_slice %324 {offsets = [0, 0], sizes = [2, 32], strides = [1, 1]} : vector<4x32xf32> to vector<2x32xf32>
    %c4_97 = arith.constant 4 : index
    %c0_98 = arith.constant 0 : index
    %328 = vector.load %arg4[%c4_97, %c0_98] : memref<16x64xf32, #tpu.memory_space<vmem>>, vector<2x32xf32>
    tpu.vector_store %arg4[%c4_97, %c0_98], %327 {strides = array<i32>} : memref<16x64xf32, #tpu.memory_space<vmem>>, vector<2x32xf32>,
    %329 = vector.extract_strided_slice %324 {offsets = [2, 0], sizes = [2, 32], strides = [1, 1]} : vector<4x32xf32> to vector<2x32xf32>
    %c10_99 = arith.constant 10 : index
    %c32_100 = arith.constant 32 : index
    %330 = vector.load %arg4[%c10_99, %c32_100] : memref<16x64xf32, #tpu.memory_space<vmem>>, vector<2x32xf32>
    tpu.vector_store %arg4[%c10_99, %c32_100], %329 {strides = array<i32>} : memref<16x64xf32, #tpu.memory_space<vmem>>, vector<2x32xf32>,
    %cst_101 = arith.constant dense<0.000000e+00> : vector<4x128xf32>
    %331 = tpu.matmul %326, %237, %cst_101 {dimension_numbers = #tpu.dot_dimension_numbers<[1], [0], [0], [1], [0, 0, 1, 1], [], []>} : vector<4x64xf32>, vector<64x128xf32>, vector<4x128xf32> -> vector<4x128xf32>
    %332 = arith.addf %248, %331 : vector<4x128xf32>
    %333 = vector.extract_strided_slice %332 {offsets = [0, 0], sizes = [4, 96], strides = [1, 1]} : vector<4x128xf32> to vector<4x96xf32>
    %334 = arith.negf %333 : vector<4x96xf32>
    %335 = math.exp %334 : vector<4x96xf32>
    %cst_102 = arith.constant 1.000000e+00 : f32
    %336 = vector.broadcast %cst_102 : f32 to vector<4x96xf32>
    %337 = arith.addf %336, %335 : vector<4x96xf32>
    %338 = arith.divf %336, %337 : vector<4x96xf32>
    %339 = vector.extract_strided_slice %332 {offsets = [0, 96], sizes = [4, 32], strides = [1, 1]} : vector<4x128xf32> to vector<4x32xf32>
    %340 = math.tanh %339 : vector<4x32xf32>
    %341 = vector.extract_strided_slice %338 {offsets = [0, 0], sizes = [4, 32], strides = [1, 1]} : vector<4x96xf32> to vector<4x32xf32>
    %342 = vector.extract_strided_slice %338 {offsets = [0, 32], sizes = [4, 32], strides = [1, 1]} : vector<4x96xf32> to vector<4x32xf32>
    %343 = vector.extract_strided_slice %338 {offsets = [0, 64], sizes = [4, 32], strides = [1, 1]} : vector<4x96xf32> to vector<4x32xf32>
    %344 = arith.mulf %342, %322 : vector<4x32xf32>
    %345 = arith.mulf %341, %340 : vector<4x32xf32>
    %346 = arith.addf %344, %345 : vector<4x32xf32>
    %347 = math.tanh %346 : vector<4x32xf32>
    %348 = arith.mulf %343, %347 : vector<4x32xf32>
    %349 = tpu.concatenate %348, %348 in 1 : vector<4x32xf32>, vector<4x32xf32> -> vector<4x64xf32>
    %350 = arith.mulf %349, %4 : vector<4x64xf32>
    %351 = vector.extract_strided_slice %348 {offsets = [0, 0], sizes = [2, 32], strides = [1, 1]} : vector<4x32xf32> to vector<2x32xf32>
    %c6_103 = arith.constant 6 : index
    %c0_104 = arith.constant 0 : index
    %352 = vector.load %arg4[%c6_103, %c0_104] : memref<16x64xf32, #tpu.memory_space<vmem>>, vector<2x32xf32>
    tpu.vector_store %arg4[%c6_103, %c0_104], %351 {strides = array<i32>} : memref<16x64xf32, #tpu.memory_space<vmem>>, vector<2x32xf32>,
    %353 = vector.extract_strided_slice %348 {offsets = [2, 0], sizes = [2, 32], strides = [1, 1]} : vector<4x32xf32> to vector<2x32xf32>
    %c8_105 = arith.constant 8 : index
    %c32_106 = arith.constant 32 : index
    %354 = vector.load %arg4[%c8_105, %c32_106] : memref<16x64xf32, #tpu.memory_space<vmem>>, vector<2x32xf32>
    tpu.vector_store %arg4[%c8_105, %c32_106], %353 {strides = array<i32>} : memref<16x64xf32, #tpu.memory_space<vmem>>, vector<2x32xf32>,
    %cst_107 = arith.constant dense<0.000000e+00> : vector<4x128xf32>
    %355 = tpu.matmul %350, %237, %cst_107 {dimension_numbers = #tpu.dot_dimension_numbers<[1], [0], [0], [1], [0, 0, 1, 1], [], []>} : vector<4x64xf32>, vector<64x128xf32>, vector<4x128xf32> -> vector<4x128xf32>
    %356 = arith.addf %250, %355 : vector<4x128xf32>
    %357 = vector.extract_strided_slice %356 {offsets = [0, 0], sizes = [4, 96], strides = [1, 1]} : vector<4x128xf32> to vector<4x96xf32>
    %358 = arith.negf %357 : vector<4x96xf32>
    %359 = math.exp %358 : vector<4x96xf32>
    %cst_108 = arith.constant 1.000000e+00 : f32
    %360 = vector.broadcast %cst_108 : f32 to vector<4x96xf32>
    %361 = arith.addf %360, %359 : vector<4x96xf32>
    %362 = arith.divf %360, %361 : vector<4x96xf32>
    %363 = vector.extract_strided_slice %356 {offsets = [0, 96], sizes = [4, 32], strides = [1, 1]} : vector<4x128xf32> to vector<4x32xf32>
    %364 = math.tanh %363 : vector<4x32xf32>
    %365 = vector.extract_strided_slice %362 {offsets = [0, 0], sizes = [4, 32], strides = [1, 1]} : vector<4x96xf32> to vector<4x32xf32>
    %366 = vector.extract_strided_slice %362 {offsets = [0, 32], sizes = [4, 32], strides = [1, 1]} : vector<4x96xf32> to vector<4x32xf32>
    %367 = vector.extract_strided_slice %362 {offsets = [0, 64], sizes = [4, 32], strides = [1, 1]} : vector<4x96xf32> to vector<4x32xf32>
    %368 = arith.mulf %366, %346 : vector<4x32xf32>
    %369 = arith.mulf %365, %364 : vector<4x32xf32>
    %370 = arith.addf %368, %369 : vector<4x32xf32>
    %371 = math.tanh %370 : vector<4x32xf32>
    %372 = arith.mulf %367, %371 : vector<4x32xf32>
    %373 = tpu.concatenate %372, %372 in 1 : vector<4x32xf32>, vector<4x32xf32> -> vector<4x64xf32>
    %374 = arith.mulf %373, %4 : vector<4x64xf32>
    %375 = vector.extract_strided_slice %372 {offsets = [0, 0], sizes = [2, 32], strides = [1, 1]} : vector<4x32xf32> to vector<2x32xf32>
    %c8_109 = arith.constant 8 : index
    %c0_110 = arith.constant 0 : index
    %376 = vector.load %arg4[%c8_109, %c0_110] : memref<16x64xf32, #tpu.memory_space<vmem>>, vector<2x32xf32>
    tpu.vector_store %arg4[%c8_109, %c0_110], %375 {strides = array<i32>} : memref<16x64xf32, #tpu.memory_space<vmem>>, vector<2x32xf32>,
    %377 = vector.extract_strided_slice %372 {offsets = [2, 0], sizes = [2, 32], strides = [1, 1]} : vector<4x32xf32> to vector<2x32xf32>
    %c6_111 = arith.constant 6 : index
    %c32_112 = arith.constant 32 : index
    %378 = vector.load %arg4[%c6_111, %c32_112] : memref<16x64xf32, #tpu.memory_space<vmem>>, vector<2x32xf32>
    tpu.vector_store %arg4[%c6_111, %c32_112], %377 {strides = array<i32>} : memref<16x64xf32, #tpu.memory_space<vmem>>, vector<2x32xf32>,
    %cst_113 = arith.constant dense<0.000000e+00> : vector<4x128xf32>
    %379 = tpu.matmul %374, %237, %cst_113 {dimension_numbers = #tpu.dot_dimension_numbers<[1], [0], [0], [1], [0, 0, 1, 1], [], []>} : vector<4x64xf32>, vector<64x128xf32>, vector<4x128xf32> -> vector<4x128xf32>
    %380 = arith.addf %252, %379 : vector<4x128xf32>
    %381 = vector.extract_strided_slice %380 {offsets = [0, 0], sizes = [4, 96], strides = [1, 1]} : vector<4x128xf32> to vector<4x96xf32>
    %382 = arith.negf %381 : vector<4x96xf32>
    %383 = math.exp %382 : vector<4x96xf32>
    %cst_114 = arith.constant 1.000000e+00 : f32
    %384 = vector.broadcast %cst_114 : f32 to vector<4x96xf32>
    %385 = arith.addf %384, %383 : vector<4x96xf32>
    %386 = arith.divf %384, %385 : vector<4x96xf32>
    %387 = vector.extract_strided_slice %380 {offsets = [0, 96], sizes = [4, 32], strides = [1, 1]} : vector<4x128xf32> to vector<4x32xf32>
    %388 = math.tanh %387 : vector<4x32xf32>
    %389 = vector.extract_strided_slice %386 {offsets = [0, 0], sizes = [4, 32], strides = [1, 1]} : vector<4x96xf32> to vector<4x32xf32>
    %390 = vector.extract_strided_slice %386 {offsets = [0, 32], sizes = [4, 32], strides = [1, 1]} : vector<4x96xf32> to vector<4x32xf32>
    %391 = vector.extract_strided_slice %386 {offsets = [0, 64], sizes = [4, 32], strides = [1, 1]} : vector<4x96xf32> to vector<4x32xf32>
    %392 = arith.mulf %390, %370 : vector<4x32xf32>
    %393 = arith.mulf %389, %388 : vector<4x32xf32>
    %394 = arith.addf %392, %393 : vector<4x32xf32>
    %395 = math.tanh %394 : vector<4x32xf32>
    %396 = arith.mulf %391, %395 : vector<4x32xf32>
    %397 = tpu.concatenate %396, %396 in 1 : vector<4x32xf32>, vector<4x32xf32> -> vector<4x64xf32>
    %398 = arith.mulf %397, %4 : vector<4x64xf32>
    %399 = vector.extract_strided_slice %396 {offsets = [0, 0], sizes = [2, 32], strides = [1, 1]} : vector<4x32xf32> to vector<2x32xf32>
    %c10_115 = arith.constant 10 : index
    %c0_116 = arith.constant 0 : index
    %400 = vector.load %arg4[%c10_115, %c0_116] : memref<16x64xf32, #tpu.memory_space<vmem>>, vector<2x32xf32>
    tpu.vector_store %arg4[%c10_115, %c0_116], %399 {strides = array<i32>} : memref<16x64xf32, #tpu.memory_space<vmem>>, vector<2x32xf32>,
    %401 = vector.extract_strided_slice %396 {offsets = [2, 0], sizes = [2, 32], strides = [1, 1]} : vector<4x32xf32> to vector<2x32xf32>
    %c4_117 = arith.constant 4 : index
    %c32_118 = arith.constant 32 : index
    %402 = vector.load %arg4[%c4_117, %c32_118] : memref<16x64xf32, #tpu.memory_space<vmem>>, vector<2x32xf32>
    tpu.vector_store %arg4[%c4_117, %c32_118], %401 {strides = array<i32>} : memref<16x64xf32, #tpu.memory_space<vmem>>, vector<2x32xf32>,
    %cst_119 = arith.constant dense<0.000000e+00> : vector<4x128xf32>
    %403 = tpu.matmul %398, %237, %cst_119 {dimension_numbers = #tpu.dot_dimension_numbers<[1], [0], [0], [1], [0, 0, 1, 1], [], []>} : vector<4x64xf32>, vector<64x128xf32>, vector<4x128xf32> -> vector<4x128xf32>
    %404 = arith.addf %254, %403 : vector<4x128xf32>
    %405 = vector.extract_strided_slice %404 {offsets = [0, 0], sizes = [4, 96], strides = [1, 1]} : vector<4x128xf32> to vector<4x96xf32>
    %406 = arith.negf %405 : vector<4x96xf32>
    %407 = math.exp %406 : vector<4x96xf32>
    %cst_120 = arith.constant 1.000000e+00 : f32
    %408 = vector.broadcast %cst_120 : f32 to vector<4x96xf32>
    %409 = arith.addf %408, %407 : vector<4x96xf32>
    %410 = arith.divf %408, %409 : vector<4x96xf32>
    %411 = vector.extract_strided_slice %404 {offsets = [0, 96], sizes = [4, 32], strides = [1, 1]} : vector<4x128xf32> to vector<4x32xf32>
    %412 = math.tanh %411 : vector<4x32xf32>
    %413 = vector.extract_strided_slice %410 {offsets = [0, 0], sizes = [4, 32], strides = [1, 1]} : vector<4x96xf32> to vector<4x32xf32>
    %414 = vector.extract_strided_slice %410 {offsets = [0, 32], sizes = [4, 32], strides = [1, 1]} : vector<4x96xf32> to vector<4x32xf32>
    %415 = vector.extract_strided_slice %410 {offsets = [0, 64], sizes = [4, 32], strides = [1, 1]} : vector<4x96xf32> to vector<4x32xf32>
    %416 = arith.mulf %414, %394 : vector<4x32xf32>
    %417 = arith.mulf %413, %412 : vector<4x32xf32>
    %418 = arith.addf %416, %417 : vector<4x32xf32>
    %419 = math.tanh %418 : vector<4x32xf32>
    %420 = arith.mulf %415, %419 : vector<4x32xf32>
    %421 = tpu.concatenate %420, %420 in 1 : vector<4x32xf32>, vector<4x32xf32> -> vector<4x64xf32>
    %422 = arith.mulf %421, %4 : vector<4x64xf32>
    %423 = vector.extract_strided_slice %420 {offsets = [0, 0], sizes = [2, 32], strides = [1, 1]} : vector<4x32xf32> to vector<2x32xf32>
    %c12_121 = arith.constant 12 : index
    %c0_122 = arith.constant 0 : index
    %424 = vector.load %arg4[%c12_121, %c0_122] : memref<16x64xf32, #tpu.memory_space<vmem>>, vector<2x32xf32>
    tpu.vector_store %arg4[%c12_121, %c0_122], %423 {strides = array<i32>} : memref<16x64xf32, #tpu.memory_space<vmem>>, vector<2x32xf32>,
    %425 = vector.extract_strided_slice %420 {offsets = [2, 0], sizes = [2, 32], strides = [1, 1]} : vector<4x32xf32> to vector<2x32xf32>
    %c2_123 = arith.constant 2 : index
    %c32_124 = arith.constant 32 : index
    %426 = vector.load %arg4[%c2_123, %c32_124] : memref<16x64xf32, #tpu.memory_space<vmem>>, vector<2x32xf32>
    tpu.vector_store %arg4[%c2_123, %c32_124], %425 {strides = array<i32>} : memref<16x64xf32, #tpu.memory_space<vmem>>, vector<2x32xf32>,
    %cst_125 = arith.constant dense<0.000000e+00> : vector<4x128xf32>
    %427 = tpu.matmul %422, %237, %cst_125 {dimension_numbers = #tpu.dot_dimension_numbers<[1], [0], [0], [1], [0, 0, 1, 1], [], []>} : vector<4x64xf32>, vector<64x128xf32>, vector<4x128xf32> -> vector<4x128xf32>
    %428 = arith.addf %256, %427 : vector<4x128xf32>
    %429 = vector.extract_strided_slice %428 {offsets = [0, 0], sizes = [4, 96], strides = [1, 1]} : vector<4x128xf32> to vector<4x96xf32>
    %430 = arith.negf %429 : vector<4x96xf32>
    %431 = math.exp %430 : vector<4x96xf32>
    %cst_126 = arith.constant 1.000000e+00 : f32
    %432 = vector.broadcast %cst_126 : f32 to vector<4x96xf32>
    %433 = arith.addf %432, %431 : vector<4x96xf32>
    %434 = arith.divf %432, %433 : vector<4x96xf32>
    %435 = vector.extract_strided_slice %428 {offsets = [0, 96], sizes = [4, 32], strides = [1, 1]} : vector<4x128xf32> to vector<4x32xf32>
    %436 = math.tanh %435 : vector<4x32xf32>
    %437 = vector.extract_strided_slice %434 {offsets = [0, 0], sizes = [4, 32], strides = [1, 1]} : vector<4x96xf32> to vector<4x32xf32>
    %438 = vector.extract_strided_slice %434 {offsets = [0, 32], sizes = [4, 32], strides = [1, 1]} : vector<4x96xf32> to vector<4x32xf32>
    %439 = vector.extract_strided_slice %434 {offsets = [0, 64], sizes = [4, 32], strides = [1, 1]} : vector<4x96xf32> to vector<4x32xf32>
    %440 = arith.mulf %438, %418 : vector<4x32xf32>
    %441 = arith.mulf %437, %436 : vector<4x32xf32>
    %442 = arith.addf %440, %441 : vector<4x32xf32>
    %443 = math.tanh %442 : vector<4x32xf32>
    %444 = arith.mulf %439, %443 : vector<4x32xf32>
    %445 = vector.extract_strided_slice %444 {offsets = [0, 0], sizes = [2, 32], strides = [1, 1]} : vector<4x32xf32> to vector<2x32xf32>
    %c14_127 = arith.constant 14 : index
    %c0_128 = arith.constant 0 : index
    %446 = vector.load %arg4[%c14_127, %c0_128] : memref<16x64xf32, #tpu.memory_space<vmem>>, vector<2x32xf32>
    tpu.vector_store %arg4[%c14_127, %c0_128], %445 {strides = array<i32>} : memref<16x64xf32, #tpu.memory_space<vmem>>, vector<2x32xf32>,
    %447 = vector.extract_strided_slice %444 {offsets = [2, 0], sizes = [2, 32], strides = [1, 1]} : vector<4x32xf32> to vector<2x32xf32>
    %c0_129 = arith.constant 0 : index
    %c32_130 = arith.constant 32 : index
    %448 = vector.load %arg4[%c0_129, %c32_130] : memref<16x64xf32, #tpu.memory_space<vmem>>, vector<2x32xf32>
    tpu.vector_store %arg4[%c0_129, %c32_130], %447 {strides = array<i32>} : memref<16x64xf32, #tpu.memory_space<vmem>>, vector<2x32xf32>,
    %c0_131 = arith.constant 0 : index
    %c0_132 = arith.constant 0 : index
    %449 = vector.load %arg4[%c0_131, %c0_132] : memref<16x64xf32, #tpu.memory_space<vmem>>, vector<16x64xf32>
    %450 = vector.shape_cast %449 : vector<16x64xf32> to vector<8x2x64xf32>
    %c304 = arith.constant 304 : index
    %c0_133 = arith.constant 0 : index
    %451 = vector.load %arg1[%c304, %c0_133] : memref<592x128xf32, #tpu.memory_space<vmem>>, vector<64x32xf32>
    %cst_134 = arith.constant dense<0.000000e+00> : vector<16x32xf32>
    %452 = tpu.matmul %449, %451, %cst_134 {dimension_numbers = #tpu.dot_dimension_numbers<[1], [0], [0], [1], [0, 0, 1, 1], [], []>} : vector<16x64xf32>, vector<64x32xf32>, vector<16x32xf32> -> vector<16x32xf32>
    %c400 = arith.constant 400 : index
    %c0_135 = arith.constant 0 : index
    %453 = vector.load %arg1[%c400, %c0_135] : memref<592x128xf32, #tpu.memory_space<vmem>>, vector<1x32xf32>
    %454 = vector.broadcast %453 : vector<1x32xf32> to vector<16x32xf32>
    %455 = arith.addf %452, %454 : vector<16x32xf32>
    %c368 = arith.constant 368 : index
    %c0_136 = arith.constant 0 : index
    %456 = vector.load %arg1[%c368, %c0_136] : memref<592x128xf32, #tpu.memory_space<vmem>>, vector<32x32xf32>
    %c408 = arith.constant 408 : index
    %c0_137 = arith.constant 0 : index
    %457 = vector.load %arg1[%c408, %c0_137] : memref<592x128xf32, #tpu.memory_space<vmem>>, vector<32x1xf32>
    %c440 = arith.constant 440 : index
    %c0_138 = arith.constant 0 : index
    %458 = vector.load %arg1[%c440, %c0_138] : memref<592x128xf32, #tpu.memory_space<vmem>>, vector<1x1xf32>
    %c448 = arith.constant 448 : index
    %c0_139 = arith.constant 0 : index
    %459 = vector.load %arg1[%c448, %c0_139] : memref<592x128xf32, #tpu.memory_space<vmem>>, vector<64x128xf32>
    %c512 = arith.constant 512 : index
    %c0_140 = arith.constant 0 : index
    %460 = vector.load %arg1[%c512, %c0_140] : memref<592x128xf32, #tpu.memory_space<vmem>>, vector<32x128xf32>
    %c544 = arith.constant 544 : index
    %c0_141 = arith.constant 0 : index
    %461 = vector.load %arg1[%c544, %c0_141] : memref<592x128xf32, #tpu.memory_space<vmem>>, vector<1x128xf32>
    %cst_142 = arith.constant 0.000000e+00 : f32
    %462 = vector.broadcast %cst_142 : f32 to vector<2x32xf32>
    %cst_143 = arith.constant 0.000000e+00 : f32
    %463 = vector.broadcast %cst_143 : f32 to vector<2x32xf32>
    %cst_144 = arith.constant dense<0.000000e+00> : vector<2x128xf32>
    %464 = tpu.matmul %462, %460, %cst_144 {dimension_numbers = #tpu.dot_dimension_numbers<[1], [0], [0], [1], [0, 0, 1, 1], [], []>} : vector<2x32xf32>, vector<32x128xf32>, vector<2x128xf32> -> vector<2x128xf32>
    %465 = vector.broadcast %461 : vector<1x128xf32> to vector<2x128xf32>
    %466 = arith.addf %464, %465 : vector<2x128xf32>
    %cst_145 = arith.constant dense<0.000000e+00> : vector<2x32xf32>
    %467 = tpu.matmul %462, %456, %cst_145 {dimension_numbers = #tpu.dot_dimension_numbers<[1], [0], [0], [1], [0, 0, 1, 1], [], []>} : vector<2x32xf32>, vector<32x32xf32>, vector<2x32xf32> -> vector<2x32xf32>
    %468 = vector.shape_cast %467 : vector<2x32xf32> to vector<1x2x32xf32>
    %469 = vector.shape_cast %468 : vector<1x2x32xf32> to vector<1x2x32xf32>
    %470 = vector.broadcast %469 : vector<1x2x32xf32> to vector<8x2x32xf32>
    %471 = vector.shape_cast %470 : vector<8x2x32xf32> to vector<16x32xf32>
    %472 = arith.addf %455, %471 : vector<16x32xf32>
    %473 = math.tanh %472 : vector<16x32xf32>
    %cst_146 = arith.constant dense<0.000000e+00> : vector<16x1xf32>
    %474 = tpu.matmul %473, %457, %cst_146 {dimension_numbers = #tpu.dot_dimension_numbers<[1], [0], [0], [1], [0, 0, 1, 1], [], []>} : vector<16x32xf32>, vector<32x1xf32>, vector<16x1xf32> -> vector<16x1xf32>
    %475 = vector.broadcast %458 : vector<1x1xf32> to vector<16x1xf32>
    %476 = arith.addf %474, %475 : vector<16x1xf32>
    %cst_147 = arith.constant 0.000000e+00 : f32
    %477 = vector.broadcast %cst_147 : f32 to vector<16x1xf32>
    %478 = arith.maximumf %476, %477 : vector<16x1xf32>
    %479 = vector.shape_cast %478 : vector<16x1xf32> to vector<8x2x1xf32>
    %cst_148 = arith.constant dense<0xFF800000> : vector<2x1xf32>
    %480 = vector.multi_reduction <maximumf>, %479, %cst_148 [0] : vector<8x2x1xf32> to vector<2x1xf32>
    %cst_149 = arith.constant 0xFF800000 : f32
    %481 = vector.broadcast %cst_149 : f32 to vector<2x1xf32>
    %482 = arith.maximumf %481, %480 : vector<2x1xf32>
    %483 = vector.shape_cast %482 : vector<2x1xf32> to vector<1x2x1xf32>
    %484 = vector.broadcast %483 : vector<1x2x1xf32> to vector<8x2x1xf32>
    %485 = arith.subf %479, %484 : vector<8x2x1xf32>
    %486 = math.exp %485 : vector<8x2x1xf32>
    %cst_150 = arith.constant dense<0.000000e+00> : vector<2x1xf32>
    %487 = vector.multi_reduction <add>, %486, %cst_150 [0] : vector<8x2x1xf32> to vector<2x1xf32>
    %488 = vector.shape_cast %487 : vector<2x1xf32> to vector<1x2x1xf32>
    %489 = vector.broadcast %488 : vector<1x2x1xf32> to vector<8x2x1xf32>
    %490 = arith.divf %486, %489 : vector<8x2x1xf32>
    %491 = vector.broadcast %490 : vector<8x2x1xf32> to vector<8x2x64xf32>
    %492 = arith.mulf %491, %450 : vector<8x2x64xf32>
    %cst_151 = arith.constant dense<0.000000e+00> : vector<2x64xf32>
    %493 = vector.multi_reduction <add>, %492, %cst_151 [0] : vector<8x2x64xf32> to vector<2x64xf32>
    %cst_152 = arith.constant dense<0.000000e+00> : vector<2x128xf32>
    %494 = tpu.matmul %493, %459, %cst_152 {dimension_numbers = #tpu.dot_dimension_numbers<[1], [0], [0], [1], [0, 0, 1, 1], [], []>} : vector<2x64xf32>, vector<64x128xf32>, vector<2x128xf32> -> vector<2x128xf32>
    %495 = arith.addf %494, %466 : vector<2x128xf32>
    %496 = vector.extract_strided_slice %495 {offsets = [0, 0], sizes = [2, 96], strides = [1, 1]} : vector<2x128xf32> to vector<2x96xf32>
    %497 = arith.negf %496 : vector<2x96xf32>
    %498 = math.exp %497 : vector<2x96xf32>
    %cst_153 = arith.constant 1.000000e+00 : f32
    %499 = vector.broadcast %cst_153 : f32 to vector<2x96xf32>
    %500 = arith.addf %499, %498 : vector<2x96xf32>
    %501 = arith.divf %499, %500 : vector<2x96xf32>
    %502 = vector.extract_strided_slice %495 {offsets = [0, 96], sizes = [2, 32], strides = [1, 1]} : vector<2x128xf32> to vector<2x32xf32>
    %503 = math.tanh %502 : vector<2x32xf32>
    %504 = vector.extract_strided_slice %501 {offsets = [0, 0], sizes = [2, 32], strides = [1, 1]} : vector<2x96xf32> to vector<2x32xf32>
    %505 = vector.extract_strided_slice %501 {offsets = [0, 32], sizes = [2, 32], strides = [1, 1]} : vector<2x96xf32> to vector<2x32xf32>
    %506 = vector.extract_strided_slice %501 {offsets = [0, 64], sizes = [2, 32], strides = [1, 1]} : vector<2x96xf32> to vector<2x32xf32>
    %507 = arith.mulf %505, %463 : vector<2x32xf32>
    %508 = arith.mulf %504, %503 : vector<2x32xf32>
    %509 = arith.addf %507, %508 : vector<2x32xf32>
    %510 = math.tanh %509 : vector<2x32xf32>
    %511 = arith.mulf %506, %510 : vector<2x32xf32>
    %cst_154 = arith.constant dense<0.000000e+00> : vector<2x128xf32>
    %512 = tpu.matmul %511, %460, %cst_154 {dimension_numbers = #tpu.dot_dimension_numbers<[1], [0], [0], [1], [0, 0, 1, 1], [], []>} : vector<2x32xf32>, vector<32x128xf32>, vector<2x128xf32> -> vector<2x128xf32>
    %513 = vector.broadcast %461 : vector<1x128xf32> to vector<2x128xf32>
    %514 = arith.addf %512, %513 : vector<2x128xf32>
    %cst_155 = arith.constant dense<0.000000e+00> : vector<2x32xf32>
    %515 = tpu.matmul %511, %456, %cst_155 {dimension_numbers = #tpu.dot_dimension_numbers<[1], [0], [0], [1], [0, 0, 1, 1], [], []>} : vector<2x32xf32>, vector<32x32xf32>, vector<2x32xf32> -> vector<2x32xf32>
    %516 = vector.shape_cast %515 : vector<2x32xf32> to vector<1x2x32xf32>
    %517 = vector.shape_cast %516 : vector<1x2x32xf32> to vector<1x2x32xf32>
    %518 = vector.broadcast %517 : vector<1x2x32xf32> to vector<8x2x32xf32>
    %519 = vector.shape_cast %518 : vector<8x2x32xf32> to vector<16x32xf32>
    %520 = arith.addf %455, %519 : vector<16x32xf32>
    %521 = math.tanh %520 : vector<16x32xf32>
    %cst_156 = arith.constant dense<0.000000e+00> : vector<16x1xf32>
    %522 = tpu.matmul %521, %457, %cst_156 {dimension_numbers = #tpu.dot_dimension_numbers<[1], [0], [0], [1], [0, 0, 1, 1], [], []>} : vector<16x32xf32>, vector<32x1xf32>, vector<16x1xf32> -> vector<16x1xf32>
    %523 = vector.broadcast %458 : vector<1x1xf32> to vector<16x1xf32>
    %524 = arith.addf %522, %523 : vector<16x1xf32>
    %cst_157 = arith.constant 0.000000e+00 : f32
    %525 = vector.broadcast %cst_157 : f32 to vector<16x1xf32>
    %526 = arith.maximumf %524, %525 : vector<16x1xf32>
    %527 = vector.shape_cast %526 : vector<16x1xf32> to vector<8x2x1xf32>
    %cst_158 = arith.constant dense<0xFF800000> : vector<2x1xf32>
    %528 = vector.multi_reduction <maximumf>, %527, %cst_158 [0] : vector<8x2x1xf32> to vector<2x1xf32>
    %cst_159 = arith.constant 0xFF800000 : f32
    %529 = vector.broadcast %cst_159 : f32 to vector<2x1xf32>
    %530 = arith.maximumf %529, %528 : vector<2x1xf32>
    %531 = vector.shape_cast %530 : vector<2x1xf32> to vector<1x2x1xf32>
    %532 = vector.broadcast %531 : vector<1x2x1xf32> to vector<8x2x1xf32>
    %533 = arith.subf %527, %532 : vector<8x2x1xf32>
    %534 = math.exp %533 : vector<8x2x1xf32>
    %cst_160 = arith.constant dense<0.000000e+00> : vector<2x1xf32>
    %535 = vector.multi_reduction <add>, %534, %cst_160 [0] : vector<8x2x1xf32> to vector<2x1xf32>
    %536 = vector.shape_cast %535 : vector<2x1xf32> to vector<1x2x1xf32>
    %537 = vector.broadcast %536 : vector<1x2x1xf32> to vector<8x2x1xf32>
    %538 = arith.divf %534, %537 : vector<8x2x1xf32>
    %539 = vector.broadcast %538 : vector<8x2x1xf32> to vector<8x2x64xf32>
    %540 = arith.mulf %539, %450 : vector<8x2x64xf32>
    %cst_161 = arith.constant dense<0.000000e+00> : vector<2x64xf32>
    %541 = vector.multi_reduction <add>, %540, %cst_161 [0] : vector<8x2x64xf32> to vector<2x64xf32>
    %cst_162 = arith.constant dense<0.000000e+00> : vector<2x128xf32>
    %542 = tpu.matmul %541, %459, %cst_162 {dimension_numbers = #tpu.dot_dimension_numbers<[1], [0], [0], [1], [0, 0, 1, 1], [], []>} : vector<2x64xf32>, vector<64x128xf32>, vector<2x128xf32> -> vector<2x128xf32>
    %543 = arith.addf %542, %514 : vector<2x128xf32>
    %544 = vector.extract_strided_slice %543 {offsets = [0, 0], sizes = [2, 96], strides = [1, 1]} : vector<2x128xf32> to vector<2x96xf32>
    %545 = arith.negf %544 : vector<2x96xf32>
    %546 = math.exp %545 : vector<2x96xf32>
    %cst_163 = arith.constant 1.000000e+00 : f32
    %547 = vector.broadcast %cst_163 : f32 to vector<2x96xf32>
    %548 = arith.addf %547, %546 : vector<2x96xf32>
    %549 = arith.divf %547, %548 : vector<2x96xf32>
    %550 = vector.extract_strided_slice %543 {offsets = [0, 96], sizes = [2, 32], strides = [1, 1]} : vector<2x128xf32> to vector<2x32xf32>
    %551 = math.tanh %550 : vector<2x32xf32>
    %552 = vector.extract_strided_slice %549 {offsets = [0, 0], sizes = [2, 32], strides = [1, 1]} : vector<2x96xf32> to vector<2x32xf32>
    %553 = vector.extract_strided_slice %549 {offsets = [0, 32], sizes = [2, 32], strides = [1, 1]} : vector<2x96xf32> to vector<2x32xf32>
    %554 = vector.extract_strided_slice %549 {offsets = [0, 64], sizes = [2, 32], strides = [1, 1]} : vector<2x96xf32> to vector<2x32xf32>
    %555 = arith.mulf %553, %509 : vector<2x32xf32>
    %556 = arith.mulf %552, %551 : vector<2x32xf32>
    %557 = arith.addf %555, %556 : vector<2x32xf32>
    %558 = math.tanh %557 : vector<2x32xf32>
    %559 = arith.mulf %554, %558 : vector<2x32xf32>
    %cst_164 = arith.constant dense<0.000000e+00> : vector<2x128xf32>
    %560 = tpu.matmul %559, %460, %cst_164 {dimension_numbers = #tpu.dot_dimension_numbers<[1], [0], [0], [1], [0, 0, 1, 1], [], []>} : vector<2x32xf32>, vector<32x128xf32>, vector<2x128xf32> -> vector<2x128xf32>
    %561 = vector.broadcast %461 : vector<1x128xf32> to vector<2x128xf32>
    %562 = arith.addf %560, %561 : vector<2x128xf32>
    %cst_165 = arith.constant dense<0.000000e+00> : vector<2x32xf32>
    %563 = tpu.matmul %559, %456, %cst_165 {dimension_numbers = #tpu.dot_dimension_numbers<[1], [0], [0], [1], [0, 0, 1, 1], [], []>} : vector<2x32xf32>, vector<32x32xf32>, vector<2x32xf32> -> vector<2x32xf32>
    %564 = vector.shape_cast %563 : vector<2x32xf32> to vector<1x2x32xf32>
    %565 = vector.shape_cast %564 : vector<1x2x32xf32> to vector<1x2x32xf32>
    %566 = vector.broadcast %565 : vector<1x2x32xf32> to vector<8x2x32xf32>
    %567 = vector.shape_cast %566 : vector<8x2x32xf32> to vector<16x32xf32>
    %568 = arith.addf %455, %567 : vector<16x32xf32>
    %569 = math.tanh %568 : vector<16x32xf32>
    %cst_166 = arith.constant dense<0.000000e+00> : vector<16x1xf32>
    %570 = tpu.matmul %569, %457, %cst_166 {dimension_numbers = #tpu.dot_dimension_numbers<[1], [0], [0], [1], [0, 0, 1, 1], [], []>} : vector<16x32xf32>, vector<32x1xf32>, vector<16x1xf32> -> vector<16x1xf32>
    %571 = vector.broadcast %458 : vector<1x1xf32> to vector<16x1xf32>
    %572 = arith.addf %570, %571 : vector<16x1xf32>
    %cst_167 = arith.constant 0.000000e+00 : f32
    %573 = vector.broadcast %cst_167 : f32 to vector<16x1xf32>
    %574 = arith.maximumf %572, %573 : vector<16x1xf32>
    %575 = vector.shape_cast %574 : vector<16x1xf32> to vector<8x2x1xf32>
    %cst_168 = arith.constant dense<0xFF800000> : vector<2x1xf32>
    %576 = vector.multi_reduction <maximumf>, %575, %cst_168 [0] : vector<8x2x1xf32> to vector<2x1xf32>
    %cst_169 = arith.constant 0xFF800000 : f32
    %577 = vector.broadcast %cst_169 : f32 to vector<2x1xf32>
    %578 = arith.maximumf %577, %576 : vector<2x1xf32>
    %579 = vector.shape_cast %578 : vector<2x1xf32> to vector<1x2x1xf32>
    %580 = vector.broadcast %579 : vector<1x2x1xf32> to vector<8x2x1xf32>
    %581 = arith.subf %575, %580 : vector<8x2x1xf32>
    %582 = math.exp %581 : vector<8x2x1xf32>
    %cst_170 = arith.constant dense<0.000000e+00> : vector<2x1xf32>
    %583 = vector.multi_reduction <add>, %582, %cst_170 [0] : vector<8x2x1xf32> to vector<2x1xf32>
    %584 = vector.shape_cast %583 : vector<2x1xf32> to vector<1x2x1xf32>
    %585 = vector.broadcast %584 : vector<1x2x1xf32> to vector<8x2x1xf32>
    %586 = arith.divf %582, %585 : vector<8x2x1xf32>
    %587 = vector.broadcast %586 : vector<8x2x1xf32> to vector<8x2x64xf32>
    %588 = arith.mulf %587, %450 : vector<8x2x64xf32>
    %cst_171 = arith.constant dense<0.000000e+00> : vector<2x64xf32>
    %589 = vector.multi_reduction <add>, %588, %cst_171 [0] : vector<8x2x64xf32> to vector<2x64xf32>
    %cst_172 = arith.constant dense<0.000000e+00> : vector<2x128xf32>
    %590 = tpu.matmul %589, %459, %cst_172 {dimension_numbers = #tpu.dot_dimension_numbers<[1], [0], [0], [1], [0, 0, 1, 1], [], []>} : vector<2x64xf32>, vector<64x128xf32>, vector<2x128xf32> -> vector<2x128xf32>
    %591 = arith.addf %590, %562 : vector<2x128xf32>
    %592 = vector.extract_strided_slice %591 {offsets = [0, 0], sizes = [2, 96], strides = [1, 1]} : vector<2x128xf32> to vector<2x96xf32>
    %593 = arith.negf %592 : vector<2x96xf32>
    %594 = math.exp %593 : vector<2x96xf32>
    %cst_173 = arith.constant 1.000000e+00 : f32
    %595 = vector.broadcast %cst_173 : f32 to vector<2x96xf32>
    %596 = arith.addf %595, %594 : vector<2x96xf32>
    %597 = arith.divf %595, %596 : vector<2x96xf32>
    %598 = vector.extract_strided_slice %591 {offsets = [0, 96], sizes = [2, 32], strides = [1, 1]} : vector<2x128xf32> to vector<2x32xf32>
    %599 = math.tanh %598 : vector<2x32xf32>
    %600 = vector.extract_strided_slice %597 {offsets = [0, 0], sizes = [2, 32], strides = [1, 1]} : vector<2x96xf32> to vector<2x32xf32>
    %601 = vector.extract_strided_slice %597 {offsets = [0, 32], sizes = [2, 32], strides = [1, 1]} : vector<2x96xf32> to vector<2x32xf32>
    %602 = vector.extract_strided_slice %597 {offsets = [0, 64], sizes = [2, 32], strides = [1, 1]} : vector<2x96xf32> to vector<2x32xf32>
    %603 = arith.mulf %601, %557 : vector<2x32xf32>
    %604 = arith.mulf %600, %599 : vector<2x32xf32>
    %605 = arith.addf %603, %604 : vector<2x32xf32>
    %606 = math.tanh %605 : vector<2x32xf32>
    %607 = arith.mulf %602, %606 : vector<2x32xf32>
    %cst_174 = arith.constant dense<0.000000e+00> : vector<2x128xf32>
    %608 = tpu.matmul %607, %460, %cst_174 {dimension_numbers = #tpu.dot_dimension_numbers<[1], [0], [0], [1], [0, 0, 1, 1], [], []>} : vector<2x32xf32>, vector<32x128xf32>, vector<2x128xf32> -> vector<2x128xf32>
    %609 = vector.broadcast %461 : vector<1x128xf32> to vector<2x128xf32>
    %610 = arith.addf %608, %609 : vector<2x128xf32>
    %cst_175 = arith.constant dense<0.000000e+00> : vector<2x32xf32>
    %611 = tpu.matmul %607, %456, %cst_175 {dimension_numbers = #tpu.dot_dimension_numbers<[1], [0], [0], [1], [0, 0, 1, 1], [], []>} : vector<2x32xf32>, vector<32x32xf32>, vector<2x32xf32> -> vector<2x32xf32>
    %612 = vector.shape_cast %611 : vector<2x32xf32> to vector<1x2x32xf32>
    %613 = vector.shape_cast %612 : vector<1x2x32xf32> to vector<1x2x32xf32>
    %614 = vector.broadcast %613 : vector<1x2x32xf32> to vector<8x2x32xf32>
    %615 = vector.shape_cast %614 : vector<8x2x32xf32> to vector<16x32xf32>
    %616 = arith.addf %455, %615 : vector<16x32xf32>
    %617 = math.tanh %616 : vector<16x32xf32>
    %cst_176 = arith.constant dense<0.000000e+00> : vector<16x1xf32>
    %618 = tpu.matmul %617, %457, %cst_176 {dimension_numbers = #tpu.dot_dimension_numbers<[1], [0], [0], [1], [0, 0, 1, 1], [], []>} : vector<16x32xf32>, vector<32x1xf32>, vector<16x1xf32> -> vector<16x1xf32>
    %619 = vector.broadcast %458 : vector<1x1xf32> to vector<16x1xf32>
    %620 = arith.addf %618, %619 : vector<16x1xf32>
    %cst_177 = arith.constant 0.000000e+00 : f32
    %621 = vector.broadcast %cst_177 : f32 to vector<16x1xf32>
    %622 = arith.maximumf %620, %621 : vector<16x1xf32>
    %623 = vector.shape_cast %622 : vector<16x1xf32> to vector<8x2x1xf32>
    %cst_178 = arith.constant dense<0xFF800000> : vector<2x1xf32>
    %624 = vector.multi_reduction <maximumf>, %623, %cst_178 [0] : vector<8x2x1xf32> to vector<2x1xf32>
    %cst_179 = arith.constant 0xFF800000 : f32
    %625 = vector.broadcast %cst_179 : f32 to vector<2x1xf32>
    %626 = arith.maximumf %625, %624 : vector<2x1xf32>
    %627 = vector.shape_cast %626 : vector<2x1xf32> to vector<1x2x1xf32>
    %628 = vector.broadcast %627 : vector<1x2x1xf32> to vector<8x2x1xf32>
    %629 = arith.subf %623, %628 : vector<8x2x1xf32>
    %630 = math.exp %629 : vector<8x2x1xf32>
    %cst_180 = arith.constant dense<0.000000e+00> : vector<2x1xf32>
    %631 = vector.multi_reduction <add>, %630, %cst_180 [0] : vector<8x2x1xf32> to vector<2x1xf32>
    %632 = vector.shape_cast %631 : vector<2x1xf32> to vector<1x2x1xf32>
    %633 = vector.broadcast %632 : vector<1x2x1xf32> to vector<8x2x1xf32>
    %634 = arith.divf %630, %633 : vector<8x2x1xf32>
    %635 = vector.broadcast %634 : vector<8x2x1xf32> to vector<8x2x64xf32>
    %636 = arith.mulf %635, %450 : vector<8x2x64xf32>
    %cst_181 = arith.constant dense<0.000000e+00> : vector<2x64xf32>
    %637 = vector.multi_reduction <add>, %636, %cst_181 [0] : vector<8x2x64xf32> to vector<2x64xf32>
    %cst_182 = arith.constant dense<0.000000e+00> : vector<2x128xf32>
    %638 = tpu.matmul %637, %459, %cst_182 {dimension_numbers = #tpu.dot_dimension_numbers<[1], [0], [0], [1], [0, 0, 1, 1], [], []>} : vector<2x64xf32>, vector<64x128xf32>, vector<2x128xf32> -> vector<2x128xf32>
    %639 = arith.addf %638, %610 : vector<2x128xf32>
    %640 = vector.extract_strided_slice %639 {offsets = [0, 0], sizes = [2, 96], strides = [1, 1]} : vector<2x128xf32> to vector<2x96xf32>
    %641 = arith.negf %640 : vector<2x96xf32>
    %642 = math.exp %641 : vector<2x96xf32>
    %cst_183 = arith.constant 1.000000e+00 : f32
    %643 = vector.broadcast %cst_183 : f32 to vector<2x96xf32>
    %644 = arith.addf %643, %642 : vector<2x96xf32>
    %645 = arith.divf %643, %644 : vector<2x96xf32>
    %646 = vector.extract_strided_slice %639 {offsets = [0, 96], sizes = [2, 32], strides = [1, 1]} : vector<2x128xf32> to vector<2x32xf32>
    %647 = math.tanh %646 : vector<2x32xf32>
    %648 = vector.extract_strided_slice %645 {offsets = [0, 0], sizes = [2, 32], strides = [1, 1]} : vector<2x96xf32> to vector<2x32xf32>
    %649 = vector.extract_strided_slice %645 {offsets = [0, 32], sizes = [2, 32], strides = [1, 1]} : vector<2x96xf32> to vector<2x32xf32>
    %650 = vector.extract_strided_slice %645 {offsets = [0, 64], sizes = [2, 32], strides = [1, 1]} : vector<2x96xf32> to vector<2x32xf32>
    %651 = arith.mulf %649, %605 : vector<2x32xf32>
    %652 = arith.mulf %648, %647 : vector<2x32xf32>
    %653 = arith.addf %651, %652 : vector<2x32xf32>
    %654 = math.tanh %653 : vector<2x32xf32>
    %655 = arith.mulf %650, %654 : vector<2x32xf32>
    %656 = tpu.concatenate %511, %559, %607, %655 in 0 : vector<2x32xf32>, vector<2x32xf32>, vector<2x32xf32>, vector<2x32xf32> -> vector<8x32xf32>
    %c552 = arith.constant 552 : index
    %c0_184 = arith.constant 0 : index
    %657 = vector.load %arg1[%c552, %c0_184] : memref<592x128xf32, #tpu.memory_space<vmem>>, vector<32x128xf32>
    %cst_185 = arith.constant dense<0.000000e+00> : vector<8x128xf32>
    %658 = tpu.matmul %656, %657, %cst_185 {dimension_numbers = #tpu.dot_dimension_numbers<[1], [0], [0], [1], [0, 0, 1, 1], [], []>} : vector<8x32xf32>, vector<32x128xf32>, vector<8x128xf32> -> vector<8x128xf32>
    %c584 = arith.constant 584 : index
    %c0_186 = arith.constant 0 : index
    %659 = vector.load %arg1[%c584, %c0_186] : memref<592x128xf32, #tpu.memory_space<vmem>>, vector<1x128xf32>
    %660 = vector.broadcast %659 : vector<1x128xf32> to vector<8x128xf32>
    %661 = arith.addf %658, %660 : vector<8x128xf32>
    %c0_187 = arith.constant 0 : index
    %c0_188 = arith.constant 0 : index
    %662 = vector.load %arg2[%c0_187, %c0_188] : memref<8x128xf32, #tpu.memory_space<vmem>>, vector<8x128xf32>
    tpu.vector_store %arg2[%c0_187, %c0_188], %661 {strides = array<i32>} : memref<8x128xf32, #tpu.memory_space<vmem>>, vector<8x128xf32>,
    return
  }
}

</mosaic_0001>

<llo_original>
// kernel: speech_rnn_forward.1
$region0: #{speech_rnn_forward.1}
  #allocation0 [shape = 'u32[]', space=smem, size = 0x4, offset = 0x4, fixed_abs, tag = 'smem constant byte address 0x4 - core index']
  #allocation1 [shape = 'u32[144,128]{1,0:T(1,128)}', space=vmem, size = 0x12000, scoped, tag = 'internal scratch']
  #allocation2 [shape = 'f32[32,128]{1,0:T(8,128)}', space=vmem, size = 0x4000, scoped, tag = 'scratch operand']
  #allocation3 [shape = 'f32[16,64]{1,0:T(8,128)}', space=vmem, size = 0x2000, scoped, tag = 'scratch operand']
  %s0 = inlined_call_operand.vmem [shape: f32[32,32], index: 0, kind: input, shape index: {}]
  %s1 = inlined_call_operand.hbm [shape: f32[592,128], index: 1, kind: input, shape index: {}]
  %s2 = inlined_call_operand.vmem [shape: f32[8,128], index: 2, kind: output, shape index: {}]
  %s3 = sld [smem:[#allocation0]]
  $region22: #{speech_rnn_forward.1} parent=0
    _
  %s5 = ssub.s32 1, %s3
  %s6 = scalar_select 0, %s5, %s3
  $region1: #{speech_rnn_forward.1} parent=0
    #allocation4 [shape = 'u8[303104]{0}', space=vmem, size = 0x4a000, scoped, tag = 'input window, operand 1, single buffered']
    #allocation5 [shape = 's32[1]{0}', space=sflag, size = 0x4, scoped, tag = 'scoped memory for speech_rnn_forward.1']
    %7 = vsyncpa [#allocation5], 0
    // Predicated region
    $region2: #{speech_rnn_forward.1} parent=1 // pred_check
      _
    $region3: #{speech_rnn_forward.1} parent=1 // pred_check_branch
      %9 = sbr.rel (0) target = $region5
    $region4: #{speech_rnn_forward.1} parent=1 // pred_region
      _
    $region5: #{speech_rnn_forward.1} parent=1 // pred_fallthru
      _
    // Predicated region
    $region6: #{speech_rnn_forward.1} parent=1 // pred_check
      _
    $region7: #{speech_rnn_forward.1} parent=1 // pred_check_branch
      %11 = sbr.rel (0) target = $region9
    $region8: #{speech_rnn_forward.1} parent=1 // pred_region
      %s13 = ssub.s32 9472, 9472
      %14 = vsyncadd [#allocation5], %s13
      %s15 = sshll.u32 [#allocation4], 4
      %s16 = int_to_ptr.vmem [resolvable:$true] %s15
      %21 = dma.hbm_to_vmem [thread:$0]  %s1, 9472, %s16, [#allocation5], 128, 128, 8
    $region9: #{speech_rnn_forward.1} parent=1 // pred_fallthru
      _
    // Predicated region
    $region10: #{speech_rnn_forward.1} parent=1 // pred_check
      _
    $region11: #{speech_rnn_forward.1} parent=1 // pred_check_branch
      %23 = sbr.rel (0) target = $region13
    $region12: #{speech_rnn_forward.1} parent=1 // pred_region
      %24 = dma.done [#allocation5], 9472
    $region13: #{speech_rnn_forward.1} parent=1 // pred_fallthru
      _
    %vm25 = vcmask 261120
    %v26 = vsel %vm25, 1.0, 0.0
    %v27 = vsel %vm25, 0.0, 1.0
    %v29 = vrot.slane %v27, 6
    %vm31 = vcmask 1041408
    %v32 = vsel %vm31, %v26, %v29
    %33 = vst [vmem:[#allocation2] sm:$0xff] 0.0
    %34 = vst [vmem:[#allocation2 + $0x8] sm:$0xff] 0.0
    %35 = vst [vmem:[#allocation2 + $0x10] sm:$0xff] 0.0
    %36 = vst [vmem:[#allocation2 + $0x18] sm:$0xff] 0.0
    %v37 = vld [vmem:[%s0] sm:$0xff]
    %v38 = vld [vmem:[%s0 + $0x8] sm:$0xff]
    %v39 = vld [vmem:[%s0 + $0x10] sm:$0xff]
    %v40 = vld [vmem:[%s0 + $0x18] sm:$0xff]
    %v41 = vld [vmem:[#allocation4 + $0x28] sm:$0xff]
    %v42 = vld [vmem:[#allocation4 + $0x30] sm:$0xff]
    %v43 = vld [vmem:[#allocation4 + $0x38] sm:$0xff]
    %v44 = vld [vmem:[#allocation4 + $0x40] sm:$0xff]
    %v45 = vld [vmem:[#allocation4 + $0x48] sm:$0xff]
    %v46 = vld [vmem:[#allocation4 + $0x50] sm:$0xff]
    %v47 = vld [vmem:[#allocation4 + $0x58] sm:$0xff]
    %v48 = vld [vmem:[#allocation4 + $0x60] sm:$0xff]
    %v49 = vld [vmem:[#allocation4 + $0x20] sm:$0xf]
    %v50 = vld [vmem:[#allocation4] sm:$0xff]
    %v51 = vld [vmem:[#allocation4 + $0x8] sm:$0xff]
    %v52 = vld [vmem:[#allocation4 + $0x10] sm:$0xff]
    %v53 = vld [vmem:[#allocation4 + $0x18] sm:$0xff]
    %v55 = vsel %vm25, %v37, 0
    %v58 = vsel %vm25, %v38, 0
    %v61 = vsel %vm25, %v39, 0
    %v64 = vsel %vm25, %v40, 0
    %66 = vmatprep.subr.mxu0 0.0
    %67 = vmatpush1.msra.mxu0 0.0
    %68 = vmatprep.subr.mxu0 0.0
    %69 = vmatpush1.msra.mxu0 0.0
    %70 = vmatprep.subr.mxu0 0.0
    %71 = vmatpush1.msra.mxu0 0.0
    %72 = vmatprep.subr.mxu0 0.0
    %73 = vmatpush1.msra.mxu0 0.0
    %74 = vmatprep.subr.mxu0 0.0
    %75 = vmatpush1.msra.mxu0 0.0
    %76 = vmatprep.subr.mxu0 0.0
    %77 = vmatpush1.msra.mxu0 0.0
    %78 = vmatprep.subr.mxu0 0.0
    %79 = vmatpush1.msra.mxu0 0.0
    %80 = vmatprep.subr.mxu0 0.0
    %81 = vmatpush1.msra.mxu0 0.0
    %82 = vmatprep.subr.mxu0 0.0
    %83 = vmatpush1.msra.mxu0 0.0
    %84 = vmatprep.subr.mxu0 0.0
    %85 = vmatpush1.msra.mxu0 0.0
    %86 = vmatprep.subr.mxu0 0.0
    %87 = vmatpush1.msra.mxu0 0.0
    %88 = vmatprep.subr.mxu0 0.0
    %89 = vmatpush1.msra.mxu0 0.0
    %90 = vmatprep.subr.mxu0 0.0
    %91 = vmatpush1.msra.mxu0 %v53
    %92 = vmatprep.subr.mxu0 0.0
    %93 = vmatpush1.msra.mxu0 %v52
    %94 = vmatprep.subr.mxu0 0.0
    %95 = vmatpush1.msra.mxu0 %v51
    %96 = vmatprep.subr.mxu0 0.0
    %97 = vmatpush1.msra.mxu0 %v50
    %98 = vmatprep.subr.mxu0 0.0
    %99 = vmatpush2.msra.mxu0 0.0
    %100 = vmatprep.subr.mxu0 0.0
    %101 = vmatpush2.msra.mxu0 0.0
    %102 = vmatprep.subr.mxu0 0.0
    %103 = vmatpush2.msra.mxu0 0.0
    %104 = vmatprep.subr.mxu0 0.0
    %105 = vmatpush2.msra.mxu0 0.0
    %106 = vmatprep.subr.mxu0 0.0
    %107 = vmatpush2.msra.mxu0 0.0
    %108 = vmatprep.subr.mxu0 0.0
    %109 = vmatpush2.msra.mxu0 0.0
    %110 = vmatprep.subr.mxu0 0.0
    %111 = vmatpush2.msra.mxu0 0.0
    %112 = vmatprep.subr.mxu0 0.0
    %113 = vmatpush2.msra.mxu0 0.0
    %114 = vmatprep.subr.mxu0 0.0
    %115 = vmatpush2.msra.mxu0 0.0
    %116 = vmatprep.subr.mxu0 0.0
    %117 = vmatpush2.msra.mxu0 0.0
    %118 = vmatprep.subr.mxu0 0.0
    %119 = vmatpush2.msra.mxu0 0.0
    %120 = vmatprep.subr.mxu0 0.0
    %121 = vmatpush2.msra.mxu0 0.0
    %122 = vmatprep.subr.mxu0 0.0
    %123 = vmatpush2.msra.mxu0 0.0
    %124 = vmatprep.subr.mxu0 0.0
    %125 = vmatpush2.msra.mxu0 0.0
    %126 = vmatprep.subr.mxu0 0.0
    %127 = vmatpush2.msra.mxu0 0.0
    %128 = vmatprep.subr.mxu0 0.0
    %129 = vmatpush2.msra.mxu0 0.0
    %130 = vmatprep.mubr.f32.mxu0 0.0
    %131 = vmatmul.mubr.f32.gmra.mxu0 %v55
    %v132 = vpop.f32.mrf.mxu0
    %v133 = vadd.f32 0.0, %v132
    %v134 = vpop.f32.mrf.mxu0
    %135 = vmatprep.mubr.f32.mxu0 0.0
    %136 = vmatmul.mubr.f32.gmra.mxu0 %v58
    %v137 = vpop.f32.mrf.mxu0
    %v138 = vadd.f32 0.0, %v137
    %v139 = vpop.f32.mrf.mxu0
    %140 = vmatprep.mubr.f32.mxu0 0.0
    %141 = vmatmul.mubr.f32.gmra.mxu0 %v61
    %v142 = vpop.f32.mrf.mxu0
    %v143 = vadd.f32 0.0, %v142
    %v144 = vpop.f32.mrf.mxu0
    %145 = vmatprep.mubr.f32.mxu0 0.0
    %146 = vmatmul.mubr.f32.gmra.mxu0 %v64
    %v147 = vpop.f32.mrf.mxu0
    %v148 = vadd.f32 0.0, %v147
    %v149 = vpop.f32.mrf.mxu0
    %150 = vdwg.mxu0
    %v151 = vadd.f32 %v133, %v49
    %v153 = vrot.slane %v49, 4
    %v155 = vadd.f32 %v133, %v153
    %v156 = vadd.f32 %v138, %v49
    %v157 = vadd.f32 %v138, %v153
    %v158 = vadd.f32 %v143, %v49
    %v159 = vadd.f32 %v143, %v153
    %v160 = vadd.f32 %v148, %v49
    %v161 = vadd.f32 %v148, %v153
    %vm162 = vcmask 523264
    %v164 = vsel %vm162, 0.0, 0
    %166 = vmatprep.subr.mxu0 0.0
    %167 = vmatpush1.msra.mxu0 0.0
    %168 = vmatprep.subr.mxu0 0.0
    %169 = vmatpush1.msra.mxu0 0.0
    %170 = vmatprep.subr.mxu0 0.0
    %171 = vmatpush1.msra.mxu0 0.0
    %172 = vmatprep.subr.mxu0 0.0
    %173 = vmatpush1.msra.mxu0 0.0
    %174 = vmatprep.subr.mxu0 0.0
    %175 = vmatpush1.msra.mxu0 0.0
    %176 = vmatprep.subr.mxu0 0.0
    %177 = vmatpush1.msra.mxu0 0.0
    %178 = vmatprep.subr.mxu0 0.0
    %179 = vmatpush1.msra.mxu0 0.0
    %180 = vmatprep.subr.mxu0 0.0
    %181 = vmatpush1.msra.mxu0 0.0
    %182 = vmatprep.subr.mxu0 0.0
    %183 = vmatpush1.msra.mxu0 %v48
    %184 = vmatprep.subr.mxu0 0.0
    %185 = vmatpush1.msra.mxu0 %v47
    %186 = vmatprep.subr.mxu0 0.0
    %187 = vmatpush1.msra.mxu0 %v46
    %188 = vmatprep.subr.mxu0 0.0
    %189 = vmatpush1.msra.mxu0 %v45
    %190 = vmatprep.subr.mxu0 0.0
    %191 = vmatpush1.msra.mxu0 %v44
    %192 = vmatprep.subr.mxu0 0.0
    %193 = vmatpush1.msra.mxu0 %v43
    %194 = vmatprep.subr.mxu0 0.0
    %195 = vmatpush1.msra.mxu0 %v42
    %196 = vmatprep.subr.mxu0 0.0
    %197 = vmatpush1.msra.mxu0 %v41
    %198 = vmatprep.subr.mxu0 0.0
    %199 = vmatpush2.msra.mxu0 0.0
    %200 = vmatprep.subr.mxu0 0.0
    %201 = vmatpush2.msra.mxu0 0.0
    %202 = vmatprep.subr.mxu0 0.0
    %203 = vmatpush2.msra.mxu0 0.0
    %204 = vmatprep.subr.mxu0 0.0
    %205 = vmatpush2.msra.mxu0 0.0
    %206 = vmatprep.subr.mxu0 0.0
    %207 = vmatpush2.msra.mxu0 0.0
    %208 = vmatprep.subr.mxu0 0.0
    %209 = vmatpush2.msra.mxu0 0.0
    %210 = vmatprep.subr.mxu0 0.0
    %211 = vmatpush2.msra.mxu0 0.0
    %212 = vmatprep.subr.mxu0 0.0
    %213 = vmatpush2.msra.mxu0 0.0
    %214 = vmatprep.subr.mxu0 0.0
    %215 = vmatpush2.msra.mxu0 0.0
    %216 = vmatprep.subr.mxu0 0.0
    %217 = vmatpush2.msra.mxu0 0.0
    %218 = vmatprep.subr.mxu0 0.0
    %219 = vmatpush2.msra.mxu0 0.0
    %220 = vmatprep.subr.mxu0 0.0
    %221 = vmatpush2.msra.mxu0 0.0
    %222 = vmatprep.subr.mxu0 0.0
    %223 = vmatpush2.msra.mxu0 0.0
    %224 = vmatprep.subr.mxu0 0.0
    %225 = vmatpush2.msra.mxu0 0.0
    %226 = vmatprep.subr.mxu0 0.0
    %227 = vmatpush2.msra.mxu0 0.0
    %228 = vmatprep.subr.mxu0 0.0
    %229 = vmatpush2.msra.mxu0 0.0
    %230 = vmatprep.mubr.f32.mxu0 0.0
    %231 = vmatmul.mubr.f32.gmra.mxu0 %v164
    %v232 = vpop.f32.mrf.mxu0
    %v233 = vadd.f32 0.0, %v232
    %v234 = vpop.f32.mrf.mxu0
    %235 = vdwg.mxu0
    %v236 = vadd.f32 %v151, %v233
    %v237 = vxor.u32 %v236, 2147483648
    %v238 = vmul.f32 %v237, 1.442695
    %v239 = vpow.pop %v238
    %v240 = vadd.f32 %v239, 1.0
    %v241 = vrcp.pop %v240
    %v242 = vmul.f32 1.0, %v241
    %v243 = vtanh.pop %v236
    %v244 = vmul.f32 %v242, 0.0
    %246 = vrot.lane.b32.xlu0 %v243, 32
    %v247 = vpop.permute.xlu0 %246
    %v249 = vmul.f32 %v242, %v247
    %251 = vrot.lane.b32.xlu0 %v249, 32
    %v252 = vpop.permute.xlu0 %251
    %v254 = vadd.f32 %v244, %v252
    %v255 = vtanh.pop %v254
    %257 = vrot.lane.b32.xlu0 %v255, 32
    %v258 = vpop.permute.xlu0 %257
    %v260 = vmul.f32 %v242, %v258
    %262 = vrot.lane.b32.xlu0 %v260, 64
    %v263 = vpop.permute.xlu0 %262
    %265 = vrot.lane.b32.xlu0 %v260, 96
    %v266 = vpop.permute.xlu0 %265
    %v268 = vsel %vm25, %v263, %v266
    %v269 = vmul.f32 %v268, %v32
    %vm270 = vcmask 254976
    %271 = vst.msk [vmem:[#allocation2] sm:$0x3] %vm270, %v263
    %vm272 = vcmask 779776
    %273 = vst.msk [vmem:[#allocation2 + $0x1e] sm:$0x3] %vm272, %v260
    %vm274 = vcmask 519426
    %275 = vst.msk [vmem:[#allocation2 + $0x1a] sm:$0xc] %vm274, %v266
    %276 = vrot.lane.b32.xlu0 %v260, 32
    %v277 = vpop.permute.xlu0 %276
    %vm279 = vcmask 1044226
    %280 = vst.msk [vmem:[#allocation2] sm:$0xc] %vm279, %v277
    %v282 = vsel %vm162, %v269, 0
    %284 = vmatprep.subr.mxu0 0.0
    %285 = vmatpush1.msra.mxu0 0.0
    %286 = vmatprep.subr.mxu0 0.0
    %287 = vmatpush1.msra.mxu0 0.0
    %288 = vmatprep.subr.mxu0 0.0
    %289 = vmatpush1.msra.mxu0 0.0
    %290 = vmatprep.subr.mxu0 0.0
    %291 = vmatpush1.msra.mxu0 0.0
    %292 = vmatprep.subr.mxu0 0.0
    %293 = vmatpush1.msra.mxu0 0.0
    %294 = vmatprep.subr.mxu0 0.0
    %295 = vmatpush1.msra.mxu0 0.0
    %296 = vmatprep.subr.mxu0 0.0
    %297 = vmatpush1.msra.mxu0 0.0
    %298 = vmatprep.subr.mxu0 0.0
    %299 = vmatpush1.msra.mxu0 0.0
    %300 = vmatprep.subr.mxu0 0.0
    %301 = vmatpush1.msra.mxu0 %v48
    %302 = vmatprep.subr.mxu0 0.0
    %303 = vmatpush1.msra.mxu0 %v47
    %304 = vmatprep.subr.mxu0 0.0
    %305 = vmatpush1.msra.mxu0 %v46
    %306 = vmatprep.subr.mxu0 0.0
    %307 = vmatpush1.msra.mxu0 %v45
    %308 = vmatprep.subr.mxu0 0.0
    %309 = vmatpush1.msra.mxu0 %v44
    %310 = vmatprep.subr.mxu0 0.0
    %311 = vmatpush1.msra.mxu0 %v43
    %312 = vmatprep.subr.mxu0 0.0
    %313 = vmatpush1.msra.mxu0 %v42
    %314 = vmatprep.subr.mxu0 0.0
    %315 = vmatpush1.msra.mxu0 %v41
    %316 = vmatprep.subr.mxu0 0.0
    %317 = vmatpush2.msra.mxu0 0.0
    %318 = vmatprep.subr.mxu0 0.0
    %319 = vmatpush2.msra.mxu0 0.0
    %320 = vmatprep.subr.mxu0 0.0
    %321 = vmatpush2.msra.mxu0 0.0
    %322 = vmatprep.subr.mxu0 0.0
    %323 = vmatpush2.msra.mxu0 0.0
    %324 = vmatprep.subr.mxu0 0.0
    %325 = vmatpush2.msra.mxu0 0.0
    %326 = vmatprep.subr.mxu0 0.0
    %327 = vmatpush2.msra.mxu0 0.0
    %328 = vmatprep.subr.mxu0 0.0
    %329 = vmatpush2.msra.mxu0 0.0
    %330 = vmatprep.subr.mxu0 0.0
    %331 = vmatpush2.msra.mxu0 0.0
    %332 = vmatprep.subr.mxu0 0.0
    %333 = vmatpush2.msra.mxu0 0.0
    %334 = vmatprep.subr.mxu0 0.0
    %335 = vmatpush2.msra.mxu0 0.0
    %336 = vmatprep.subr.mxu0 0.0
    %337 = vmatpush2.msra.mxu0 0.0
    %338 = vmatprep.subr.mxu0 0.0
    %339 = vmatpush2.msra.mxu0 0.0
    %340 = vmatprep.subr.mxu0 0.0
    %341 = vmatpush2.msra.mxu0 0.0
    %342 = vmatprep.subr.mxu0 0.0
    %343 = vmatpush2.msra.mxu0 0.0
    %344 = vmatprep.subr.mxu0 0.0
    %345 = vmatpush2.msra.mxu0 0.0
    %346 = vmatprep.subr.mxu0 0.0
    %347 = vmatpush2.msra.mxu0 0.0
    %348 = vmatprep.mubr.f32.mxu0 0.0
    %349 = vmatmul.mubr.f32.gmra.mxu0 %v282
    %v350 = vpop.f32.mrf.mxu0
    %v351 = vadd.f32 0.0, %v350
    %v352 = vpop.f32.mrf.mxu0
    %353 = vdwg.mxu0
    %v355 = vrot.slane %v351, 4
    %v357 = vadd.f32 %v155, %v355
    %v358 = vxor.u32 %v357, 2147483648
    %v359 = vmul.f32 %v358, 1.442695
    %v360 = vpow.pop %v359
    %v361 = vadd.f32 %v360, 1.0
    %v362 = vrcp.pop %v361
    %v363 = vmul.f32 1.0, %v362
    %v364 = vtanh.pop %v357
    %v366 = vrot.slane %v254, 4
    %v368 = vmul.f32 %v363, %v366
    %370 = vrot.lane.b32.xlu0 %v364, 32
    %v371 = vpop.permute.xlu0 %370
    %v373 = vmul.f32 %v363, %v371
    %375 = vrot.lane.b32.xlu0 %v373, 32
    %v376 = vpop.permute.xlu0 %375
    %v378 = vadd.f32 %v368, %v376
    %v379 = vtanh.pop %v378
    %381 = vrot.lane.b32.xlu0 %v379, 32
    %v382 = vpop.permute.xlu0 %381
    %v384 = vmul.f32 %v363, %v382
    %386 = vrot.lane.b32.xlu0 %v384, 64
    %v387 = vpop.permute.xlu0 %386
    %389 = vrot.lane.b32.xlu0 %v384, 96
    %v390 = vpop.permute.xlu0 %389
    %v392 = vsel %vm25, %v387, %v390
    %v394 = vrot.slane %v32, 4
    %v396 = vmul.f32 %v392, %v394
    %vm397 = vcmask 259076
    %398 = vst.msk [vmem:[#allocation2] sm:$0x30] %vm397, %v387
    %vm399 = vcmask 783876
    %400 = vst.msk [vmem:[#allocation2 + $0x16] sm:$0x30] %vm399, %v384
    %vm401 = vcmask 523526
    %402 = vst.msk [vmem:[#allocation2 + $0x12] sm:$0xc0] %vm401, %v390
    %403 = vrot.lane.b32.xlu0 %v384, 32
    %v404 = vpop.permute.xlu0 %403
    %vm406 = vcmask 1048326
    %407 = vst.msk [vmem:[#allocation2] sm:$0xc0] %vm406, %v404
    %v409 = vrot.slane %v396, 4
    %v410 = vsel %vm162, %v409, 0
    %412 = vmatprep.subr.mxu0 0.0
    %413 = vmatpush1.msra.mxu0 0.0
    %414 = vmatprep.subr.mxu0 0.0
    %415 = vmatpush1.msra.mxu0 0.0
    %416 = vmatprep.subr.mxu0 0.0
    %417 = vmatpush1.msra.mxu0 0.0
    %418 = vmatprep.subr.mxu0 0.0
    %419 = vmatpush1.msra.mxu0 0.0
    %420 = vmatprep.subr.mxu0 0.0
    %421 = vmatpush1.msra.mxu0 0.0
    %422 = vmatprep.subr.mxu0 0.0
    %423 = vmatpush1.msra.mxu0 0.0
    %424 = vmatprep.subr.mxu0 0.0
    %425 = vmatpush1.msra.mxu0 0.0
    %426 = vmatprep.subr.mxu0 0.0
    %427 = vmatpush1.msra.mxu0 0.0
    %428 = vmatprep.subr.mxu0 0.0
    %429 = vmatpush1.msra.mxu0 %v48
    %430 = vmatprep.subr.mxu0 0.0
    %431 = vmatpush1.msra.mxu0 %v47
    %432 = vmatprep.subr.mxu0 0.0
    %433 = vmatpush1.msra.mxu0 %v46
    %434 = vmatprep.subr.mxu0 0.0
    %435 = vmatpush1.msra.mxu0 %v45
    %436 = vmatprep.subr.mxu0 0.0
    %437 = vmatpush1.msra.mxu0 %v44
    %438 = vmatprep.subr.mxu0 0.0
    %439 = vmatpush1.msra.mxu0 %v43
    %440 = vmatprep.subr.mxu0 0.0
    %441 = vmatpush1.msra.mxu0 %v42
    %442 = vmatprep.subr.mxu0 0.0
    %443 = vmatpush1.msra.mxu0 %v41
    %444 = vmatprep.subr.mxu0 0.0
    %445 = vmatpush2.msra.mxu0 0.0
    %446 = vmatprep.subr.mxu0 0.0
    %447 = vmatpush2.msra.mxu0 0.0
    %448 = vmatprep.subr.mxu0 0.0
    %449 = vmatpush2.msra.mxu0 0.0
    %450 = vmatprep.subr.mxu0 0.0
    %451 = vmatpush2.msra.mxu0 0.0
    %452 = vmatprep.subr.mxu0 0.0
    %453 = vmatpush2.msra.mxu0 0.0
    %454 = vmatprep.subr.mxu0 0.0
    %455 = vmatpush2.msra.mxu0 0.0
    %456 = vmatprep.subr.mxu0 0.0
    %457 = vmatpush2.msra.mxu0 0.0
    %458 = vmatprep.subr.mxu0 0.0
    %459 = vmatpush2.msra.mxu0 0.0
    %460 = vmatprep.subr.mxu0 0.0
    %461 = vmatpush2.msra.mxu0 0.0
    %462 = vmatprep.subr.mxu0 0.0
    %463 = vmatpush2.msra.mxu0 0.0
    %464 = vmatprep.subr.mxu0 0.0
    %465 = vmatpush2.msra.mxu0 0.0
    %466 = vmatprep.subr.mxu0 0.0
    %467 = vmatpush2.msra.mxu0 0.0
    %468 = vmatprep.subr.mxu0 0.0
    %469 = vmatpush2.msra.mxu0 0.0
    %470 = vmatprep.subr.mxu0 0.0
    %471 = vmatpush2.msra.mxu0 0.0
    %472 = vmatprep.subr.mxu0 0.0
    %473 = vmatpush2.msra.mxu0 0.0
    %474 = vmatprep.subr.mxu0 0.0
    %475 = vmatpush2.msra.mxu0 0.0
    %476 = vmatprep.mubr.f32.mxu0 0.0
    %477 = vmatmul.mubr.f32.gmra.mxu0 %v410
    %v478 = vpop.f32.mrf.mxu0
    %v479 = vadd.f32 0.0, %v478
    %v480 = vpop.f32.mrf.mxu0
    %481 = vdwg.mxu0
    %v482 = vadd.f32 %v156, %v479
    %v483 = vxor.u32 %v482, 2147483648
    %v484 = vmul.f32 %v483, 1.442695
    %v485 = vpow.pop %v484
    %v486 = vadd.f32 %v485, 1.0
    %v487 = vrcp.pop %v486
    %v488 = vmul.f32 1.0, %v487
    %v489 = vtanh.pop %v482
    %v491 = vrot.slane %v378, 4
    %v493 = vmul.f32 %v488, %v491
    %495 = vrot.lane.b32.xlu0 %v489, 32
    %v496 = vpop.permute.xlu0 %495
    %v498 = vmul.f32 %v488, %v496
    %500 = vrot.lane.b32.xlu0 %v498, 32
    %v501 = vpop.permute.xlu0 %500
    %v503 = vadd.f32 %v493, %v501
    %v504 = vtanh.pop %v503
    %506 = vrot.lane.b32.xlu0 %v504, 32
    %v507 = vpop.permute.xlu0 %506
    %v509 = vmul.f32 %v488, %v507
    %511 = vrot.lane.b32.xlu0 %v509, 64
    %v512 = vpop.permute.xlu0 %511
    %514 = vrot.lane.b32.xlu0 %v509, 96
    %v515 = vpop.permute.xlu0 %514
    %v517 = vsel %vm25, %v512, %v515
    %v518 = vmul.f32 %v517, %v32
    %519 = vst.msk [vmem:[#allocation2 + $0x8] sm:$0x3] %vm270, %v512
    %520 = vst.msk [vmem:[#allocation2 + $0x16] sm:$0x3] %vm272, %v509
    %521 = vst.msk [vmem:[#allocation2 + $0x12] sm:$0xc] %vm274, %v515
    %522 = vrot.lane.b32.xlu0 %v509, 32
    %v523 = vpop.permute.xlu0 %522
    %525 = vst.msk [vmem:[#allocation2 + $0x8] sm:$0xc] %vm279, %v523
    %v527 = vsel %vm162, %v518, 0
    %529 = vmatprep.subr.mxu0 0.0
    %530 = vmatpush1.msra.mxu0 0.0
    %531 = vmatprep.subr.mxu0 0.0
    %532 = vmatpush1.msra.mxu0 0.0
    %533 = vmatprep.subr.mxu0 0.0
    %534 = vmatpush1.msra.mxu0 0.0
    %535 = vmatprep.subr.mxu0 0.0
    %536 = vmatpush1.msra.mxu0 0.0
    %537 = vmatprep.subr.mxu0 0.0
    %538 = vmatpush1.msra.mxu0 0.0
    %539 = vmatprep.subr.mxu0 0.0
    %540 = vmatpush1.msra.mxu0 0.0
    %541 = vmatprep.subr.mxu0 0.0
    %542 = vmatpush1.msra.mxu0 0.0
    %543 = vmatprep.subr.mxu0 0.0
    %544 = vmatpush1.msra.mxu0 0.0
    %545 = vmatprep.subr.mxu0 0.0
    %546 = vmatpush1.msra.mxu0 %v48
    %547 = vmatprep.subr.mxu0 0.0
    %548 = vmatpush1.msra.mxu0 %v47
    %549 = vmatprep.subr.mxu0 0.0
    %550 = vmatpush1.msra.mxu0 %v46
    %551 = vmatprep.subr.mxu0 0.0
    %552 = vmatpush1.msra.mxu0 %v45
    %553 = vmatprep.subr.mxu0 0.0
    %554 = vmatpush1.msra.mxu0 %v44
    %555 = vmatprep.subr.mxu0 0.0
    %556 = vmatpush1.msra.mxu0 %v43
    %557 = vmatprep.subr.mxu0 0.0
    %558 = vmatpush1.msra.mxu0 %v42
    %559 = vmatprep.subr.mxu0 0.0
    %560 = vmatpush1.msra.mxu0 %v41
    %561 = vmatprep.subr.mxu0 0.0
    %562 = vmatpush2.msra.mxu0 0.0
    %563 = vmatprep.subr.mxu0 0.0
    %564 = vmatpush2.msra.mxu0 0.0
    %565 = vmatprep.subr.mxu0 0.0
    %566 = vmatpush2.msra.mxu0 0.0
    %567 = vmatprep.subr.mxu0 0.0
    %568 = vmatpush2.msra.mxu0 0.0
    %569 = vmatprep.subr.mxu0 0.0
    %570 = vmatpush2.msra.mxu0 0.0
    %571 = vmatprep.subr.mxu0 0.0
    %572 = vmatpush2.msra.mxu0 0.0
    %573 = vmatprep.subr.mxu0 0.0
    %574 = vmatpush2.msra.mxu0 0.0
    %575 = vmatprep.subr.mxu0 0.0
    %576 = vmatpush2.msra.mxu0 0.0
    %577 = vmatprep.subr.mxu0 0.0
    %578 = vmatpush2.msra.mxu0 0.0
    %579 = vmatprep.subr.mxu0 0.0
    %580 = vmatpush2.msra.mxu0 0.0
    %581 = vmatprep.subr.mxu0 0.0
    %582 = vmatpush2.msra.mxu0 0.0
    %583 = vmatprep.subr.mxu0 0.0
    %584 = vmatpush2.msra.mxu0 0.0
    %585 = vmatprep.subr.mxu0 0.0
    %586 = vmatpush2.msra.mxu0 0.0
    %587 = vmatprep.subr.mxu0 0.0
    %588 = vmatpush2.msra.mxu0 0.0
    %589 = vmatprep.subr.mxu0 0.0
    %590 = vmatpush2.msra.mxu0 0.0
    %591 = vmatprep.subr.mxu0 0.0
    %592 = vmatpush2.msra.mxu0 0.0
    %593 = vmatprep.mubr.f32.mxu0 0.0
    %594 = vmatmul.mubr.f32.gmra.mxu0 %v527
    %v595 = vpop.f32.mrf.mxu0
    %v596 = vadd.f32 0.0, %v595
    %v597 = vpop.f32.mrf.mxu0
    %598 = vdwg.mxu0
    %v600 = vrot.slane %v596, 4
    %v602 = vadd.f32 %v157, %v600
    %v603 = vxor.u32 %v602, 2147483648
    %v604 = vmul.f32 %v603, 1.442695
    %v605 = vpow.pop %v604
    %v606 = vadd.f32 %v605, 1.0
    %v607 = vrcp.pop %v606
    %v608 = vmul.f32 1.0, %v607
    %v609 = vtanh.pop %v602
    %v611 = vrot.slane %v503, 4
    %v613 = vmul.f32 %v608, %v611
    %615 = vrot.lane.b32.xlu0 %v609, 32
    %v616 = vpop.permute.xlu0 %615
    %v618 = vmul.f32 %v608, %v616
    %620 = vrot.lane.b32.xlu0 %v618, 32
    %v621 = vpop.permute.xlu0 %620
    %v623 = vadd.f32 %v613, %v621
    %v624 = vtanh.pop %v623
    %626 = vrot.lane.b32.xlu0 %v624, 32
    %v627 = vpop.permute.xlu0 %626
    %v629 = vmul.f32 %v608, %v627
    %631 = vrot.lane.b32.xlu0 %v629, 64
    %v632 = vpop.permute.xlu0 %631
    %634 = vrot.lane.b32.xlu0 %v629, 96
    %v635 = vpop.permute.xlu0 %634
    %v637 = vsel %vm25, %v632, %v635
    %v638 = vmul.f32 %v637, %v394
    %639 = vst.msk [vmem:[#allocation2 + $0x8] sm:$0x30] %vm397, %v632
    %640 = vst.msk [vmem:[#allocation2 + $0xe] sm:$0x30] %vm399, %v629
    %641 = vst.msk [vmem:[#allocation2 + $0xa] sm:$0xc0] %vm401, %v635
    %642 = vrot.lane.b32.xlu0 %v629, 32
    %v643 = vpop.permute.xlu0 %642
    %645 = vst.msk [vmem:[#allocation2 + $0x8] sm:$0xc0] %vm406, %v643
    %v647 = vrot.slane %v638, 4
    %v648 = vsel %vm162, %v647, 0
    %650 = vmatprep.subr.mxu0 0.0
    %651 = vmatpush1.msra.mxu0 0.0
    %652 = vmatprep.subr.mxu0 0.0
    %653 = vmatpush1.msra.mxu0 0.0
    %654 = vmatprep.subr.mxu0 0.0
    %655 = vmatpush1.msra.mxu0 0.0
    %656 = vmatprep.subr.mxu0 0.0
    %657 = vmatpush1.msra.mxu0 0.0
    %658 = vmatprep.subr.mxu0 0.0
    %659 = vmatpush1.msra.mxu0 0.0
    %660 = vmatprep.subr.mxu0 0.0
    %661 = vmatpush1.msra.mxu0 0.0
    %662 = vmatprep.subr.mxu0 0.0
    %663 = vmatpush1.msra.mxu0 0.0
    %664 = vmatprep.subr.mxu0 0.0
    %665 = vmatpush1.msra.mxu0 0.0
    %666 = vmatprep.subr.mxu0 0.0
    %667 = vmatpush1.msra.mxu0 %v48
    %668 = vmatprep.subr.mxu0 0.0
    %669 = vmatpush1.msra.mxu0 %v47
    %670 = vmatprep.subr.mxu0 0.0
    %671 = vmatpush1.msra.mxu0 %v46
    %672 = vmatprep.subr.mxu0 0.0
    %673 = vmatpush1.msra.mxu0 %v45
    %674 = vmatprep.subr.mxu0 0.0
    %675 = vmatpush1.msra.mxu0 %v44
    %676 = vmatprep.subr.mxu0 0.0
    %677 = vmatpush1.msra.mxu0 %v43
    %678 = vmatprep.subr.mxu0 0.0
    %679 = vmatpush1.msra.mxu0 %v42
    %680 = vmatprep.subr.mxu0 0.0
    %681 = vmatpush1.msra.mxu0 %v41
    %682 = vmatprep.subr.mxu0 0.0
    %683 = vmatpush2.msra.mxu0 0.0
    %684 = vmatprep.subr.mxu0 0.0
    %685 = vmatpush2.msra.mxu0 0.0
    %686 = vmatprep.subr.mxu0 0.0
    %687 = vmatpush2.msra.mxu0 0.0
    %688 = vmatprep.subr.mxu0 0.0
    %689 = vmatpush2.msra.mxu0 0.0
    %690 = vmatprep.subr.mxu0 0.0
    %691 = vmatpush2.msra.mxu0 0.0
    %692 = vmatprep.subr.mxu0 0.0
    %693 = vmatpush2.msra.mxu0 0.0
    %694 = vmatprep.subr.mxu0 0.0
    %695 = vmatpush2.msra.mxu0 0.0
    %696 = vmatprep.subr.mxu0 0.0
    %697 = vmatpush2.msra.mxu0 0.0
    %698 = vmatprep.subr.mxu0 0.0
    %699 = vmatpush2.msra.mxu0 0.0
    %700 = vmatprep.subr.mxu0 0.0
    %701 = vmatpush2.msra.mxu0 0.0
    %702 = vmatprep.subr.mxu0 0.0
    %703 = vmatpush2.msra.mxu0 0.0
    %704 = vmatprep.subr.mxu0 0.0
    %705 = vmatpush2.msra.mxu0 0.0
    %706 = vmatprep.subr.mxu0 0.0
    %707 = vmatpush2.msra.mxu0 0.0
    %708 = vmatprep.subr.mxu0 0.0
    %709 = vmatpush2.msra.mxu0 0.0
    %710 = vmatprep.subr.mxu0 0.0
    %711 = vmatpush2.msra.mxu0 0.0
    %712 = vmatprep.subr.mxu0 0.0
    %713 = vmatpush2.msra.mxu0 0.0
    %714 = vmatprep.mubr.f32.mxu0 0.0
    %715 = vmatmul.mubr.f32.gmra.mxu0 %v648
    %v716 = vpop.f32.mrf.mxu0
    %v717 = vadd.f32 0.0, %v716
    %v718 = vpop.f32.mrf.mxu0
    %719 = vdwg.mxu0
    %v720 = vadd.f32 %v158, %v717
    %v721 = vxor.u32 %v720, 2147483648
    %v722 = vmul.f32 %v721, 1.442695
    %v723 = vpow.pop %v722
    %v724 = vadd.f32 %v723, 1.0
    %v725 = vrcp.pop %v724
    %v726 = vmul.f32 1.0, %v725
    %v727 = vtanh.pop %v720
    %v729 = vrot.slane %v623, 4
    %v731 = vmul.f32 %v726, %v729
    %733 = vrot.lane.b32.xlu0 %v727, 32
    %v734 = vpop.permute.xlu0 %733
    %v736 = vmul.f32 %v726, %v734
    %738 = vrot.lane.b32.xlu0 %v736, 32
    %v739 = vpop.permute.xlu0 %738
    %v741 = vadd.f32 %v731, %v739
    %v742 = vtanh.pop %v741
    %744 = vrot.lane.b32.xlu0 %v742, 32
    %v745 = vpop.permute.xlu0 %744
    %v747 = vmul.f32 %v726, %v745
    %749 = vrot.lane.b32.xlu0 %v747, 64
    %v750 = vpop.permute.xlu0 %749
    %752 = vrot.lane.b32.xlu0 %v747, 96
    %v753 = vpop.permute.xlu0 %752
    %v755 = vsel %vm25, %v750, %v753
    %v756 = vmul.f32 %v755, %v32
    %757 = vst.msk [vmem:[#allocation2 + $0x10] sm:$0x3] %vm270, %v750
    %758 = vst.msk [vmem:[#allocation2 + $0xe] sm:$0x3] %vm272, %v747
    %759 = vst.msk [vmem:[#allocation2 + $0xa] sm:$0xc] %vm274, %v753
    %760 = vrot.lane.b32.xlu0 %v747, 32
    %v761 = vpop.permute.xlu0 %760
    %763 = vst.msk [vmem:[#allocation2 + $0x10] sm:$0xc] %vm279, %v761
    %v765 = vsel %vm162, %v756, 0
    %767 = vmatprep.subr.mxu0 0.0
    %768 = vmatpush1.msra.mxu0 0.0
    %769 = vmatprep.subr.mxu0 0.0
    %770 = vmatpush1.msra.mxu0 0.0
    %771 = vmatprep.subr.mxu0 0.0
    %772 = vmatpush1.msra.mxu0 0.0
    %773 = vmatprep.subr.mxu0 0.0
    %774 = vmatpush1.msra.mxu0 0.0
    %775 = vmatprep.subr.mxu0 0.0
    %776 = vmatpush1.msra.mxu0 0.0
    %777 = vmatprep.subr.mxu0 0.0
    %778 = vmatpush1.msra.mxu0 0.0
    %779 = vmatprep.subr.mxu0 0.0
    %780 = vmatpush1.msra.mxu0 0.0
    %781 = vmatprep.subr.mxu0 0.0
    %782 = vmatpush1.msra.mxu0 0.0
    %783 = vmatprep.subr.mxu0 0.0
    %784 = vmatpush1.msra.mxu0 %v48
    %785 = vmatprep.subr.mxu0 0.0
    %786 = vmatpush1.msra.mxu0 %v47
    %787 = vmatprep.subr.mxu0 0.0
    %788 = vmatpush1.msra.mxu0 %v46
    %789 = vmatprep.subr.mxu0 0.0
    %790 = vmatpush1.msra.mxu0 %v45
    %791 = vmatprep.subr.mxu0 0.0
    %792 = vmatpush1.msra.mxu0 %v44
    %793 = vmatprep.subr.mxu0 0.0
    %794 = vmatpush1.msra.mxu0 %v43
    %795 = vmatprep.subr.mxu0 0.0
    %796 = vmatpush1.msra.mxu0 %v42
    %797 = vmatprep.subr.mxu0 0.0
    %798 = vmatpush1.msra.mxu0 %v41
    %799 = vmatprep.subr.mxu0 0.0
    %800 = vmatpush2.msra.mxu0 0.0
    %801 = vmatprep.subr.mxu0 0.0
    %802 = vmatpush2.msra.mxu0 0.0
    %803 = vmatprep.subr.mxu0 0.0
    %804 = vmatpush2.msra.mxu0 0.0
    %805 = vmatprep.subr.mxu0 0.0
    %806 = vmatpush2.msra.mxu0 0.0
    %807 = vmatprep.subr.mxu0 0.0
    %808 = vmatpush2.msra.mxu0 0.0
    %809 = vmatprep.subr.mxu0 0.0
    %810 = vmatpush2.msra.mxu0 0.0
    %811 = vmatprep.subr.mxu0 0.0
    %812 = vmatpush2.msra.mxu0 0.0
    %813 = vmatprep.subr.mxu0 0.0
    %814 = vmatpush2.msra.mxu0 0.0
    %815 = vmatprep.subr.mxu0 0.0
    %816 = vmatpush2.msra.mxu0 0.0
    %817 = vmatprep.subr.mxu0 0.0
    %818 = vmatpush2.msra.mxu0 0.0
    %819 = vmatprep.subr.mxu0 0.0
    %820 = vmatpush2.msra.mxu0 0.0
    %821 = vmatprep.subr.mxu0 0.0
    %822 = vmatpush2.msra.mxu0 0.0
    %823 = vmatprep.subr.mxu0 0.0
    %824 = vmatpush2.msra.mxu0 0.0
    %825 = vmatprep.subr.mxu0 0.0
    %826 = vmatpush2.msra.mxu0 0.0
    %827 = vmatprep.subr.mxu0 0.0
    %828 = vmatpush2.msra.mxu0 0.0
    %829 = vmatprep.subr.mxu0 0.0
    %830 = vmatpush2.msra.mxu0 0.0
    %831 = vmatprep.mubr.f32.mxu0 0.0
    %832 = vmatmul.mubr.f32.gmra.mxu0 %v765
    %v833 = vpop.f32.mrf.mxu0
    %v834 = vadd.f32 0.0, %v833
    %v835 = vpop.f32.mrf.mxu0
    %836 = vdwg.mxu0
    %v838 = vrot.slane %v834, 4
    %v840 = vadd.f32 %v159, %v838
    %v841 = vxor.u32 %v840, 2147483648
    %v842 = vmul.f32 %v841, 1.442695
    %v843 = vpow.pop %v842
    %v844 = vadd.f32 %v843, 1.0
    %v845 = vrcp.pop %v844
    %v846 = vmul.f32 1.0, %v845
    %v847 = vtanh.pop %v840
    %v849 = vrot.slane %v741, 4
    %v851 = vmul.f32 %v846, %v849
    %853 = vrot.lane.b32.xlu0 %v847, 32
    %v854 = vpop.permute.xlu0 %853
    %v856 = vmul.f32 %v846, %v854
    %858 = vrot.lane.b32.xlu0 %v856, 32
    %v859 = vpop.permute.xlu0 %858
    %v861 = vadd.f32 %v851, %v859
    %v862 = vtanh.pop %v861
    %864 = vrot.lane.b32.xlu0 %v862, 32
    %v865 = vpop.permute.xlu0 %864
    %v867 = vmul.f32 %v846, %v865
    %869 = vrot.lane.b32.xlu0 %v867, 64
    %v870 = vpop.permute.xlu0 %869
    %872 = vrot.lane.b32.xlu0 %v867, 96
    %v873 = vpop.permute.xlu0 %872
    %v875 = vsel %vm25, %v870, %v873
    %v876 = vmul.f32 %v875, %v394
    %877 = vst.msk [vmem:[#allocation2 + $0x10] sm:$0x30] %vm397, %v870
    %878 = vst.msk [vmem:[#allocation2 + $0x6] sm:$0x30] %vm399, %v867
    %879 = vst.msk [vmem:[#allocation2 + $0x2] sm:$0xc0] %vm401, %v873
    %880 = vrot.lane.b32.xlu0 %v867, 32
    %v881 = vpop.permute.xlu0 %880
    %883 = vst.msk [vmem:[#allocation2 + $0x10] sm:$0xc0] %vm406, %v881
    %v885 = vrot.slane %v876, 4
    %v886 = vsel %vm162, %v885, 0
    %888 = vmatprep.subr.mxu0 0.0
    %889 = vmatpush1.msra.mxu0 0.0
    %890 = vmatprep.subr.mxu0 0.0
    %891 = vmatpush1.msra.mxu0 0.0
    %892 = vmatprep.subr.mxu0 0.0
    %893 = vmatpush1.msra.mxu0 0.0
    %894 = vmatprep.subr.mxu0 0.0
    %895 = vmatpush1.msra.mxu0 0.0
    %896 = vmatprep.subr.mxu0 0.0
    %897 = vmatpush1.msra.mxu0 0.0
    %898 = vmatprep.subr.mxu0 0.0
    %899 = vmatpush1.msra.mxu0 0.0
    %900 = vmatprep.subr.mxu0 0.0
    %901 = vmatpush1.msra.mxu0 0.0
    %902 = vmatprep.subr.mxu0 0.0
    %903 = vmatpush1.msra.mxu0 0.0
    %904 = vmatprep.subr.mxu0 0.0
    %905 = vmatpush1.msra.mxu0 %v48
    %906 = vmatprep.subr.mxu0 0.0
    %907 = vmatpush1.msra.mxu0 %v47
    %908 = vmatprep.subr.mxu0 0.0
    %909 = vmatpush1.msra.mxu0 %v46
    %910 = vmatprep.subr.mxu0 0.0
    %911 = vmatpush1.msra.mxu0 %v45
    %912 = vmatprep.subr.mxu0 0.0
    %913 = vmatpush1.msra.mxu0 %v44
    %914 = vmatprep.subr.mxu0 0.0
    %915 = vmatpush1.msra.mxu0 %v43
    %916 = vmatprep.subr.mxu0 0.0
    %917 = vmatpush1.msra.mxu0 %v42
    %918 = vmatprep.subr.mxu0 0.0
    %919 = vmatpush1.msra.mxu0 %v41
    %920 = vmatprep.subr.mxu0 0.0
    %921 = vmatpush2.msra.mxu0 0.0
    %922 = vmatprep.subr.mxu0 0.0
    %923 = vmatpush2.msra.mxu0 0.0
    %924 = vmatprep.subr.mxu0 0.0
    %925 = vmatpush2.msra.mxu0 0.0
    %926 = vmatprep.subr.mxu0 0.0
    %927 = vmatpush2.msra.mxu0 0.0
    %928 = vmatprep.subr.mxu0 0.0
    %929 = vmatpush2.msra.mxu0 0.0
    %930 = vmatprep.subr.mxu0 0.0
    %931 = vmatpush2.msra.mxu0 0.0
    %932 = vmatprep.subr.mxu0 0.0
    %933 = vmatpush2.msra.mxu0 0.0
    %934 = vmatprep.subr.mxu0 0.0
    %935 = vmatpush2.msra.mxu0 0.0
    %936 = vmatprep.subr.mxu0 0.0
    %937 = vmatpush2.msra.mxu0 0.0
    %938 = vmatprep.subr.mxu0 0.0
    %939 = vmatpush2.msra.mxu0 0.0
    %940 = vmatprep.subr.mxu0 0.0
    %941 = vmatpush2.msra.mxu0 0.0
    %942 = vmatprep.subr.mxu0 0.0
    %943 = vmatpush2.msra.mxu0 0.0
    %944 = vmatprep.subr.mxu0 0.0
    %945 = vmatpush2.msra.mxu0 0.0
    %946 = vmatprep.subr.mxu0 0.0
    %947 = vmatpush2.msra.mxu0 0.0
    %948 = vmatprep.subr.mxu0 0.0
    %949 = vmatpush2.msra.mxu0 0.0
    %950 = vmatprep.subr.mxu0 0.0
    %951 = vmatpush2.msra.mxu0 0.0
    %952 = vmatprep.mubr.f32.mxu0 0.0
    %953 = vmatmul.mubr.f32.gmra.mxu0 %v886
    %v954 = vpop.f32.mrf.mxu0
    %v955 = vadd.f32 0.0, %v954
    %v956 = vpop.f32.mrf.mxu0
    %957 = vdwg.mxu0
    %v958 = vadd.f32 %v160, %v955
    %v959 = vxor.u32 %v958, 2147483648
    %v960 = vmul.f32 %v959, 1.442695
    %v961 = vpow.pop %v960
    %v962 = vadd.f32 %v961, 1.0
    %v963 = vrcp.pop %v962
    %v964 = vmul.f32 1.0, %v963
    %v965 = vtanh.pop %v958
    %v967 = vrot.slane %v861, 4
    %v969 = vmul.f32 %v964, %v967
    %971 = vrot.lane.b32.xlu0 %v965, 32
    %v972 = vpop.permute.xlu0 %971
    %v974 = vmul.f32 %v964, %v972
    %976 = vrot.lane.b32.xlu0 %v974, 32
    %v977 = vpop.permute.xlu0 %976
    %v979 = vadd.f32 %v969, %v977
    %v980 = vtanh.pop %v979
    %982 = vrot.lane.b32.xlu0 %v980, 32
    %v983 = vpop.permute.xlu0 %982
    %v985 = vmul.f32 %v964, %v983
    %987 = vrot.lane.b32.xlu0 %v985, 64
    %v988 = vpop.permute.xlu0 %987
    %990 = vrot.lane.b32.xlu0 %v985, 96
    %v991 = vpop.permute.xlu0 %990
    %v993 = vsel %vm25, %v988, %v991
    %v994 = vmul.f32 %v993, %v32
    %995 = vst.msk [vmem:[#allocation2 + $0x18] sm:$0x3] %vm270, %v988
    %996 = vst.msk [vmem:[#allocation2 + $0x6] sm:$0x3] %vm272, %v985
    %997 = vst.msk [vmem:[#allocation2 + $0x2] sm:$0xc] %vm274, %v991
    %998 = vrot.lane.b32.xlu0 %v985, 32
    %v999 = vpop.permute.xlu0 %998
    %1001 = vst.msk [vmem:[#allocation2 + $0x18] sm:$0xc] %vm279, %v999
    %v1003 = vsel %vm162, %v994, 0
    %1005 = vmatprep.subr.mxu0 0.0
    %1006 = vmatpush1.msra.mxu0 0.0
    %1007 = vmatprep.subr.mxu0 0.0
    %1008 = vmatpush1.msra.mxu0 0.0
    %1009 = vmatprep.subr.mxu0 0.0
    %1010 = vmatpush1.msra.mxu0 0.0
    %1011 = vmatprep.subr.mxu0 0.0
    %1012 = vmatpush1.msra.mxu0 0.0
    %1013 = vmatprep.subr.mxu0 0.0
    %1014 = vmatpush1.msra.mxu0 0.0
    %1015 = vmatprep.subr.mxu0 0.0
    %1016 = vmatpush1.msra.mxu0 0.0
    %1017 = vmatprep.subr.mxu0 0.0
    %1018 = vmatpush1.msra.mxu0 0.0
    %1019 = vmatprep.subr.mxu0 0.0
    %1020 = vmatpush1.msra.mxu0 0.0
    %1021 = vmatprep.subr.mxu0 0.0
    %1022 = vmatpush1.msra.mxu0 %v48
    %1023 = vmatprep.subr.mxu0 0.0
    %1024 = vmatpush1.msra.mxu0 %v47
    %1025 = vmatprep.subr.mxu0 0.0
    %1026 = vmatpush1.msra.mxu0 %v46
    %1027 = vmatprep.subr.mxu0 0.0
    %1028 = vmatpush1.msra.mxu0 %v45
    %1029 = vmatprep.subr.mxu0 0.0
    %1030 = vmatpush1.msra.mxu0 %v44
    %1031 = vmatprep.subr.mxu0 0.0
    %1032 = vmatpush1.msra.mxu0 %v43
    %1033 = vmatprep.subr.mxu0 0.0
    %1034 = vmatpush1.msra.mxu0 %v42
    %1035 = vmatprep.subr.mxu0 0.0
    %1036 = vmatpush1.msra.mxu0 %v41
    %1037 = vmatprep.subr.mxu0 0.0
    %1038 = vmatpush2.msra.mxu0 0.0
    %1039 = vmatprep.subr.mxu0 0.0
    %1040 = vmatpush2.msra.mxu0 0.0
    %1041 = vmatprep.subr.mxu0 0.0
    %1042 = vmatpush2.msra.mxu0 0.0
    %1043 = vmatprep.subr.mxu0 0.0
    %1044 = vmatpush2.msra.mxu0 0.0
    %1045 = vmatprep.subr.mxu0 0.0
    %1046 = vmatpush2.msra.mxu0 0.0
    %1047 = vmatprep.subr.mxu0 0.0
    %1048 = vmatpush2.msra.mxu0 0.0
    %1049 = vmatprep.subr.mxu0 0.0
    %1050 = vmatpush2.msra.mxu0 0.0
    %1051 = vmatprep.subr.mxu0 0.0
    %1052 = vmatpush2.msra.mxu0 0.0
    %1053 = vmatprep.subr.mxu0 0.0
    %1054 = vmatpush2.msra.mxu0 0.0
    %1055 = vmatprep.subr.mxu0 0.0
    %1056 = vmatpush2.msra.mxu0 0.0
    %1057 = vmatprep.subr.mxu0 0.0
    %1058 = vmatpush2.msra.mxu0 0.0
    %1059 = vmatprep.subr.mxu0 0.0
    %1060 = vmatpush2.msra.mxu0 0.0
    %1061 = vmatprep.subr.mxu0 0.0
    %1062 = vmatpush2.msra.mxu0 0.0
    %1063 = vmatprep.subr.mxu0 0.0
    %1064 = vmatpush2.msra.mxu0 0.0
    %1065 = vmatprep.subr.mxu0 0.0
    %1066 = vmatpush2.msra.mxu0 0.0
    %1067 = vmatprep.subr.mxu0 0.0
    %1068 = vmatpush2.msra.mxu0 0.0
    %1069 = vmatprep.mubr.f32.mxu0 0.0
    %1070 = vmatmul.mubr.f32.gmra.mxu0 %v1003
    %v1071 = vpop.f32.mrf.mxu0
    %v1072 = vadd.f32 0.0, %v1071
    %v1073 = vpop.f32.mrf.mxu0
    %1074 = vdwg.mxu0
    %v1076 = vrot.slane %v1072, 4
    %v1078 = vadd.f32 %v161, %v1076
    %v1079 = vxor.u32 %v1078, 2147483648
    %v1080 = vmul.f32 %v1079, 1.442695
    %v1081 = vpow.pop %v1080
    %v1082 = vadd.f32 %v1081, 1.0
    %v1083 = vrcp.pop %v1082
    %v1084 = vmul.f32 1.0, %v1083
    %v1085 = vtanh.pop %v1078
    %v1087 = vrot.slane %v979, 4
    %v1089 = vmul.f32 %v1084, %v1087
    %1091 = vrot.lane.b32.xlu0 %v1085, 32
    %v1092 = vpop.permute.xlu0 %1091
    %v1094 = vmul.f32 %v1084, %v1092
    %1096 = vrot.lane.b32.xlu0 %v1094, 32
    %v1097 = vpop.permute.xlu0 %1096
    %v1099 = vadd.f32 %v1089, %v1097
    %v1100 = vtanh.pop %v1099
    %1102 = vrot.lane.b32.xlu0 %v1100, 32
    %v1103 = vpop.permute.xlu0 %1102
    %v1105 = vmul.f32 %v1084, %v1103
    %1107 = vrot.lane.b32.xlu0 %v1105, 64
    %v1108 = vpop.permute.xlu0 %1107
    %1110 = vst.msk [vmem:[#allocation2 + $0x18] sm:$0x30] %vm397, %v1108
    %1111 = vst.msk [vmem:[#allocation2 - $0x2] sm:$0x30] %vm399, %v1105
    %1112 = vrot.lane.b32.xlu0 %v1105, 96
    %v1113 = vpop.permute.xlu0 %1112
    %1115 = vst.msk [vmem:[#allocation2 - $0x6] sm:$0xc0] %vm401, %v1113
    %1116 = vrot.lane.b32.xlu0 %v1105, 32
    %v1117 = vpop.permute.xlu0 %1116
    %1119 = vst.msk [vmem:[#allocation2 + $0x18] sm:$0xc0] %vm406, %v1117
    %v1120 = vld [vmem:[#allocation2] sm:$0xff]
    %v1121 = vld [vmem:[#allocation2 + $0x8] sm:$0xff]
    %v1122 = vld [vmem:[#allocation2 + $0x10] sm:$0xff]
    %v1123 = vld [vmem:[#allocation2 + $0x18] sm:$0xff]
    %v1124 = vld [vmem:[#allocation4 + $0xf0] sm:$0xff]
    %v1125 = vld [vmem:[#allocation4 + $0xf8] sm:$0xff]
    %v1126 = vld [vmem:[#allocation4 + $0x100] sm:$0xff]
    %v1127 = vld [vmem:[#allocation4 + $0x108] sm:$0xff]
    %v1128 = vld [vmem:[#allocation4 + $0x110] sm:$0xff]
    %v1129 = vld [vmem:[#allocation4 + $0x118] sm:$0xff]
    %v1130 = vld [vmem:[#allocation4 + $0x120] sm:$0xff]
    %v1131 = vld [vmem:[#allocation4 + $0x128] sm:$0xff]
    %v1132 = vld [vmem:[#allocation4 + $0xe8] sm:$0xf]
    %v1133 = vld [vmem:[#allocation4 + $0x68] sm:$0xff]
    %v1134 = vld [vmem:[#allocation4 + $0x70] sm:$0xff]
    %v1135 = vld [vmem:[#allocation4 + $0x78] sm:$0xff]
    %v1136 = vld [vmem:[#allocation4 + $0x80] sm:$0xff]
    %v1137 = vld [vmem:[#allocation4 + $0x88] sm:$0xff]
    %v1138 = vld [vmem:[#allocation4 + $0x90] sm:$0xff]
    %v1139 = vld [vmem:[#allocation4 + $0x98] sm:$0xff]
    %v1140 = vld [vmem:[#allocation4 + $0xa0] sm:$0xff]
    %v1141 = vld [vmem:[#allocation4 + $0xa8] sm:$0xff]
    %v1142 = vld [vmem:[#allocation4 + $0xb0] sm:$0xff]
    %v1143 = vld [vmem:[#allocation4 + $0xb8] sm:$0xff]
    %v1144 = vld [vmem:[#allocation4 + $0xc0] sm:$0xff]
    %v1145 = vld [vmem:[#allocation4 + $0xc8] sm:$0xff]
    %v1146 = vld [vmem:[#allocation4 + $0xd0] sm:$0xff]
    %v1147 = vld [vmem:[#allocation4 + $0xd8] sm:$0xff]
    %v1148 = vld [vmem:[#allocation4 + $0xe0] sm:$0xff]
    %1149 = vmatprep.subr.mxu0 0.0
    %1150 = vmatpush1.msra.mxu0 %v1148
    %1151 = vmatprep.subr.mxu0 0.0
    %1152 = vmatpush1.msra.mxu0 %v1147
    %1153 = vmatprep.subr.mxu0 0.0
    %1154 = vmatpush1.msra.mxu0 %v1146
    %1155 = vmatprep.subr.mxu0 0.0
    %1156 = vmatpush1.msra.mxu0 %v1145
    %1157 = vmatprep.subr.mxu0 0.0
    %1158 = vmatpush1.msra.mxu0 %v1144
    %1159 = vmatprep.subr.mxu0 0.0
    %1160 = vmatpush1.msra.mxu0 %v1143
    %1161 = vmatprep.subr.mxu0 0.0
    %1162 = vmatpush1.msra.mxu0 %v1142
    %1163 = vmatprep.subr.mxu0 0.0
    %1164 = vmatpush1.msra.mxu0 %v1141
    %1165 = vmatprep.subr.mxu0 0.0
    %1166 = vmatpush1.msra.mxu0 %v1140
    %1167 = vmatprep.subr.mxu0 0.0
    %1168 = vmatpush1.msra.mxu0 %v1139
    %1169 = vmatprep.subr.mxu0 0.0
    %1170 = vmatpush1.msra.mxu0 %v1138
    %1171 = vmatprep.subr.mxu0 0.0
    %1172 = vmatpush1.msra.mxu0 %v1137
    %1173 = vmatprep.subr.mxu0 0.0
    %1174 = vmatpush1.msra.mxu0 %v1136
    %1175 = vmatprep.subr.mxu0 0.0
    %1176 = vmatpush1.msra.mxu0 %v1135
    %1177 = vmatprep.subr.mxu0 0.0
    %1178 = vmatpush1.msra.mxu0 %v1134
    %1179 = vmatprep.subr.mxu0 0.0
    %1180 = vmatpush1.msra.mxu0 %v1133
    %1181 = vmatprep.subr.mxu0 0.0
    %1182 = vmatpush2.msra.mxu0 0.0
    %1183 = vmatprep.subr.mxu0 0.0
    %1184 = vmatpush2.msra.mxu0 0.0
    %1185 = vmatprep.subr.mxu0 0.0
    %1186 = vmatpush2.msra.mxu0 0.0
    %1187 = vmatprep.subr.mxu0 0.0
    %1188 = vmatpush2.msra.mxu0 0.0
    %1189 = vmatprep.subr.mxu0 0.0
    %1190 = vmatpush2.msra.mxu0 0.0
    %1191 = vmatprep.subr.mxu0 0.0
    %1192 = vmatpush2.msra.mxu0 0.0
    %1193 = vmatprep.subr.mxu0 0.0
    %1194 = vmatpush2.msra.mxu0 0.0
    %1195 = vmatprep.subr.mxu0 0.0
    %1196 = vmatpush2.msra.mxu0 0.0
    %1197 = vmatprep.subr.mxu0 0.0
    %1198 = vmatpush2.msra.mxu0 0.0
    %1199 = vmatprep.subr.mxu0 0.0
    %1200 = vmatpush2.msra.mxu0 0.0
    %1201 = vmatprep.subr.mxu0 0.0
    %1202 = vmatpush2.msra.mxu0 0.0
    %1203 = vmatprep.subr.mxu0 0.0
    %1204 = vmatpush2.msra.mxu0 0.0
    %1205 = vmatprep.subr.mxu0 0.0
    %1206 = vmatpush2.msra.mxu0 0.0
    %1207 = vmatprep.subr.mxu0 0.0
    %1208 = vmatpush2.msra.mxu0 0.0
    %1209 = vmatprep.subr.mxu0 0.0
    %1210 = vmatpush2.msra.mxu0 0.0
    %1211 = vmatprep.subr.mxu0 0.0
    %1212 = vmatpush2.msra.mxu0 0.0
    %1213 = vmatprep.mubr.f32.mxu0 0.0
    %1214 = vmatmul.mubr.f32.gmra.mxu0 %v1120
    %v1215 = vpop.f32.mrf.mxu0
    %v1216 = vadd.f32 0.0, %v1215
    %v1217 = vpop.f32.mrf.mxu0
    %1218 = vmatprep.mubr.f32.mxu0 0.0
    %1219 = vmatmul.mubr.f32.gmra.mxu0 %v1121
    %v1220 = vpop.f32.mrf.mxu0
    %v1221 = vadd.f32 0.0, %v1220
    %v1222 = vpop.f32.mrf.mxu0
    %1223 = vmatprep.mubr.f32.mxu0 0.0
    %1224 = vmatmul.mubr.f32.gmra.mxu0 %v1122
    %v1225 = vpop.f32.mrf.mxu0
    %v1226 = vadd.f32 0.0, %v1225
    %v1227 = vpop.f32.mrf.mxu0
    %1228 = vmatprep.mubr.f32.mxu0 0.0
    %1229 = vmatmul.mubr.f32.gmra.mxu0 %v1123
    %v1230 = vpop.f32.mrf.mxu0
    %v1231 = vadd.f32 0.0, %v1230
    %v1232 = vpop.f32.mrf.mxu0
    %1233 = vdwg.mxu0
    %v1234 = vadd.f32 %v1216, %v1132
    %v1236 = vrot.slane %v1132, 4
    %v1238 = vadd.f32 %v1216, %v1236
    %v1239 = vadd.f32 %v1221, %v1132
    %v1240 = vadd.f32 %v1221, %v1236
    %v1241 = vadd.f32 %v1226, %v1132
    %v1242 = vadd.f32 %v1226, %v1236
    %v1243 = vadd.f32 %v1231, %v1132
    %v1244 = vadd.f32 %v1231, %v1236
    %1245 = vmatprep.subr.mxu0 0.0
    %1246 = vmatpush1.msra.mxu0 0.0
    %1247 = vmatprep.subr.mxu0 0.0
    %1248 = vmatpush1.msra.mxu0 0.0
    %1249 = vmatprep.subr.mxu0 0.0
    %1250 = vmatpush1.msra.mxu0 0.0
    %1251 = vmatprep.subr.mxu0 0.0
    %1252 = vmatpush1.msra.mxu0 0.0
    %1253 = vmatprep.subr.mxu0 0.0
    %1254 = vmatpush1.msra.mxu0 0.0
    %1255 = vmatprep.subr.mxu0 0.0
    %1256 = vmatpush1.msra.mxu0 0.0
    %1257 = vmatprep.subr.mxu0 0.0
    %1258 = vmatpush1.msra.mxu0 0.0
    %1259 = vmatprep.subr.mxu0 0.0
    %1260 = vmatpush1.msra.mxu0 0.0
    %1261 = vmatprep.subr.mxu0 0.0
    %1262 = vmatpush1.msra.mxu0 %v1131
    %1263 = vmatprep.subr.mxu0 0.0
    %1264 = vmatpush1.msra.mxu0 %v1130
    %1265 = vmatprep.subr.mxu0 0.0
    %1266 = vmatpush1.msra.mxu0 %v1129
    %1267 = vmatprep.subr.mxu0 0.0
    %1268 = vmatpush1.msra.mxu0 %v1128
    %1269 = vmatprep.subr.mxu0 0.0
    %1270 = vmatpush1.msra.mxu0 %v1127
    %1271 = vmatprep.subr.mxu0 0.0
    %1272 = vmatpush1.msra.mxu0 %v1126
    %1273 = vmatprep.subr.mxu0 0.0
    %1274 = vmatpush1.msra.mxu0 %v1125
    %1275 = vmatprep.subr.mxu0 0.0
    %1276 = vmatpush1.msra.mxu0 %v1124
    %1277 = vmatprep.subr.mxu0 0.0
    %1278 = vmatpush2.msra.mxu0 0.0
    %1279 = vmatprep.subr.mxu0 0.0
    %1280 = vmatpush2.msra.mxu0 0.0
    %1281 = vmatprep.subr.mxu0 0.0
    %1282 = vmatpush2.msra.mxu0 0.0
    %1283 = vmatprep.subr.mxu0 0.0
    %1284 = vmatpush2.msra.mxu0 0.0
    %1285 = vmatprep.subr.mxu0 0.0
    %1286 = vmatpush2.msra.mxu0 0.0
    %1287 = vmatprep.subr.mxu0 0.0
    %1288 = vmatpush2.msra.mxu0 0.0
    %1289 = vmatprep.subr.mxu0 0.0
    %1290 = vmatpush2.msra.mxu0 0.0
    %1291 = vmatprep.subr.mxu0 0.0
    %1292 = vmatpush2.msra.mxu0 0.0
    %1293 = vmatprep.subr.mxu0 0.0
    %1294 = vmatpush2.msra.mxu0 0.0
    %1295 = vmatprep.subr.mxu0 0.0
    %1296 = vmatpush2.msra.mxu0 0.0
    %1297 = vmatprep.subr.mxu0 0.0
    %1298 = vmatpush2.msra.mxu0 0.0
    %1299 = vmatprep.subr.mxu0 0.0
    %1300 = vmatpush2.msra.mxu0 0.0
    %1301 = vmatprep.subr.mxu0 0.0
    %1302 = vmatpush2.msra.mxu0 0.0
    %1303 = vmatprep.subr.mxu0 0.0
    %1304 = vmatpush2.msra.mxu0 0.0
    %1305 = vmatprep.subr.mxu0 0.0
    %1306 = vmatpush2.msra.mxu0 0.0
    %1307 = vmatprep.subr.mxu0 0.0
    %1308 = vmatpush2.msra.mxu0 0.0
    %1309 = vmatprep.mubr.f32.mxu0 0.0
    %1310 = vmatmul.mubr.f32.gmra.mxu0 %v164
    %v1311 = vpop.f32.mrf.mxu0
    %v1312 = vadd.f32 0.0, %v1311
    %v1313 = vpop.f32.mrf.mxu0
    %1314 = vdwg.mxu0
    %v1315 = vadd.f32 %v1234, %v1312
    %v1316 = vxor.u32 %v1315, 2147483648
    %v1317 = vmul.f32 %v1316, 1.442695
    %v1318 = vpow.pop %v1317
    %v1319 = vadd.f32 %v1318, 1.0
    %v1320 = vrcp.pop %v1319
    %v1321 = vmul.f32 1.0, %v1320
    %v1322 = vtanh.pop %v1315
    %v1323 = vmul.f32 %v1321, 0.0
    %1325 = vrot.lane.b32.xlu0 %v1322, 32
    %v1326 = vpop.permute.xlu0 %1325
    %v1328 = vmul.f32 %v1321, %v1326
    %1330 = vrot.lane.b32.xlu0 %v1328, 32
    %v1331 = vpop.permute.xlu0 %1330
    %v1333 = vadd.f32 %v1323, %v1331
    %v1334 = vtanh.pop %v1333
    %1336 = vrot.lane.b32.xlu0 %v1334, 32
    %v1337 = vpop.permute.xlu0 %1336
    %v1339 = vmul.f32 %v1321, %v1337
    %1341 = vrot.lane.b32.xlu0 %v1339, 64
    %v1342 = vpop.permute.xlu0 %1341
    %1344 = vrot.lane.b32.xlu0 %v1339, 96
    %v1345 = vpop.permute.xlu0 %1344
    %v1347 = vsel %vm25, %v1342, %v1345
    %v1348 = vmul.f32 %v1347, %v32
    %1349 = vst.msk [vmem:[#allocation3] sm:$0x3] %vm270, %v1342
    %1350 = vst.msk [vmem:[#allocation3 + $0xc] sm:$0xc] %vm274, %v1345
    %v1352 = vsel %vm162, %v1348, 0
    %1354 = vmatprep.subr.mxu0 0.0
    %1355 = vmatpush1.msra.mxu0 0.0
    %1356 = vmatprep.subr.mxu0 0.0
    %1357 = vmatpush1.msra.mxu0 0.0
    %1358 = vmatprep.subr.mxu0 0.0
    %1359 = vmatpush1.msra.mxu0 0.0
    %1360 = vmatprep.subr.mxu0 0.0
    %1361 = vmatpush1.msra.mxu0 0.0
    %1362 = vmatprep.subr.mxu0 0.0
    %1363 = vmatpush1.msra.mxu0 0.0
    %1364 = vmatprep.subr.mxu0 0.0
    %1365 = vmatpush1.msra.mxu0 0.0
    %1366 = vmatprep.subr.mxu0 0.0
    %1367 = vmatpush1.msra.mxu0 0.0
    %1368 = vmatprep.subr.mxu0 0.0
    %1369 = vmatpush1.msra.mxu0 0.0
    %1370 = vmatprep.subr.mxu0 0.0
    %1371 = vmatpush1.msra.mxu0 %v1131
    %1372 = vmatprep.subr.mxu0 0.0
    %1373 = vmatpush1.msra.mxu0 %v1130
    %1374 = vmatprep.subr.mxu0 0.0
    %1375 = vmatpush1.msra.mxu0 %v1129
    %1376 = vmatprep.subr.mxu0 0.0
    %1377 = vmatpush1.msra.mxu0 %v1128
    %1378 = vmatprep.subr.mxu0 0.0
    %1379 = vmatpush1.msra.mxu0 %v1127
    %1380 = vmatprep.subr.mxu0 0.0
    %1381 = vmatpush1.msra.mxu0 %v1126
    %1382 = vmatprep.subr.mxu0 0.0
    %1383 = vmatpush1.msra.mxu0 %v1125
    %1384 = vmatprep.subr.mxu0 0.0
    %1385 = vmatpush1.msra.mxu0 %v1124
    %1386 = vmatprep.subr.mxu0 0.0
    %1387 = vmatpush2.msra.mxu0 0.0
    %1388 = vmatprep.subr.mxu0 0.0
    %1389 = vmatpush2.msra.mxu0 0.0
    %1390 = vmatprep.subr.mxu0 0.0
    %1391 = vmatpush2.msra.mxu0 0.0
    %1392 = vmatprep.subr.mxu0 0.0
    %1393 = vmatpush2.msra.mxu0 0.0
    %1394 = vmatprep.subr.mxu0 0.0
    %1395 = vmatpush2.msra.mxu0 0.0
    %1396 = vmatprep.subr.mxu0 0.0
    %1397 = vmatpush2.msra.mxu0 0.0
    %1398 = vmatprep.subr.mxu0 0.0
    %1399 = vmatpush2.msra.mxu0 0.0
    %1400 = vmatprep.subr.mxu0 0.0
    %1401 = vmatpush2.msra.mxu0 0.0
    %1402 = vmatprep.subr.mxu0 0.0
    %1403 = vmatpush2.msra.mxu0 0.0
    %1404 = vmatprep.subr.mxu0 0.0
    %1405 = vmatpush2.msra.mxu0 0.0
    %1406 = vmatprep.subr.mxu0 0.0
    %1407 = vmatpush2.msra.mxu0 0.0
    %1408 = vmatprep.subr.mxu0 0.0
    %1409 = vmatpush2.msra.mxu0 0.0
    %1410 = vmatprep.subr.mxu0 0.0
    %1411 = vmatpush2.msra.mxu0 0.0
    %1412 = vmatprep.subr.mxu0 0.0
    %1413 = vmatpush2.msra.mxu0 0.0
    %1414 = vmatprep.subr.mxu0 0.0
    %1415 = vmatpush2.msra.mxu0 0.0
    %1416 = vmatprep.subr.mxu0 0.0
    %1417 = vmatpush2.msra.mxu0 0.0
    %1418 = vmatprep.mubr.f32.mxu0 0.0
    %1419 = vmatmul.mubr.f32.gmra.mxu0 %v1352
    %v1420 = vpop.f32.mrf.mxu0
    %v1421 = vadd.f32 0.0, %v1420
    %v1422 = vpop.f32.mrf.mxu0
    %1423 = vdwg.mxu0
    %v1425 = vrot.slane %v1421, 4
    %v1427 = vadd.f32 %v1238, %v1425
    %v1428 = vxor.u32 %v1427, 2147483648
    %v1429 = vmul.f32 %v1428, 1.442695
    %v1430 = vpow.pop %v1429
    %v1431 = vadd.f32 %v1430, 1.0
    %v1432 = vrcp.pop %v1431
    %v1433 = vmul.f32 1.0, %v1432
    %v1434 = vtanh.pop %v1427
    %v1436 = vrot.slane %v1333, 4
    %v1438 = vmul.f32 %v1433, %v1436
    %1440 = vrot.lane.b32.xlu0 %v1434, 32
    %v1441 = vpop.permute.xlu0 %1440
    %v1443 = vmul.f32 %v1433, %v1441
    %1445 = vrot.lane.b32.xlu0 %v1443, 32
    %v1446 = vpop.permute.xlu0 %1445
    %v1448 = vadd.f32 %v1438, %v1446
    %v1449 = vtanh.pop %v1448
    %1451 = vrot.lane.b32.xlu0 %v1449, 32
    %v1452 = vpop.permute.xlu0 %1451
    %v1454 = vmul.f32 %v1433, %v1452
    %1456 = vrot.lane.b32.xlu0 %v1454, 64
    %v1457 = vpop.permute.xlu0 %1456
    %1459 = vrot.lane.b32.xlu0 %v1454, 96
    %v1460 = vpop.permute.xlu0 %1459
    %v1462 = vsel %vm25, %v1457, %v1460
    %v1463 = vmul.f32 %v1462, %v394
    %1464 = vst.msk [vmem:[#allocation3 - $0x2] sm:$0x30] %vm397, %v1457
    %1465 = vst.msk [vmem:[#allocation3 + $0x6] sm:$0xc0] %vm401, %v1460
    %v1467 = vrot.slane %v1463, 4
    %v1468 = vsel %vm162, %v1467, 0
    %1470 = vmatprep.subr.mxu0 0.0
    %1471 = vmatpush1.msra.mxu0 0.0
    %1472 = vmatprep.subr.mxu0 0.0
    %1473 = vmatpush1.msra.mxu0 0.0
    %1474 = vmatprep.subr.mxu0 0.0
    %1475 = vmatpush1.msra.mxu0 0.0
    %1476 = vmatprep.subr.mxu0 0.0
    %1477 = vmatpush1.msra.mxu0 0.0
    %1478 = vmatprep.subr.mxu0 0.0
    %1479 = vmatpush1.msra.mxu0 0.0
    %1480 = vmatprep.subr.mxu0 0.0
    %1481 = vmatpush1.msra.mxu0 0.0
    %1482 = vmatprep.subr.mxu0 0.0
    %1483 = vmatpush1.msra.mxu0 0.0
    %1484 = vmatprep.subr.mxu0 0.0
    %1485 = vmatpush1.msra.mxu0 0.0
    %1486 = vmatprep.subr.mxu0 0.0
    %1487 = vmatpush1.msra.mxu0 %v1131
    %1488 = vmatprep.subr.mxu0 0.0
    %1489 = vmatpush1.msra.mxu0 %v1130
    %1490 = vmatprep.subr.mxu0 0.0
    %1491 = vmatpush1.msra.mxu0 %v1129
    %1492 = vmatprep.subr.mxu0 0.0
    %1493 = vmatpush1.msra.mxu0 %v1128
    %1494 = vmatprep.subr.mxu0 0.0
    %1495 = vmatpush1.msra.mxu0 %v1127
    %1496 = vmatprep.subr.mxu0 0.0
    %1497 = vmatpush1.msra.mxu0 %v1126
    %1498 = vmatprep.subr.mxu0 0.0
    %1499 = vmatpush1.msra.mxu0 %v1125
    %1500 = vmatprep.subr.mxu0 0.0
    %1501 = vmatpush1.msra.mxu0 %v1124
    %1502 = vmatprep.subr.mxu0 0.0
    %1503 = vmatpush2.msra.mxu0 0.0
    %1504 = vmatprep.subr.mxu0 0.0
    %1505 = vmatpush2.msra.mxu0 0.0
    %1506 = vmatprep.subr.mxu0 0.0
    %1507 = vmatpush2.msra.mxu0 0.0
    %1508 = vmatprep.subr.mxu0 0.0
    %1509 = vmatpush2.msra.mxu0 0.0
    %1510 = vmatprep.subr.mxu0 0.0
    %1511 = vmatpush2.msra.mxu0 0.0
    %1512 = vmatprep.subr.mxu0 0.0
    %1513 = vmatpush2.msra.mxu0 0.0
    %1514 = vmatprep.subr.mxu0 0.0
    %1515 = vmatpush2.msra.mxu0 0.0
    %1516 = vmatprep.subr.mxu0 0.0
    %1517 = vmatpush2.msra.mxu0 0.0
    %1518 = vmatprep.subr.mxu0 0.0
    %1519 = vmatpush2.msra.mxu0 0.0
    %1520 = vmatprep.subr.mxu0 0.0
    %1521 = vmatpush2.msra.mxu0 0.0
    %1522 = vmatprep.subr.mxu0 0.0
    %1523 = vmatpush2.msra.mxu0 0.0
    %1524 = vmatprep.subr.mxu0 0.0
    %1525 = vmatpush2.msra.mxu0 0.0
    %1526 = vmatprep.subr.mxu0 0.0
    %1527 = vmatpush2.msra.mxu0 0.0
    %1528 = vmatprep.subr.mxu0 0.0
    %1529 = vmatpush2.msra.mxu0 0.0
    %1530 = vmatprep.subr.mxu0 0.0
    %1531 = vmatpush2.msra.mxu0 0.0
    %1532 = vmatprep.subr.mxu0 0.0
    %1533 = vmatpush2.msra.mxu0 0.0
    %1534 = vmatprep.mubr.f32.mxu0 0.0
    %1535 = vmatmul.mubr.f32.gmra.mxu0 %v1468
    %v1536 = vpop.f32.mrf.mxu0
    %v1537 = vadd.f32 0.0, %v1536
    %v1538 = vpop.f32.mrf.mxu0
    %1539 = vdwg.mxu0
    %v1540 = vadd.f32 %v1239, %v1537
    %v1541 = vxor.u32 %v1540, 2147483648
    %v1542 = vmul.f32 %v1541, 1.442695
    %v1543 = vpow.pop %v1542
    %v1544 = vadd.f32 %v1543, 1.0
    %v1545 = vrcp.pop %v1544
    %v1546 = vmul.f32 1.0, %v1545
    %v1547 = vtanh.pop %v1540
    %v1549 = vrot.slane %v1448, 4
    %v1551 = vmul.f32 %v1546, %v1549
    %1553 = vrot.lane.b32.xlu0 %v1547, 32
    %v1554 = vpop.permute.xlu0 %1553
    %v1556 = vmul.f32 %v1546, %v1554
    %1558 = vrot.lane.b32.xlu0 %v1556, 32
    %v1559 = vpop.permute.xlu0 %1558
    %v1561 = vadd.f32 %v1551, %v1559
    %v1562 = vtanh.pop %v1561
    %1564 = vrot.lane.b32.xlu0 %v1562, 32
    %v1565 = vpop.permute.xlu0 %1564
    %v1567 = vmul.f32 %v1546, %v1565
    %1569 = vrot.lane.b32.xlu0 %v1567, 64
    %v1570 = vpop.permute.xlu0 %1569
    %1572 = vrot.lane.b32.xlu0 %v1567, 96
    %v1573 = vpop.permute.xlu0 %1572
    %v1575 = vsel %vm25, %v1570, %v1573
    %v1576 = vmul.f32 %v1575, %v32
    %1577 = vst.msk [vmem:[#allocation3 + $0x4] sm:$0x3] %vm270, %v1570
    %1578 = vst.msk [vmem:[#allocation3 + $0x8] sm:$0xc] %vm274, %v1573
    %v1580 = vsel %vm162, %v1576, 0
    %1582 = vmatprep.subr.mxu0 0.0
    %1583 = vmatpush1.msra.mxu0 0.0
    %1584 = vmatprep.subr.mxu0 0.0
    %1585 = vmatpush1.msra.mxu0 0.0
    %1586 = vmatprep.subr.mxu0 0.0
    %1587 = vmatpush1.msra.mxu0 0.0
    %1588 = vmatprep.subr.mxu0 0.0
    %1589 = vmatpush1.msra.mxu0 0.0
    %1590 = vmatprep.subr.mxu0 0.0
    %1591 = vmatpush1.msra.mxu0 0.0
    %1592 = vmatprep.subr.mxu0 0.0
    %1593 = vmatpush1.msra.mxu0 0.0
    %1594 = vmatprep.subr.mxu0 0.0
    %1595 = vmatpush1.msra.mxu0 0.0
    %1596 = vmatprep.subr.mxu0 0.0
    %1597 = vmatpush1.msra.mxu0 0.0
    %1598 = vmatprep.subr.mxu0 0.0
    %1599 = vmatpush1.msra.mxu0 %v1131
    %1600 = vmatprep.subr.mxu0 0.0
    %1601 = vmatpush1.msra.mxu0 %v1130
    %1602 = vmatprep.subr.mxu0 0.0
    %1603 = vmatpush1.msra.mxu0 %v1129
    %1604 = vmatprep.subr.mxu0 0.0
    %1605 = vmatpush1.msra.mxu0 %v1128
    %1606 = vmatprep.subr.mxu0 0.0
    %1607 = vmatpush1.msra.mxu0 %v1127
    %1608 = vmatprep.subr.mxu0 0.0
    %1609 = vmatpush1.msra.mxu0 %v1126
    %1610 = vmatprep.subr.mxu0 0.0
    %1611 = vmatpush1.msra.mxu0 %v1125
    %1612 = vmatprep.subr.mxu0 0.0
    %1613 = vmatpush1.msra.mxu0 %v1124
    %1614 = vmatprep.subr.mxu0 0.0
    %1615 = vmatpush2.msra.mxu0 0.0
    %1616 = vmatprep.subr.mxu0 0.0
    %1617 = vmatpush2.msra.mxu0 0.0
    %1618 = vmatprep.subr.mxu0 0.0
    %1619 = vmatpush2.msra.mxu0 0.0
    %1620 = vmatprep.subr.mxu0 0.0
    %1621 = vmatpush2.msra.mxu0 0.0
    %1622 = vmatprep.subr.mxu0 0.0
    %1623 = vmatpush2.msra.mxu0 0.0
    %1624 = vmatprep.subr.mxu0 0.0
    %1625 = vmatpush2.msra.mxu0 0.0
    %1626 = vmatprep.subr.mxu0 0.0
    %1627 = vmatpush2.msra.mxu0 0.0
    %1628 = vmatprep.subr.mxu0 0.0
    %1629 = vmatpush2.msra.mxu0 0.0
    %1630 = vmatprep.subr.mxu0 0.0
    %1631 = vmatpush2.msra.mxu0 0.0
    %1632 = vmatprep.subr.mxu0 0.0
    %1633 = vmatpush2.msra.mxu0 0.0
    %1634 = vmatprep.subr.mxu0 0.0
    %1635 = vmatpush2.msra.mxu0 0.0
    %1636 = vmatprep.subr.mxu0 0.0
    %1637 = vmatpush2.msra.mxu0 0.0
    %1638 = vmatprep.subr.mxu0 0.0
    %1639 = vmatpush2.msra.mxu0 0.0
    %1640 = vmatprep.subr.mxu0 0.0
    %1641 = vmatpush2.msra.mxu0 0.0
    %1642 = vmatprep.subr.mxu0 0.0
    %1643 = vmatpush2.msra.mxu0 0.0
    %1644 = vmatprep.subr.mxu0 0.0
    %1645 = vmatpush2.msra.mxu0 0.0
    %1646 = vmatprep.mubr.f32.mxu0 0.0
    %1647 = vmatmul.mubr.f32.gmra.mxu0 %v1580
    %v1648 = vpop.f32.mrf.mxu0
    %v1649 = vadd.f32 0.0, %v1648
    %v1650 = vpop.f32.mrf.mxu0
    %1651 = vdwg.mxu0
    %v1653 = vrot.slane %v1649, 4
    %v1655 = vadd.f32 %v1240, %v1653
    %v1656 = vxor.u32 %v1655, 2147483648
    %v1657 = vmul.f32 %v1656, 1.442695
    %v1658 = vpow.pop %v1657
    %v1659 = vadd.f32 %v1658, 1.0
    %v1660 = vrcp.pop %v1659
    %v1661 = vmul.f32 1.0, %v1660
    %v1662 = vtanh.pop %v1655
    %v1664 = vrot.slane %v1561, 4
    %v1666 = vmul.f32 %v1661, %v1664
    %1668 = vrot.lane.b32.xlu0 %v1662, 32
    %v1669 = vpop.permute.xlu0 %1668
    %v1671 = vmul.f32 %v1661, %v1669
    %1673 = vrot.lane.b32.xlu0 %v1671, 32
    %v1674 = vpop.permute.xlu0 %1673
    %v1676 = vadd.f32 %v1666, %v1674
    %v1677 = vtanh.pop %v1676
    %1679 = vrot.lane.b32.xlu0 %v1677, 32
    %v1680 = vpop.permute.xlu0 %1679
    %v1682 = vmul.f32 %v1661, %v1680
    %1684 = vrot.lane.b32.xlu0 %v1682, 64
    %v1685 = vpop.permute.xlu0 %1684
    %1687 = vrot.lane.b32.xlu0 %v1682, 96
    %v1688 = vpop.permute.xlu0 %1687
    %v1690 = vsel %vm25, %v1685, %v1688
    %v1691 = vmul.f32 %v1690, %v394
    %1692 = vst.msk [vmem:[#allocation3 + $0x2] sm:$0x30] %vm397, %v1685
    %1693 = vst.msk [vmem:[#allocation3 + $0x2] sm:$0xc0] %vm401, %v1688
    %v1695 = vrot.slane %v1691, 4
    %v1696 = vsel %vm162, %v1695, 0
    %1698 = vmatprep.subr.mxu0 0.0
    %1699 = vmatpush1.msra.mxu0 0.0
    %1700 = vmatprep.subr.mxu0 0.0
    %1701 = vmatpush1.msra.mxu0 0.0
    %1702 = vmatprep.subr.mxu0 0.0
    %1703 = vmatpush1.msra.mxu0 0.0
    %1704 = vmatprep.subr.mxu0 0.0
    %1705 = vmatpush1.msra.mxu0 0.0
    %1706 = vmatprep.subr.mxu0 0.0
    %1707 = vmatpush1.msra.mxu0 0.0
    %1708 = vmatprep.subr.mxu0 0.0
    %1709 = vmatpush1.msra.mxu0 0.0
    %1710 = vmatprep.subr.mxu0 0.0
    %1711 = vmatpush1.msra.mxu0 0.0
    %1712 = vmatprep.subr.mxu0 0.0
    %1713 = vmatpush1.msra.mxu0 0.0
    %1714 = vmatprep.subr.mxu0 0.0
    %1715 = vmatpush1.msra.mxu0 %v1131
    %1716 = vmatprep.subr.mxu0 0.0
    %1717 = vmatpush1.msra.mxu0 %v1130
    %1718 = vmatprep.subr.mxu0 0.0
    %1719 = vmatpush1.msra.mxu0 %v1129
    %1720 = vmatprep.subr.mxu0 0.0
    %1721 = vmatpush1.msra.mxu0 %v1128
    %1722 = vmatprep.subr.mxu0 0.0
    %1723 = vmatpush1.msra.mxu0 %v1127
    %1724 = vmatprep.subr.mxu0 0.0
    %1725 = vmatpush1.msra.mxu0 %v1126
    %1726 = vmatprep.subr.mxu0 0.0
    %1727 = vmatpush1.msra.mxu0 %v1125
    %1728 = vmatprep.subr.mxu0 0.0
    %1729 = vmatpush1.msra.mxu0 %v1124
    %1730 = vmatprep.subr.mxu0 0.0
    %1731 = vmatpush2.msra.mxu0 0.0
    %1732 = vmatprep.subr.mxu0 0.0
    %1733 = vmatpush2.msra.mxu0 0.0
    %1734 = vmatprep.subr.mxu0 0.0
    %1735 = vmatpush2.msra.mxu0 0.0
    %1736 = vmatprep.subr.mxu0 0.0
    %1737 = vmatpush2.msra.mxu0 0.0
    %1738 = vmatprep.subr.mxu0 0.0
    %1739 = vmatpush2.msra.mxu0 0.0
    %1740 = vmatprep.subr.mxu0 0.0
    %1741 = vmatpush2.msra.mxu0 0.0
    %1742 = vmatprep.subr.mxu0 0.0
    %1743 = vmatpush2.msra.mxu0 0.0
    %1744 = vmatprep.subr.mxu0 0.0
    %1745 = vmatpush2.msra.mxu0 0.0
    %1746 = vmatprep.subr.mxu0 0.0
    %1747 = vmatpush2.msra.mxu0 0.0
    %1748 = vmatprep.subr.mxu0 0.0
    %1749 = vmatpush2.msra.mxu0 0.0
    %1750 = vmatprep.subr.mxu0 0.0
    %1751 = vmatpush2.msra.mxu0 0.0
    %1752 = vmatprep.subr.mxu0 0.0
    %1753 = vmatpush2.msra.mxu0 0.0
    %1754 = vmatprep.subr.mxu0 0.0
    %1755 = vmatpush2.msra.mxu0 0.0
    %1756 = vmatprep.subr.mxu0 0.0
    %1757 = vmatpush2.msra.mxu0 0.0
    %1758 = vmatprep.subr.mxu0 0.0
    %1759 = vmatpush2.msra.mxu0 0.0
    %1760 = vmatprep.subr.mxu0 0.0
    %1761 = vmatpush2.msra.mxu0 0.0
    %1762 = vmatprep.mubr.f32.mxu0 0.0
    %1763 = vmatmul.mubr.f32.gmra.mxu0 %v1696
    %v1764 = vpop.f32.mrf.mxu0
    %v1765 = vadd.f32 0.0, %v1764
    %v1766 = vpop.f32.mrf.mxu0
    %1767 = vdwg.mxu0
    %v1768 = vadd.f32 %v1241, %v1765
    %v1769 = vxor.u32 %v1768, 2147483648
    %v1770 = vmul.f32 %v1769, 1.442695
    %v1771 = vpow.pop %v1770
    %v1772 = vadd.f32 %v1771, 1.0
    %v1773 = vrcp.pop %v1772
    %v1774 = vmul.f32 1.0, %v1773
    %v1775 = vtanh.pop %v1768
    %v1777 = vrot.slane %v1676, 4
    %v1779 = vmul.f32 %v1774, %v1777
    %1781 = vrot.lane.b32.xlu0 %v1775, 32
    %v1782 = vpop.permute.xlu0 %1781
    %v1784 = vmul.f32 %v1774, %v1782
    %1786 = vrot.lane.b32.xlu0 %v1784, 32
    %v1787 = vpop.permute.xlu0 %1786
    %v1789 = vadd.f32 %v1779, %v1787
    %v1790 = vtanh.pop %v1789
    %1792 = vrot.lane.b32.xlu0 %v1790, 32
    %v1793 = vpop.permute.xlu0 %1792
    %v1795 = vmul.f32 %v1774, %v1793
    %1797 = vrot.lane.b32.xlu0 %v1795, 64
    %v1798 = vpop.permute.xlu0 %1797
    %1800 = vrot.lane.b32.xlu0 %v1795, 96
    %v1801 = vpop.permute.xlu0 %1800
    %v1803 = vsel %vm25, %v1798, %v1801
    %v1804 = vmul.f32 %v1803, %v32
    %1805 = vst.msk [vmem:[#allocation3 + $0x8] sm:$0x3] %vm270, %v1798
    %1806 = vst.msk [vmem:[#allocation3 + $0x4] sm:$0xc] %vm274, %v1801
    %v1808 = vsel %vm162, %v1804, 0
    %1810 = vmatprep.subr.mxu0 0.0
    %1811 = vmatpush1.msra.mxu0 0.0
    %1812 = vmatprep.subr.mxu0 0.0
    %1813 = vmatpush1.msra.mxu0 0.0
    %1814 = vmatprep.subr.mxu0 0.0
    %1815 = vmatpush1.msra.mxu0 0.0
    %1816 = vmatprep.subr.mxu0 0.0
    %1817 = vmatpush1.msra.mxu0 0.0
    %1818 = vmatprep.subr.mxu0 0.0
    %1819 = vmatpush1.msra.mxu0 0.0
    %1820 = vmatprep.subr.mxu0 0.0
    %1821 = vmatpush1.msra.mxu0 0.0
    %1822 = vmatprep.subr.mxu0 0.0
    %1823 = vmatpush1.msra.mxu0 0.0
    %1824 = vmatprep.subr.mxu0 0.0
    %1825 = vmatpush1.msra.mxu0 0.0
    %1826 = vmatprep.subr.mxu0 0.0
    %1827 = vmatpush1.msra.mxu0 %v1131
    %1828 = vmatprep.subr.mxu0 0.0
    %1829 = vmatpush1.msra.mxu0 %v1130
    %1830 = vmatprep.subr.mxu0 0.0
    %1831 = vmatpush1.msra.mxu0 %v1129
    %1832 = vmatprep.subr.mxu0 0.0
    %1833 = vmatpush1.msra.mxu0 %v1128
    %1834 = vmatprep.subr.mxu0 0.0
    %1835 = vmatpush1.msra.mxu0 %v1127
    %1836 = vmatprep.subr.mxu0 0.0
    %1837 = vmatpush1.msra.mxu0 %v1126
    %1838 = vmatprep.subr.mxu0 0.0
    %1839 = vmatpush1.msra.mxu0 %v1125
    %1840 = vmatprep.subr.mxu0 0.0
    %1841 = vmatpush1.msra.mxu0 %v1124
    %1842 = vmatprep.subr.mxu0 0.0
    %1843 = vmatpush2.msra.mxu0 0.0
    %1844 = vmatprep.subr.mxu0 0.0
    %1845 = vmatpush2.msra.mxu0 0.0
    %1846 = vmatprep.subr.mxu0 0.0
    %1847 = vmatpush2.msra.mxu0 0.0
    %1848 = vmatprep.subr.mxu0 0.0
    %1849 = vmatpush2.msra.mxu0 0.0
    %1850 = vmatprep.subr.mxu0 0.0
    %1851 = vmatpush2.msra.mxu0 0.0
    %1852 = vmatprep.subr.mxu0 0.0
    %1853 = vmatpush2.msra.mxu0 0.0
    %1854 = vmatprep.subr.mxu0 0.0
    %1855 = vmatpush2.msra.mxu0 0.0
    %1856 = vmatprep.subr.mxu0 0.0
    %1857 = vmatpush2.msra.mxu0 0.0
    %1858 = vmatprep.subr.mxu0 0.0
    %1859 = vmatpush2.msra.mxu0 0.0
    %1860 = vmatprep.subr.mxu0 0.0
    %1861 = vmatpush2.msra.mxu0 0.0
    %1862 = vmatprep.subr.mxu0 0.0
    %1863 = vmatpush2.msra.mxu0 0.0
    %1864 = vmatprep.subr.mxu0 0.0
    %1865 = vmatpush2.msra.mxu0 0.0
    %1866 = vmatprep.subr.mxu0 0.0
    %1867 = vmatpush2.msra.mxu0 0.0
    %1868 = vmatprep.subr.mxu0 0.0
    %1869 = vmatpush2.msra.mxu0 0.0
    %1870 = vmatprep.subr.mxu0 0.0
    %1871 = vmatpush2.msra.mxu0 0.0
    %1872 = vmatprep.subr.mxu0 0.0
    %1873 = vmatpush2.msra.mxu0 0.0
    %1874 = vmatprep.mubr.f32.mxu0 0.0
    %1875 = vmatmul.mubr.f32.gmra.mxu0 %v1808
    %v1876 = vpop.f32.mrf.mxu0
    %v1877 = vadd.f32 0.0, %v1876
    %v1878 = vpop.f32.mrf.mxu0
    %1879 = vdwg.mxu0
    %v1881 = vrot.slane %v1877, 4
    %v1883 = vadd.f32 %v1242, %v1881
    %v1884 = vxor.u32 %v1883, 2147483648
    %v1885 = vmul.f32 %v1884, 1.442695
    %v1886 = vpow.pop %v1885
    %v1887 = vadd.f32 %v1886, 1.0
    %v1888 = vrcp.pop %v1887
    %v1889 = vmul.f32 1.0, %v1888
    %v1890 = vtanh.pop %v1883
    %v1892 = vrot.slane %v1789, 4
    %v1894 = vmul.f32 %v1889, %v1892
    %1896 = vrot.lane.b32.xlu0 %v1890, 32
    %v1897 = vpop.permute.xlu0 %1896
    %v1899 = vmul.f32 %v1889, %v1897
    %1901 = vrot.lane.b32.xlu0 %v1899, 32
    %v1902 = vpop.permute.xlu0 %1901
    %v1904 = vadd.f32 %v1894, %v1902
    %v1905 = vtanh.pop %v1904
    %1907 = vrot.lane.b32.xlu0 %v1905, 32
    %v1908 = vpop.permute.xlu0 %1907
    %v1910 = vmul.f32 %v1889, %v1908
    %1912 = vrot.lane.b32.xlu0 %v1910, 64
    %v1913 = vpop.permute.xlu0 %1912
    %1915 = vrot.lane.b32.xlu0 %v1910, 96
    %v1916 = vpop.permute.xlu0 %1915
    %v1918 = vsel %vm25, %v1913, %v1916
    %v1919 = vmul.f32 %v1918, %v394
    %1920 = vst.msk [vmem:[#allocation3 + $0x6] sm:$0x30] %vm397, %v1913
    %1921 = vst.msk [vmem:[#allocation3 - $0x2] sm:$0xc0] %vm401, %v1916
    %v1923 = vrot.slane %v1919, 4
    %v1924 = vsel %vm162, %v1923, 0
    %1926 = vmatprep.subr.mxu0 0.0
    %1927 = vmatpush1.msra.mxu0 0.0
    %1928 = vmatprep.subr.mxu0 0.0
    %1929 = vmatpush1.msra.mxu0 0.0
    %1930 = vmatprep.subr.mxu0 0.0
    %1931 = vmatpush1.msra.mxu0 0.0
    %1932 = vmatprep.subr.mxu0 0.0
    %1933 = vmatpush1.msra.mxu0 0.0
    %1934 = vmatprep.subr.mxu0 0.0
    %1935 = vmatpush1.msra.mxu0 0.0
    %1936 = vmatprep.subr.mxu0 0.0
    %1937 = vmatpush1.msra.mxu0 0.0
    %1938 = vmatprep.subr.mxu0 0.0
    %1939 = vmatpush1.msra.mxu0 0.0
    %1940 = vmatprep.subr.mxu0 0.0
    %1941 = vmatpush1.msra.mxu0 0.0
    %1942 = vmatprep.subr.mxu0 0.0
    %1943 = vmatpush1.msra.mxu0 %v1131
    %1944 = vmatprep.subr.mxu0 0.0
    %1945 = vmatpush1.msra.mxu0 %v1130
    %1946 = vmatprep.subr.mxu0 0.0
    %1947 = vmatpush1.msra.mxu0 %v1129
    %1948 = vmatprep.subr.mxu0 0.0
    %1949 = vmatpush1.msra.mxu0 %v1128
    %1950 = vmatprep.subr.mxu0 0.0
    %1951 = vmatpush1.msra.mxu0 %v1127
    %1952 = vmatprep.subr.mxu0 0.0
    %1953 = vmatpush1.msra.mxu0 %v1126
    %1954 = vmatprep.subr.mxu0 0.0
    %1955 = vmatpush1.msra.mxu0 %v1125
    %1956 = vmatprep.subr.mxu0 0.0
    %1957 = vmatpush1.msra.mxu0 %v1124
    %1958 = vmatprep.subr.mxu0 0.0
    %1959 = vmatpush2.msra.mxu0 0.0
    %1960 = vmatprep.subr.mxu0 0.0
    %1961 = vmatpush2.msra.mxu0 0.0
    %1962 = vmatprep.subr.mxu0 0.0
    %1963 = vmatpush2.msra.mxu0 0.0
    %1964 = vmatprep.subr.mxu0 0.0
    %1965 = vmatpush2.msra.mxu0 0.0
    %1966 = vmatprep.subr.mxu0 0.0
    %1967 = vmatpush2.msra.mxu0 0.0
    %1968 = vmatprep.subr.mxu0 0.0
    %1969 = vmatpush2.msra.mxu0 0.0
    %1970 = vmatprep.subr.mxu0 0.0
    %1971 = vmatpush2.msra.mxu0 0.0
    %1972 = vmatprep.subr.mxu0 0.0
    %1973 = vmatpush2.msra.mxu0 0.0
    %1974 = vmatprep.subr.mxu0 0.0
    %1975 = vmatpush2.msra.mxu0 0.0
    %1976 = vmatprep.subr.mxu0 0.0
    %1977 = vmatpush2.msra.mxu0 0.0
    %1978 = vmatprep.subr.mxu0 0.0
    %1979 = vmatpush2.msra.mxu0 0.0
    %1980 = vmatprep.subr.mxu0 0.0
    %1981 = vmatpush2.msra.mxu0 0.0
    %1982 = vmatprep.subr.mxu0 0.0
    %1983 = vmatpush2.msra.mxu0 0.0
    %1984 = vmatprep.subr.mxu0 0.0
    %1985 = vmatpush2.msra.mxu0 0.0
    %1986 = vmatprep.subr.mxu0 0.0
    %1987 = vmatpush2.msra.mxu0 0.0
    %1988 = vmatprep.subr.mxu0 0.0
    %1989 = vmatpush2.msra.mxu0 0.0
    %1990 = vmatprep.mubr.f32.mxu0 0.0
    %1991 = vmatmul.mubr.f32.gmra.mxu0 %v1924
    %v1992 = vpop.f32.mrf.mxu0
    %v1993 = vadd.f32 0.0, %v1992
    %v1994 = vpop.f32.mrf.mxu0
    %1995 = vdwg.mxu0
    %v1996 = vadd.f32 %v1243, %v1993
    %v1997 = vxor.u32 %v1996, 2147483648
    %v1998 = vmul.f32 %v1997, 1.442695
    %v1999 = vpow.pop %v1998
    %v2000 = vadd.f32 %v1999, 1.0
    %v2001 = vrcp.pop %v2000
    %v2002 = vmul.f32 1.0, %v2001
    %v2003 = vtanh.pop %v1996
    %v2005 = vrot.slane %v1904, 4
    %v2007 = vmul.f32 %v2002, %v2005
    %2009 = vrot.lane.b32.xlu0 %v2003, 32
    %v2010 = vpop.permute.xlu0 %2009
    %v2012 = vmul.f32 %v2002, %v2010
    %2014 = vrot.lane.b32.xlu0 %v2012, 32
    %v2015 = vpop.permute.xlu0 %2014
    %v2017 = vadd.f32 %v2007, %v2015
    %v2018 = vtanh.pop %v2017
    %2020 = vrot.lane.b32.xlu0 %v2018, 32
    %v2021 = vpop.permute.xlu0 %2020
    %v2023 = vmul.f32 %v2002, %v2021
    %2025 = vrot.lane.b32.xlu0 %v2023, 64
    %v2026 = vpop.permute.xlu0 %2025
    %2028 = vrot.lane.b32.xlu0 %v2023, 96
    %v2029 = vpop.permute.xlu0 %2028
    %v2031 = vsel %vm25, %v2026, %v2029
    %v2032 = vmul.f32 %v2031, %v32
    %2033 = vst.msk [vmem:[#allocation3 + $0xc] sm:$0x3] %vm270, %v2026
    %2034 = vst.msk [vmem:[#allocation3] sm:$0xc] %vm274, %v2029
    %v2036 = vsel %vm162, %v2032, 0
    %2038 = vmatprep.subr.mxu0 0.0
    %2039 = vmatpush1.msra.mxu0 0.0
    %2040 = vmatprep.subr.mxu0 0.0
    %2041 = vmatpush1.msra.mxu0 0.0
    %2042 = vmatprep.subr.mxu0 0.0
    %2043 = vmatpush1.msra.mxu0 0.0
    %2044 = vmatprep.subr.mxu0 0.0
    %2045 = vmatpush1.msra.mxu0 0.0
    %2046 = vmatprep.subr.mxu0 0.0
    %2047 = vmatpush1.msra.mxu0 0.0
    %2048 = vmatprep.subr.mxu0 0.0
    %2049 = vmatpush1.msra.mxu0 0.0
    %2050 = vmatprep.subr.mxu0 0.0
    %2051 = vmatpush1.msra.mxu0 0.0
    %2052 = vmatprep.subr.mxu0 0.0
    %2053 = vmatpush1.msra.mxu0 0.0
    %2054 = vmatprep.subr.mxu0 0.0
    %2055 = vmatpush1.msra.mxu0 %v1131
    %2056 = vmatprep.subr.mxu0 0.0
    %2057 = vmatpush1.msra.mxu0 %v1130
    %2058 = vmatprep.subr.mxu0 0.0
    %2059 = vmatpush1.msra.mxu0 %v1129
    %2060 = vmatprep.subr.mxu0 0.0
    %2061 = vmatpush1.msra.mxu0 %v1128
    %2062 = vmatprep.subr.mxu0 0.0
    %2063 = vmatpush1.msra.mxu0 %v1127
    %2064 = vmatprep.subr.mxu0 0.0
    %2065 = vmatpush1.msra.mxu0 %v1126
    %2066 = vmatprep.subr.mxu0 0.0
    %2067 = vmatpush1.msra.mxu0 %v1125
    %2068 = vmatprep.subr.mxu0 0.0
    %2069 = vmatpush1.msra.mxu0 %v1124
    %2070 = vmatprep.subr.mxu0 0.0
    %2071 = vmatpush2.msra.mxu0 0.0
    %2072 = vmatprep.subr.mxu0 0.0
    %2073 = vmatpush2.msra.mxu0 0.0
    %2074 = vmatprep.subr.mxu0 0.0
    %2075 = vmatpush2.msra.mxu0 0.0
    %2076 = vmatprep.subr.mxu0 0.0
    %2077 = vmatpush2.msra.mxu0 0.0
    %2078 = vmatprep.subr.mxu0 0.0
    %2079 = vmatpush2.msra.mxu0 0.0
    %2080 = vmatprep.subr.mxu0 0.0
    %2081 = vmatpush2.msra.mxu0 0.0
    %2082 = vmatprep.subr.mxu0 0.0
    %2083 = vmatpush2.msra.mxu0 0.0
    %2084 = vmatprep.subr.mxu0 0.0
    %2085 = vmatpush2.msra.mxu0 0.0
    %2086 = vmatprep.subr.mxu0 0.0
    %2087 = vmatpush2.msra.mxu0 0.0
    %2088 = vmatprep.subr.mxu0 0.0
    %2089 = vmatpush2.msra.mxu0 0.0
    %2090 = vmatprep.subr.mxu0 0.0
    %2091 = vmatpush2.msra.mxu0 0.0
    %2092 = vmatprep.subr.mxu0 0.0
    %2093 = vmatpush2.msra.mxu0 0.0
    %2094 = vmatprep.subr.mxu0 0.0
    %2095 = vmatpush2.msra.mxu0 0.0
    %2096 = vmatprep.subr.mxu0 0.0
    %2097 = vmatpush2.msra.mxu0 0.0
    %2098 = vmatprep.subr.mxu0 0.0
    %2099 = vmatpush2.msra.mxu0 0.0
    %2100 = vmatprep.subr.mxu0 0.0
    %2101 = vmatpush2.msra.mxu0 0.0
    %2102 = vmatprep.mubr.f32.mxu0 0.0
    %2103 = vmatmul.mubr.f32.gmra.mxu0 %v2036
    %v2104 = vpop.f32.mrf.mxu0
    %v2105 = vadd.f32 0.0, %v2104
    %v2106 = vpop.f32.mrf.mxu0
    %2107 = vdwg.mxu0
    %v2109 = vrot.slane %v2105, 4
    %v2111 = vadd.f32 %v1244, %v2109
    %v2112 = vxor.u32 %v2111, 2147483648
    %v2113 = vmul.f32 %v2112, 1.442695
    %v2114 = vpow.pop %v2113
    %v2115 = vadd.f32 %v2114, 1.0
    %v2116 = vrcp.pop %v2115
    %v2117 = vmul.f32 1.0, %v2116
    %v2118 = vtanh.pop %v2111
    %v2120 = vrot.slane %v2017, 4
    %v2122 = vmul.f32 %v2117, %v2120
    %2124 = vrot.lane.b32.xlu0 %v2118, 32
    %v2125 = vpop.permute.xlu0 %2124
    %v2127 = vmul.f32 %v2117, %v2125
    %2129 = vrot.lane.b32.xlu0 %v2127, 32
    %v2130 = vpop.permute.xlu0 %2129
    %v2132 = vadd.f32 %v2122, %v2130
    %v2133 = vtanh.pop %v2132
    %2135 = vrot.lane.b32.xlu0 %v2133, 32
    %v2136 = vpop.permute.xlu0 %2135
    %v2138 = vmul.f32 %v2117, %v2136
    %2140 = vrot.lane.b32.xlu0 %v2138, 64
    %v2141 = vpop.permute.xlu0 %2140
    %2143 = vst.msk [vmem:[#allocation3 + $0xa] sm:$0x30] %vm397, %v2141
    %2144 = vrot.lane.b32.xlu0 %v2138, 96
    %v2145 = vpop.permute.xlu0 %2144
    %2147 = vst.msk [vmem:[#allocation3 - $0x6] sm:$0xc0] %vm401, %v2145
    %v2148 = vld [vmem:[#allocation3] sm:$0xff]
    %v2149 = vld [vmem:[#allocation3 + $0x8] sm:$0xff]
    %v2152 = vcombine.high %v2148, %v2148
    %v2154 = vunpack.c.l.s4 1983009808
    %v2155 = vunpack.c.0.s8 %v2154
    %v2156 = vlaneseq
    %v2157 = vshrl.u32 %v2156, 7
    %v2158 = vsub.s32 %v2155, %v2157
    %v2159 = vrot.slane %v2148, %v2158
    %v2161 = vunpack.c.l.s4 1983009808
    %v2162 = vunpack.c.0.s8 %v2161
    %v2163 = vlaneseq
    %v2164 = vshrl.u32 %v2163, 7
    %v2165 = vsub.s32 %v2162, %v2164
    %v2166 = vrot.slane %v2152, %v2165
    %v2167 = vcombine.high %v2159, %v2159
    %v2168 = vcombine.high %v2166, %v2166
    %v2169 = vcombine.high %v2149, %v2149
    %v2171 = vunpack.c.l.s4 1983009808
    %v2172 = vunpack.c.0.s8 %v2171
    %v2173 = vlaneseq
    %v2174 = vshrl.u32 %v2173, 7
    %v2175 = vsub.s32 %v2172, %v2174
    %v2176 = vrot.slane %v2149, %v2175
    %v2178 = vunpack.c.l.s4 1983009808
    %v2179 = vunpack.c.0.s8 %v2178
    %v2180 = vlaneseq
    %v2181 = vshrl.u32 %v2180, 7
    %v2182 = vsub.s32 %v2179, %v2181
    %v2183 = vrot.slane %v2169, %v2182
    %v2184 = vcombine.high %v2176, %v2176
    %v2185 = vcombine.high %v2183, %v2183
    %v2194 = vld [vmem:[#allocation4 + $0x130] sm:$0xff]
    %v2195 = vld [vmem:[#allocation4 + $0x138] sm:$0xff]
    %v2196 = vld [vmem:[#allocation4 + $0x140] sm:$0xff]
    %v2197 = vld [vmem:[#allocation4 + $0x148] sm:$0xff]
    %v2198 = vld [vmem:[#allocation4 + $0x150] sm:$0xff]
    %v2199 = vld [vmem:[#allocation4 + $0x158] sm:$0xff]
    %v2200 = vld [vmem:[#allocation4 + $0x160] sm:$0xff]
    %v2201 = vld [vmem:[#allocation4 + $0x168] sm:$0xff]
    %v2202 = vld [vmem:[#allocation4 + $0x190] sm:$0x1]
    %v2203 = vlaneseq
    %v2204 = vshrl.u32 %v2203, 7
    %v2205 = vsub.s32 0, %v2204
    %v2206 = vrot.slane %v2202, %v2205
    %v2207 = vsel %vm162, %v2148, 0
    %v2209 = vsel %vm162, %v2149, 0
    %2211 = vmatprep.subr.mxu0 0.0
    %2212 = vmatpush1.msra.mxu0 0.0
    %2213 = vmatprep.subr.mxu0 0.0
    %2214 = vmatpush1.msra.mxu0 0.0
    %2215 = vmatprep.subr.mxu0 0.0
    %2216 = vmatpush1.msra.mxu0 0.0
    %2217 = vmatprep.subr.mxu0 0.0
    %2218 = vmatpush1.msra.mxu0 0.0
    %2219 = vmatprep.subr.mxu0 0.0
    %2220 = vmatpush1.msra.mxu0 0.0
    %2221 = vmatprep.subr.mxu0 0.0
    %2222 = vmatpush1.msra.mxu0 0.0
    %2223 = vmatprep.subr.mxu0 0.0
    %2224 = vmatpush1.msra.mxu0 0.0
    %2225 = vmatprep.subr.mxu0 0.0
    %2226 = vmatpush1.msra.mxu0 0.0
    %2227 = vmatprep.subr.mxu0 0.0
    %2228 = vmatpush1.msra.mxu0 %v2201
    %2229 = vmatprep.subr.mxu0 0.0
    %2230 = vmatpush1.msra.mxu0 %v2200
    %2231 = vmatprep.subr.mxu0 0.0
    %2232 = vmatpush1.msra.mxu0 %v2199
    %2233 = vmatprep.subr.mxu0 0.0
    %2234 = vmatpush1.msra.mxu0 %v2198
    %2235 = vmatprep.subr.mxu0 0.0
    %2236 = vmatpush1.msra.mxu0 %v2197
    %2237 = vmatprep.subr.mxu0 0.0
    %2238 = vmatpush1.msra.mxu0 %v2196
    %2239 = vmatprep.subr.mxu0 0.0
    %2240 = vmatpush1.msra.mxu0 %v2195
    %2241 = vmatprep.subr.mxu0 0.0
    %2242 = vmatpush1.msra.mxu0 %v2194
    %2243 = vmatprep.subr.mxu0 0.0
    %2244 = vmatpush2.msra.mxu0 0.0
    %2245 = vmatprep.subr.mxu0 0.0
    %2246 = vmatpush2.msra.mxu0 0.0
    %2247 = vmatprep.subr.mxu0 0.0
    %2248 = vmatpush2.msra.mxu0 0.0
    %2249 = vmatprep.subr.mxu0 0.0
    %2250 = vmatpush2.msra.mxu0 0.0
    %2251 = vmatprep.subr.mxu0 0.0
    %2252 = vmatpush2.msra.mxu0 0.0
    %2253 = vmatprep.subr.mxu0 0.0
    %2254 = vmatpush2.msra.mxu0 0.0
    %2255 = vmatprep.subr.mxu0 0.0
    %2256 = vmatpush2.msra.mxu0 0.0
    %2257 = vmatprep.subr.mxu0 0.0
    %2258 = vmatpush2.msra.mxu0 0.0
    %2259 = vmatprep.subr.mxu0 0.0
    %2260 = vmatpush2.msra.mxu0 0.0
    %2261 = vmatprep.subr.mxu0 0.0
    %2262 = vmatpush2.msra.mxu0 0.0
    %2263 = vmatprep.subr.mxu0 0.0
    %2264 = vmatpush2.msra.mxu0 0.0
    %2265 = vmatprep.subr.mxu0 0.0
    %2266 = vmatpush2.msra.mxu0 0.0
    %2267 = vmatprep.subr.mxu0 0.0
    %2268 = vmatpush2.msra.mxu0 0.0
    %2269 = vmatprep.subr.mxu0 0.0
    %2270 = vmatpush2.msra.mxu0 0.0
    %2271 = vmatprep.subr.mxu0 0.0
    %2272 = vmatpush2.msra.mxu0 0.0
    %2273 = vmatprep.subr.mxu0 0.0
    %2274 = vmatpush2.msra.mxu0 0.0
    %2275 = vmatprep.mubr.f32.mxu0 0.0
    %2276 = vmatmul.mubr.f32.gmra.mxu0 %v2207
    %v2277 = vpop.f32.mrf.mxu0
    %v2278 = vadd.f32 %v2206, %v2277
    %v2279 = vpop.f32.mrf.mxu0
    %2280 = vmatprep.mubr.f32.mxu0 0.0
    %2281 = vmatmul.mubr.f32.gmra.mxu0 %v2209
    %v2282 = vpop.f32.mrf.mxu0
    %v2283 = vadd.f32 %v2206, %v2282
    %v2284 = vpop.f32.mrf.mxu0
    %2285 = vdwg.mxu0
    %v2286 = vld [vmem:[#allocation4 + $0x170] sm:$0xff]
    %v2287 = vld [vmem:[#allocation4 + $0x178] sm:$0xff]
    %v2288 = vld [vmem:[#allocation4 + $0x180] sm:$0xff]
    %v2289 = vld [vmem:[#allocation4 + $0x188] sm:$0xff]
    %v2290 = vld [vmem:[#allocation4 + $0x198] sm:$0xff]
    %v2291 = vld [vmem:[#allocation4 + $0x1a0] sm:$0xff]
    %v2292 = vld [vmem:[#allocation4 + $0x1a8] sm:$0xff]
    %v2293 = vld [vmem:[#allocation4 + $0x1b0] sm:$0xff]
    %v2294 = vld [vmem:[#allocation4 + $0x1b8] sm:$0x1]
    %v2295 = vld [vmem:[#allocation4 + $0x1c0] sm:$0xff]
    %v2296 = vld [vmem:[#allocation4 + $0x1c8] sm:$0xff]
    %v2297 = vld [vmem:[#allocation4 + $0x1d0] sm:$0xff]
    %v2298 = vld [vmem:[#allocation4 + $0x1d8] sm:$0xff]
    %v2299 = vld [vmem:[#allocation4 + $0x1e0] sm:$0xff]
    %v2300 = vld [vmem:[#allocation4 + $0x1e8] sm:$0xff]
    %v2301 = vld [vmem:[#allocation4 + $0x1f0] sm:$0xff]
    %v2302 = vld [vmem:[#allocation4 + $0x1f8] sm:$0xff]
    %v2303 = vld [vmem:[#allocation4 + $0x200] sm:$0xff]
    %v2304 = vld [vmem:[#allocation4 + $0x208] sm:$0xff]
    %v2305 = vld [vmem:[#allocation4 + $0x210] sm:$0xff]
    %v2306 = vld [vmem:[#allocation4 + $0x218] sm:$0xff]
    %v2307 = vld [vmem:[#allocation4 + $0x220] sm:$0x1]
    %v2308 = vlaneseq
    %v2309 = vshrl.u32 %v2308, 7
    %v2310 = vsub.s32 0, %v2309
    %v2311 = vrot.slane %v2307, %v2310
    %v2312 = vsel %vm25, 0.0, 0
    %2314 = vmatprep.subr.mxu0 0.0
    %2315 = vmatpush1.msra.mxu0 0.0
    %2316 = vmatprep.subr.mxu0 0.0
    %2317 = vmatpush1.msra.mxu0 0.0
    %2318 = vmatprep.subr.mxu0 0.0
    %2319 = vmatpush1.msra.mxu0 0.0
    %2320 = vmatprep.subr.mxu0 0.0
    %2321 = vmatpush1.msra.mxu0 0.0
    %2322 = vmatprep.subr.mxu0 0.0
    %2323 = vmatpush1.msra.mxu0 0.0
    %2324 = vmatprep.subr.mxu0 0.0
    %2325 = vmatpush1.msra.mxu0 0.0
    %2326 = vmatprep.subr.mxu0 0.0
    %2327 = vmatpush1.msra.mxu0 0.0
    %2328 = vmatprep.subr.mxu0 0.0
    %2329 = vmatpush1.msra.mxu0 0.0
    %2330 = vmatprep.subr.mxu0 0.0
    %2331 = vmatpush1.msra.mxu0 0.0
    %2332 = vmatprep.subr.mxu0 0.0
    %2333 = vmatpush1.msra.mxu0 0.0
    %2334 = vmatprep.subr.mxu0 0.0
    %2335 = vmatpush1.msra.mxu0 0.0
    %2336 = vmatprep.subr.mxu0 0.0
    %2337 = vmatpush1.msra.mxu0 0.0
    %2338 = vmatprep.subr.mxu0 0.0
    %2339 = vmatpush1.msra.mxu0 %v2306
    %2340 = vmatprep.subr.mxu0 0.0
    %2341 = vmatpush1.msra.mxu0 %v2305
    %2342 = vmatprep.subr.mxu0 0.0
    %2343 = vmatpush1.msra.mxu0 %v2304
    %2344 = vmatprep.subr.mxu0 0.0
    %2345 = vmatpush1.msra.mxu0 %v2303
    %2346 = vmatprep.subr.mxu0 0.0
    %2347 = vmatpush2.msra.mxu0 0.0
    %2348 = vmatprep.subr.mxu0 0.0
    %2349 = vmatpush2.msra.mxu0 0.0
    %2350 = vmatprep.subr.mxu0 0.0
    %2351 = vmatpush2.msra.mxu0 0.0
    %2352 = vmatprep.subr.mxu0 0.0
    %2353 = vmatpush2.msra.mxu0 0.0
    %2354 = vmatprep.subr.mxu0 0.0
    %2355 = vmatpush2.msra.mxu0 0.0
    %2356 = vmatprep.subr.mxu0 0.0
    %2357 = vmatpush2.msra.mxu0 0.0
    %2358 = vmatprep.subr.mxu0 0.0
    %2359 = vmatpush2.msra.mxu0 0.0
    %2360 = vmatprep.subr.mxu0 0.0
    %2361 = vmatpush2.msra.mxu0 0.0
    %2362 = vmatprep.subr.mxu0 0.0
    %2363 = vmatpush2.msra.mxu0 0.0
    %2364 = vmatprep.subr.mxu0 0.0
    %2365 = vmatpush2.msra.mxu0 0.0
    %2366 = vmatprep.subr.mxu0 0.0
    %2367 = vmatpush2.msra.mxu0 0.0
    %2368 = vmatprep.subr.mxu0 0.0
    %2369 = vmatpush2.msra.mxu0 0.0
    %2370 = vmatprep.subr.mxu0 0.0
    %2371 = vmatpush2.msra.mxu0 0.0
    %2372 = vmatprep.subr.mxu0 0.0
    %2373 = vmatpush2.msra.mxu0 0.0
    %2374 = vmatprep.subr.mxu0 0.0
    %2375 = vmatpush2.msra.mxu0 0.0
    %2376 = vmatprep.subr.mxu0 0.0
    %2377 = vmatpush2.msra.mxu0 0.0
    %2378 = vmatprep.mubr.f32.mxu0 0.0
    %2379 = vmatmul.mubr.f32.gmra.mxu0 %v2312
    %v2380 = vpop.f32.mrf.mxu0
    %v2381 = vadd.f32 %v2311, %v2380
    %v2382 = vpop.f32.mrf.mxu0
    %2383 = vdwg.mxu0
    %2384 = vmatprep.subr.mxu0 0.0
    %2385 = vmatpush1.msra.mxu0 0.0
    %2386 = vmatprep.subr.mxu0 0.0
    %2387 = vmatpush1.msra.mxu0 0.0
    %2388 = vmatprep.subr.mxu0 0.0
    %2389 = vmatpush1.msra.mxu0 0.0
    %2390 = vmatprep.subr.mxu0 0.0
    %2391 = vmatpush1.msra.mxu0 0.0
    %2392 = vmatprep.subr.mxu0 0.0
    %2393 = vmatpush1.msra.mxu0 0.0
    %2394 = vmatprep.subr.mxu0 0.0
    %2395 = vmatpush1.msra.mxu0 0.0
    %2396 = vmatprep.subr.mxu0 0.0
    %2397 = vmatpush1.msra.mxu0 0.0
    %2398 = vmatprep.subr.mxu0 0.0
    %2399 = vmatpush1.msra.mxu0 0.0
    %2400 = vmatprep.subr.mxu0 0.0
    %2401 = vmatpush1.msra.mxu0 0.0
    %2402 = vmatprep.subr.mxu0 0.0
    %2403 = vmatpush1.msra.mxu0 0.0
    %2404 = vmatprep.subr.mxu0 0.0
    %2405 = vmatpush1.msra.mxu0 0.0
    %2406 = vmatprep.subr.mxu0 0.0
    %2407 = vmatpush1.msra.mxu0 0.0
    %2408 = vmatprep.subr.mxu0 0.0
    %2409 = vmatpush1.msra.mxu0 %v2289
    %2410 = vmatprep.subr.mxu0 0.0
    %2411 = vmatpush1.msra.mxu0 %v2288
    %2412 = vmatprep.subr.mxu0 0.0
    %2413 = vmatpush1.msra.mxu0 %v2287
    %2414 = vmatprep.subr.mxu0 0.0
    %2415 = vmatpush1.msra.mxu0 %v2286
    %2416 = vmatprep.subr.mxu0 0.0
    %2417 = vmatpush2.msra.mxu0 0.0
    %2418 = vmatprep.subr.mxu0 0.0
    %2419 = vmatpush2.msra.mxu0 0.0
    %2420 = vmatprep.subr.mxu0 0.0
    %2421 = vmatpush2.msra.mxu0 0.0
    %2422 = vmatprep.subr.mxu0 0.0
    %2423 = vmatpush2.msra.mxu0 0.0
    %2424 = vmatprep.subr.mxu0 0.0
    %2425 = vmatpush2.msra.mxu0 0.0
    %2426 = vmatprep.subr.mxu0 0.0
    %2427 = vmatpush2.msra.mxu0 0.0
    %2428 = vmatprep.subr.mxu0 0.0
    %2429 = vmatpush2.msra.mxu0 0.0
    %2430 = vmatprep.subr.mxu0 0.0
    %2431 = vmatpush2.msra.mxu0 0.0
    %2432 = vmatprep.subr.mxu0 0.0
    %2433 = vmatpush2.msra.mxu0 0.0
    %2434 = vmatprep.subr.mxu0 0.0
    %2435 = vmatpush2.msra.mxu0 0.0
    %2436 = vmatprep.subr.mxu0 0.0
    %2437 = vmatpush2.msra.mxu0 0.0
    %2438 = vmatprep.subr.mxu0 0.0
    %2439 = vmatpush2.msra.mxu0 0.0
    %2440 = vmatprep.subr.mxu0 0.0
    %2441 = vmatpush2.msra.mxu0 0.0
    %2442 = vmatprep.subr.mxu0 0.0
    %2443 = vmatpush2.msra.mxu0 0.0
    %2444 = vmatprep.subr.mxu0 0.0
    %2445 = vmatpush2.msra.mxu0 0.0
    %2446 = vmatprep.subr.mxu0 0.0
    %2447 = vmatpush2.msra.mxu0 0.0
    %2448 = vmatprep.mubr.f32.mxu0 0.0
    %2449 = vmatmul.mubr.f32.gmra.mxu0 %v2312
    %v2450 = vpop.f32.mrf.mxu0
    %v2451 = vadd.f32 0.0, %v2450
    %v2452 = vpop.f32.mrf.mxu0
    %2453 = vdwg.mxu0
    %v2455 = vcombine.low %v2451, %v2451
    %v2457 = vunpack.c.l.s4 1983009808
    %v2458 = vunpack.c.0.s8 %v2457
    %v2459 = vlaneseq
    %v2460 = vshrl.u32 %v2459, 7
    %v2461 = vsub.s32 %v2458, %v2460
    %v2462 = vrot.slane %v2455, %v2461
    %v2463 = vcombine.low %v2462, %v2462
    %v2465 = vadd.f32 %v2278, %v2463
    %v2466 = vadd.f32 %v2283, %v2463
    %v2467 = vtanh.pop %v2465
    %v2468 = vtanh.pop %v2466
    %v2469 = vlaneseq
    %v2470 = vshrl.u32 %v2469, 7
    %v2471 = vsub.s32 0, %v2470
    %v2472 = vrot.slane %v2294, %v2471
    %v2474 = vsel %vm25, %v2467, 0
    %v2477 = vsel %vm25, %v2468, 0
    %2479 = vmatprep.subr.mxu0 0.0
    %2480 = vmatpush1.msra.mxu0 0.0
    %2481 = vmatprep.subr.mxu0 0.0
    %2482 = vmatpush1.msra.mxu0 0.0
    %2483 = vmatprep.subr.mxu0 0.0
    %2484 = vmatpush1.msra.mxu0 0.0
    %2485 = vmatprep.subr.mxu0 0.0
    %2486 = vmatpush1.msra.mxu0 0.0
    %2487 = vmatprep.subr.mxu0 0.0
    %2488 = vmatpush1.msra.mxu0 0.0
    %2489 = vmatprep.subr.mxu0 0.0
    %2490 = vmatpush1.msra.mxu0 0.0
    %2491 = vmatprep.subr.mxu0 0.0
    %2492 = vmatpush1.msra.mxu0 0.0
    %2493 = vmatprep.subr.mxu0 0.0
    %2494 = vmatpush1.msra.mxu0 0.0
    %2495 = vmatprep.subr.mxu0 0.0
    %2496 = vmatpush1.msra.mxu0 0.0
    %2497 = vmatprep.subr.mxu0 0.0
    %2498 = vmatpush1.msra.mxu0 0.0
    %2499 = vmatprep.subr.mxu0 0.0
    %2500 = vmatpush1.msra.mxu0 0.0
    %2501 = vmatprep.subr.mxu0 0.0
    %2502 = vmatpush1.msra.mxu0 0.0
    %2503 = vmatprep.subr.mxu0 0.0
    %2504 = vmatpush1.msra.mxu0 %v2293
    %2505 = vmatprep.subr.mxu0 0.0
    %2506 = vmatpush1.msra.mxu0 %v2292
    %2507 = vmatprep.subr.mxu0 0.0
    %2508 = vmatpush1.msra.mxu0 %v2291
    %2509 = vmatprep.subr.mxu0 0.0
    %2510 = vmatpush1.msra.mxu0 %v2290
    %2511 = vmatprep.subr.mxu0 0.0
    %2512 = vmatpush2.msra.mxu0 0.0
    %2513 = vmatprep.subr.mxu0 0.0
    %2514 = vmatpush2.msra.mxu0 0.0
    %2515 = vmatprep.subr.mxu0 0.0
    %2516 = vmatpush2.msra.mxu0 0.0
    %2517 = vmatprep.subr.mxu0 0.0
    %2518 = vmatpush2.msra.mxu0 0.0
    %2519 = vmatprep.subr.mxu0 0.0
    %2520 = vmatpush2.msra.mxu0 0.0
    %2521 = vmatprep.subr.mxu0 0.0
    %2522 = vmatpush2.msra.mxu0 0.0
    %2523 = vmatprep.subr.mxu0 0.0
    %2524 = vmatpush2.msra.mxu0 0.0
    %2525 = vmatprep.subr.mxu0 0.0
    %2526 = vmatpush2.msra.mxu0 0.0
    %2527 = vmatprep.subr.mxu0 0.0
    %2528 = vmatpush2.msra.mxu0 0.0
    %2529 = vmatprep.subr.mxu0 0.0
    %2530 = vmatpush2.msra.mxu0 0.0
    %2531 = vmatprep.subr.mxu0 0.0
    %2532 = vmatpush2.msra.mxu0 0.0
    %2533 = vmatprep.subr.mxu0 0.0
    %2534 = vmatpush2.msra.mxu0 0.0
    %2535 = vmatprep.subr.mxu0 0.0
    %2536 = vmatpush2.msra.mxu0 0.0
    %2537 = vmatprep.subr.mxu0 0.0
    %2538 = vmatpush2.msra.mxu0 0.0
    %2539 = vmatprep.subr.mxu0 0.0
    %2540 = vmatpush2.msra.mxu0 0.0
    %2541 = vmatprep.subr.mxu0 0.0
    %2542 = vmatpush2.msra.mxu0 0.0
    %2543 = vmatprep.mubr.f32.mxu0 0.0
    %2544 = vmatmul.mubr.f32.gmra.mxu0 %v2474
    %v2545 = vpop.f32.mrf.mxu0
    %v2546 = vadd.f32 %v2472, %v2545
    %v2547 = vpop.f32.mrf.mxu0
    %2548 = vmatprep.mubr.f32.mxu0 0.0
    %2549 = vmatmul.mubr.f32.gmra.mxu0 %v2477
    %v2550 = vpop.f32.mrf.mxu0
    %v2551 = vadd.f32 %v2472, %v2550
    %v2552 = vpop.f32.mrf.mxu0
    %2553 = vdwg.mxu0
    %v2554 = vmax.f32 %v2546, 0.0
    %v2555 = vmax.f32 %v2551, 0.0
    %v2558 = vcombine.high %v2554, %v2554
    %v2560 = vunpack.c.l.s4 1983009808
    %v2561 = vunpack.c.0.s8 %v2560
    %v2562 = vlaneseq
    %v2563 = vshrl.u32 %v2562, 7
    %v2564 = vsub.s32 %v2561, %v2563
    %v2565 = vrot.slane %v2554, %v2564
    %v2567 = vunpack.c.l.s4 1983009808
    %v2568 = vunpack.c.0.s8 %v2567
    %v2569 = vlaneseq
    %v2570 = vshrl.u32 %v2569, 7
    %v2571 = vsub.s32 %v2568, %v2570
    %v2572 = vrot.slane %v2558, %v2571
    %v2573 = vcombine.high %v2565, %v2565
    %v2574 = vcombine.high %v2572, %v2572
    %v2575 = vcombine.high %v2555, %v2555
    %v2577 = vunpack.c.l.s4 1983009808
    %v2578 = vunpack.c.0.s8 %v2577
    %v2579 = vlaneseq
    %v2580 = vshrl.u32 %v2579, 7
    %v2581 = vsub.s32 %v2578, %v2580
    %v2582 = vrot.slane %v2555, %v2581
    %v2584 = vunpack.c.l.s4 1983009808
    %v2585 = vunpack.c.0.s8 %v2584
    %v2586 = vlaneseq
    %v2587 = vshrl.u32 %v2586, 7
    %v2588 = vsub.s32 %v2585, %v2587
    %v2589 = vrot.slane %v2575, %v2588
    %v2590 = vcombine.high %v2582, %v2582
    %v2591 = vcombine.high %v2589, %v2589
    %vm2600 = vcmask 1024
    %v2601 = vsel %vm2600, %v2565, -inf
    %v2602 = vsel %vm2600, %v2573, -inf
    %v2603 = vsel %vm2600, %v2572, -inf
    %v2604 = vsel %vm2600, %v2574, -inf
    %v2605 = vsel %vm2600, %v2582, -inf
    %v2606 = vmax.f32 %v2601, %v2605
    %v2607 = vsel %vm2600, %v2590, -inf
    %v2608 = vmax.f32 %v2602, %v2607
    %v2609 = vsel %vm2600, %v2589, -inf
    %v2610 = vmax.f32 %v2603, %v2609
    %v2611 = vsel %vm2600, %v2591, -inf
    %v2612 = vmax.f32 %v2604, %v2611
    %v2613 = vmax.f32 %v2606, %v2608
    %v2614 = vmax.f32 %v2610, %v2612
    %v2615 = vmax.f32 %v2613, %v2614
    %v2616 = vsub.f32 %v2565, %v2615
    %v2617 = vsub.f32 %v2573, %v2615
    %v2618 = vsub.f32 %v2572, %v2615
    %v2619 = vsub.f32 %v2574, %v2615
    %v2620 = vsub.f32 %v2582, %v2615
    %v2621 = vsub.f32 %v2590, %v2615
    %v2622 = vsub.f32 %v2589, %v2615
    %v2623 = vsub.f32 %v2591, %v2615
    %v2624 = vmul.f32 %v2616, 1.442695
    %v2625 = vpow.pop %v2624
    %v2626 = vmul.f32 %v2617, 1.442695
    %v2627 = vpow.pop %v2626
    %v2628 = vmul.f32 %v2618, 1.442695
    %v2629 = vpow.pop %v2628
    %v2630 = vmul.f32 %v2619, 1.442695
    %v2631 = vpow.pop %v2630
    %v2632 = vmul.f32 %v2620, 1.442695
    %v2633 = vpow.pop %v2632
    %v2634 = vmul.f32 %v2621, 1.442695
    %v2635 = vpow.pop %v2634
    %v2636 = vmul.f32 %v2622, 1.442695
    %v2637 = vpow.pop %v2636
    %v2638 = vmul.f32 %v2623, 1.442695
    %v2639 = vpow.pop %v2638
    %v2640 = vsel %vm2600, %v2625, 0.0
    %v2641 = vsel %vm2600, %v2627, 0.0
    %v2642 = vadd.f32 %v2640, %v2641
    %v2643 = vsel %vm2600, %v2629, 0.0
    %v2644 = vadd.f32 %v2642, %v2643
    %v2645 = vsel %vm2600, %v2631, 0.0
    %v2646 = vadd.f32 %v2644, %v2645
    %v2647 = vsel %vm2600, %v2633, 0.0
    %v2648 = vadd.f32 %v2646, %v2647
    %v2649 = vsel %vm2600, %v2635, 0.0
    %v2650 = vadd.f32 %v2648, %v2649
    %v2651 = vsel %vm2600, %v2637, 0.0
    %v2652 = vadd.f32 %v2650, %v2651
    %v2653 = vsel %vm2600, %v2639, 0.0
    %v2654 = vadd.f32 %v2652, %v2653
    %v2655 = vrcp.pop %v2654
    %v2656 = vmul.f32 %v2625, %v2655
    %v2657 = vmul.f32 %v2627, %v2655
    %v2658 = vmul.f32 %v2629, %v2655
    %v2659 = vmul.f32 %v2631, %v2655
    %v2660 = vmul.f32 %v2633, %v2655
    %v2661 = vmul.f32 %v2635, %v2655
    %v2662 = vmul.f32 %v2637, %v2655
    %v2663 = vmul.f32 %v2639, %v2655
    %2665 = vset.pattern.permute.xlu0 0
    %2666 = vperm.xlu0 %2665, %v2656
    %v2667 = vpop.permute.xlu0 %2666
    %v2670 = vunpack.c.l.s4 269488144
    %v2671 = vunpack.c.0.s8 %v2670
    %v2672 = vlaneseq
    %v2673 = vshrl.u32 %v2672, 7
    %v2674 = vsub.s32 %v2671, %v2673
    %v2675 = vrot.slane %v2667, %v2674
    %2677 = vset.pattern.permute.xlu0 0
    %2678 = vperm.xlu0 %2677, %v2657
    %v2679 = vpop.permute.xlu0 %2678
    %v2682 = vunpack.c.l.s4 269488144
    %v2683 = vunpack.c.0.s8 %v2682
    %v2684 = vlaneseq
    %v2685 = vshrl.u32 %v2684, 7
    %v2686 = vsub.s32 %v2683, %v2685
    %v2687 = vrot.slane %v2679, %v2686
    %2689 = vset.pattern.permute.xlu0 0
    %2690 = vperm.xlu0 %2689, %v2658
    %v2691 = vpop.permute.xlu0 %2690
    %v2694 = vunpack.c.l.s4 269488144
    %v2695 = vunpack.c.0.s8 %v2694
    %v2696 = vlaneseq
    %v2697 = vshrl.u32 %v2696, 7
    %v2698 = vsub.s32 %v2695, %v2697
    %v2699 = vrot.slane %v2691, %v2698
    %2701 = vset.pattern.permute.xlu0 0
    %2702 = vperm.xlu0 %2701, %v2659
    %v2703 = vpop.permute.xlu0 %2702
    %v2706 = vunpack.c.l.s4 269488144
    %v2707 = vunpack.c.0.s8 %v2706
    %v2708 = vlaneseq
    %v2709 = vshrl.u32 %v2708, 7
    %v2710 = vsub.s32 %v2707, %v2709
    %v2711 = vrot.slane %v2703, %v2710
    %2713 = vset.pattern.permute.xlu0 0
    %2714 = vperm.xlu0 %2713, %v2660
    %v2715 = vpop.permute.xlu0 %2714
    %v2718 = vunpack.c.l.s4 269488144
    %v2719 = vunpack.c.0.s8 %v2718
    %v2720 = vlaneseq
    %v2721 = vshrl.u32 %v2720, 7
    %v2722 = vsub.s32 %v2719, %v2721
    %v2723 = vrot.slane %v2715, %v2722
    %2725 = vset.pattern.permute.xlu0 0
    %2726 = vperm.xlu0 %2725, %v2661
    %v2727 = vpop.permute.xlu0 %2726
    %v2730 = vunpack.c.l.s4 269488144
    %v2731 = vunpack.c.0.s8 %v2730
    %v2732 = vlaneseq
    %v2733 = vshrl.u32 %v2732, 7
    %v2734 = vsub.s32 %v2731, %v2733
    %v2735 = vrot.slane %v2727, %v2734
    %2737 = vset.pattern.permute.xlu0 0
    %2738 = vperm.xlu0 %2737, %v2662
    %v2739 = vpop.permute.xlu0 %2738
    %v2742 = vunpack.c.l.s4 269488144
    %v2743 = vunpack.c.0.s8 %v2742
    %v2744 = vlaneseq
    %v2745 = vshrl.u32 %v2744, 7
    %v2746 = vsub.s32 %v2743, %v2745
    %v2747 = vrot.slane %v2739, %v2746
    %2749 = vset.pattern.permute.xlu0 0
    %2750 = vperm.xlu0 %2749, %v2663
    %v2751 = vpop.permute.xlu0 %2750
    %v2754 = vunpack.c.l.s4 269488144
    %v2755 = vunpack.c.0.s8 %v2754
    %v2756 = vlaneseq
    %v2757 = vshrl.u32 %v2756, 7
    %v2758 = vsub.s32 %v2755, %v2757
    %v2759 = vrot.slane %v2751, %v2758
    %v2760 = vmul.f32 %v2675, %v2159
    %v2761 = vmul.f32 %v2687, %v2167
    %v2762 = vmul.f32 %v2699, %v2166
    %v2763 = vmul.f32 %v2711, %v2168
    %v2764 = vmul.f32 %v2723, %v2176
    %v2765 = vmul.f32 %v2735, %v2184
    %v2766 = vmul.f32 %v2747, %v2183
    %v2767 = vmul.f32 %v2759, %v2185
    %vm2768 = vcmask 517120
    %v2769 = vsel %vm2768, %v2760, 0.0
    %v2770 = vsel %vm2768, %v2761, 0.0
    %v2771 = vadd.f32 %v2769, %v2770
    %v2772 = vsel %vm2768, %v2762, 0.0
    %v2773 = vadd.f32 %v2771, %v2772
    %v2774 = vsel %vm2768, %v2763, 0.0
    %v2775 = vadd.f32 %v2773, %v2774
    %v2776 = vsel %vm2768, %v2764, 0.0
    %v2777 = vadd.f32 %v2775, %v2776
    %v2778 = vsel %vm2768, %v2765, 0.0
    %v2779 = vadd.f32 %v2777, %v2778
    %v2780 = vsel %vm2768, %v2766, 0.0
    %v2781 = vadd.f32 %v2779, %v2780
    %v2782 = vsel %vm2768, %v2767, 0.0
    %v2783 = vadd.f32 %v2781, %v2782
    %v2785 = vsel %vm162, %v2783, 0
    %2787 = vmatprep.subr.mxu0 0.0
    %2788 = vmatpush1.msra.mxu0 0.0
    %2789 = vmatprep.subr.mxu0 0.0
    %2790 = vmatpush1.msra.mxu0 0.0
    %2791 = vmatprep.subr.mxu0 0.0
    %2792 = vmatpush1.msra.mxu0 0.0
    %2793 = vmatprep.subr.mxu0 0.0
    %2794 = vmatpush1.msra.mxu0 0.0
    %2795 = vmatprep.subr.mxu0 0.0
    %2796 = vmatpush1.msra.mxu0 0.0
    %2797 = vmatprep.subr.mxu0 0.0
    %2798 = vmatpush1.msra.mxu0 0.0
    %2799 = vmatprep.subr.mxu0 0.0
    %2800 = vmatpush1.msra.mxu0 0.0
    %2801 = vmatprep.subr.mxu0 0.0
    %2802 = vmatpush1.msra.mxu0 0.0
    %2803 = vmatprep.subr.mxu0 0.0
    %2804 = vmatpush1.msra.mxu0 %v2302
    %2805 = vmatprep.subr.mxu0 0.0
    %2806 = vmatpush1.msra.mxu0 %v2301
    %2807 = vmatprep.subr.mxu0 0.0
    %2808 = vmatpush1.msra.mxu0 %v2300
    %2809 = vmatprep.subr.mxu0 0.0
    %2810 = vmatpush1.msra.mxu0 %v2299
    %2811 = vmatprep.subr.mxu0 0.0
    %2812 = vmatpush1.msra.mxu0 %v2298
    %2813 = vmatprep.subr.mxu0 0.0
    %2814 = vmatpush1.msra.mxu0 %v2297
    %2815 = vmatprep.subr.mxu0 0.0
    %2816 = vmatpush1.msra.mxu0 %v2296
    %2817 = vmatprep.subr.mxu0 0.0
    %2818 = vmatpush1.msra.mxu0 %v2295
    %2819 = vmatprep.subr.mxu0 0.0
    %2820 = vmatpush2.msra.mxu0 0.0
    %2821 = vmatprep.subr.mxu0 0.0
    %2822 = vmatpush2.msra.mxu0 0.0
    %2823 = vmatprep.subr.mxu0 0.0
    %2824 = vmatpush2.msra.mxu0 0.0
    %2825 = vmatprep.subr.mxu0 0.0
    %2826 = vmatpush2.msra.mxu0 0.0
    %2827 = vmatprep.subr.mxu0 0.0
    %2828 = vmatpush2.msra.mxu0 0.0
    %2829 = vmatprep.subr.mxu0 0.0
    %2830 = vmatpush2.msra.mxu0 0.0
    %2831 = vmatprep.subr.mxu0 0.0
    %2832 = vmatpush2.msra.mxu0 0.0
    %2833 = vmatprep.subr.mxu0 0.0
    %2834 = vmatpush2.msra.mxu0 0.0
    %2835 = vmatprep.subr.mxu0 0.0
    %2836 = vmatpush2.msra.mxu0 0.0
    %2837 = vmatprep.subr.mxu0 0.0
    %2838 = vmatpush2.msra.mxu0 0.0
    %2839 = vmatprep.subr.mxu0 0.0
    %2840 = vmatpush2.msra.mxu0 0.0
    %2841 = vmatprep.subr.mxu0 0.0
    %2842 = vmatpush2.msra.mxu0 0.0
    %2843 = vmatprep.subr.mxu0 0.0
    %2844 = vmatpush2.msra.mxu0 0.0
    %2845 = vmatprep.subr.mxu0 0.0
    %2846 = vmatpush2.msra.mxu0 0.0
    %2847 = vmatprep.subr.mxu0 0.0
    %2848 = vmatpush2.msra.mxu0 0.0
    %2849 = vmatprep.subr.mxu0 0.0
    %2850 = vmatpush2.msra.mxu0 0.0
    %2851 = vmatprep.mubr.f32.mxu0 0.0
    %2852 = vmatmul.mubr.f32.gmra.mxu0 %v2785
    %v2853 = vpop.f32.mrf.mxu0
    %v2854 = vadd.f32 %v2381, %v2853
    %v2855 = vpop.f32.mrf.mxu0
    %2856 = vdwg.mxu0
    %v2857 = vxor.u32 %v2854, 2147483648
    %v2858 = vmul.f32 %v2857, 1.442695
    %v2859 = vpow.pop %v2858
    %v2860 = vadd.f32 %v2859, 1.0
    %v2861 = vrcp.pop %v2860
    %v2862 = vmul.f32 1.0, %v2861
    %v2863 = vtanh.pop %v2854
    %v2864 = vmul.f32 %v2862, 0.0
    %2866 = vrot.lane.b32.xlu0 %v2863, 32
    %v2867 = vpop.permute.xlu0 %2866
    %v2869 = vmul.f32 %v2862, %v2867
    %2871 = vrot.lane.b32.xlu0 %v2869, 32
    %v2872 = vpop.permute.xlu0 %2871
    %v2874 = vadd.f32 %v2864, %v2872
    %v2875 = vtanh.pop %v2874
    %2877 = vrot.lane.b32.xlu0 %v2875, 32
    %v2878 = vpop.permute.xlu0 %2877
    %v2880 = vmul.f32 %v2862, %v2878
    %2882 = vrot.lane.b32.xlu0 %v2880, 64
    %v2883 = vpop.permute.xlu0 %2882
    %v2884 = vsel %vm25, %v2883, 0
    %2886 = vmatprep.subr.mxu0 0.0
    %2887 = vmatpush1.msra.mxu0 0.0
    %2888 = vmatprep.subr.mxu0 0.0
    %2889 = vmatpush1.msra.mxu0 0.0
    %2890 = vmatprep.subr.mxu0 0.0
    %2891 = vmatpush1.msra.mxu0 0.0
    %2892 = vmatprep.subr.mxu0 0.0
    %2893 = vmatpush1.msra.mxu0 0.0
    %2894 = vmatprep.subr.mxu0 0.0
    %2895 = vmatpush1.msra.mxu0 0.0
    %2896 = vmatprep.subr.mxu0 0.0
    %2897 = vmatpush1.msra.mxu0 0.0
    %2898 = vmatprep.subr.mxu0 0.0
    %2899 = vmatpush1.msra.mxu0 0.0
    %2900 = vmatprep.subr.mxu0 0.0
    %2901 = vmatpush1.msra.mxu0 0.0
    %2902 = vmatprep.subr.mxu0 0.0
    %2903 = vmatpush1.msra.mxu0 0.0
    %2904 = vmatprep.subr.mxu0 0.0
    %2905 = vmatpush1.msra.mxu0 0.0
    %2906 = vmatprep.subr.mxu0 0.0
    %2907 = vmatpush1.msra.mxu0 0.0
    %2908 = vmatprep.subr.mxu0 0.0
    %2909 = vmatpush1.msra.mxu0 0.0
    %2910 = vmatprep.subr.mxu0 0.0
    %2911 = vmatpush1.msra.mxu0 %v2306
    %2912 = vmatprep.subr.mxu0 0.0
    %2913 = vmatpush1.msra.mxu0 %v2305
    %2914 = vmatprep.subr.mxu0 0.0
    %2915 = vmatpush1.msra.mxu0 %v2304
    %2916 = vmatprep.subr.mxu0 0.0
    %2917 = vmatpush1.msra.mxu0 %v2303
    %2918 = vmatprep.subr.mxu0 0.0
    %2919 = vmatpush2.msra.mxu0 0.0
    %2920 = vmatprep.subr.mxu0 0.0
    %2921 = vmatpush2.msra.mxu0 0.0
    %2922 = vmatprep.subr.mxu0 0.0
    %2923 = vmatpush2.msra.mxu0 0.0
    %2924 = vmatprep.subr.mxu0 0.0
    %2925 = vmatpush2.msra.mxu0 0.0
    %2926 = vmatprep.subr.mxu0 0.0
    %2927 = vmatpush2.msra.mxu0 0.0
    %2928 = vmatprep.subr.mxu0 0.0
    %2929 = vmatpush2.msra.mxu0 0.0
    %2930 = vmatprep.subr.mxu0 0.0
    %2931 = vmatpush2.msra.mxu0 0.0
    %2932 = vmatprep.subr.mxu0 0.0
    %2933 = vmatpush2.msra.mxu0 0.0
    %2934 = vmatprep.subr.mxu0 0.0
    %2935 = vmatpush2.msra.mxu0 0.0
    %2936 = vmatprep.subr.mxu0 0.0
    %2937 = vmatpush2.msra.mxu0 0.0
    %2938 = vmatprep.subr.mxu0 0.0
    %2939 = vmatpush2.msra.mxu0 0.0
    %2940 = vmatprep.subr.mxu0 0.0
    %2941 = vmatpush2.msra.mxu0 0.0
    %2942 = vmatprep.subr.mxu0 0.0
    %2943 = vmatpush2.msra.mxu0 0.0
    %2944 = vmatprep.subr.mxu0 0.0
    %2945 = vmatpush2.msra.mxu0 0.0
    %2946 = vmatprep.subr.mxu0 0.0
    %2947 = vmatpush2.msra.mxu0 0.0
    %2948 = vmatprep.subr.mxu0 0.0
    %2949 = vmatpush2.msra.mxu0 0.0
    %2950 = vmatprep.mubr.f32.mxu0 0.0
    %2951 = vmatmul.mubr.f32.gmra.mxu0 %v2884
    %v2952 = vpop.f32.mrf.mxu0
    %v2953 = vadd.f32 %v2311, %v2952
    %v2954 = vpop.f32.mrf.mxu0
    %2955 = vdwg.mxu0
    %2956 = vmatprep.subr.mxu0 0.0
    %2957 = vmatpush1.msra.mxu0 0.0
    %2958 = vmatprep.subr.mxu0 0.0
    %2959 = vmatpush1.msra.mxu0 0.0
    %2960 = vmatprep.subr.mxu0 0.0
    %2961 = vmatpush1.msra.mxu0 0.0
    %2962 = vmatprep.subr.mxu0 0.0
    %2963 = vmatpush1.msra.mxu0 0.0
    %2964 = vmatprep.subr.mxu0 0.0
    %2965 = vmatpush1.msra.mxu0 0.0
    %2966 = vmatprep.subr.mxu0 0.0
    %2967 = vmatpush1.msra.mxu0 0.0
    %2968 = vmatprep.subr.mxu0 0.0
    %2969 = vmatpush1.msra.mxu0 0.0
    %2970 = vmatprep.subr.mxu0 0.0
    %2971 = vmatpush1.msra.mxu0 0.0
    %2972 = vmatprep.subr.mxu0 0.0
    %2973 = vmatpush1.msra.mxu0 0.0
    %2974 = vmatprep.subr.mxu0 0.0
    %2975 = vmatpush1.msra.mxu0 0.0
    %2976 = vmatprep.subr.mxu0 0.0
    %2977 = vmatpush1.msra.mxu0 0.0
    %2978 = vmatprep.subr.mxu0 0.0
    %2979 = vmatpush1.msra.mxu0 0.0
    %2980 = vmatprep.subr.mxu0 0.0
    %2981 = vmatpush1.msra.mxu0 %v2289
    %2982 = vmatprep.subr.mxu0 0.0
    %2983 = vmatpush1.msra.mxu0 %v2288
    %2984 = vmatprep.subr.mxu0 0.0
    %2985 = vmatpush1.msra.mxu0 %v2287
    %2986 = vmatprep.subr.mxu0 0.0
    %2987 = vmatpush1.msra.mxu0 %v2286
    %2988 = vmatprep.subr.mxu0 0.0
    %2989 = vmatpush2.msra.mxu0 0.0
    %2990 = vmatprep.subr.mxu0 0.0
    %2991 = vmatpush2.msra.mxu0 0.0
    %2992 = vmatprep.subr.mxu0 0.0
    %2993 = vmatpush2.msra.mxu0 0.0
    %2994 = vmatprep.subr.mxu0 0.0
    %2995 = vmatpush2.msra.mxu0 0.0
    %2996 = vmatprep.subr.mxu0 0.0
    %2997 = vmatpush2.msra.mxu0 0.0
    %2998 = vmatprep.subr.mxu0 0.0
    %2999 = vmatpush2.msra.mxu0 0.0
    %3000 = vmatprep.subr.mxu0 0.0
    %3001 = vmatpush2.msra.mxu0 0.0
    %3002 = vmatprep.subr.mxu0 0.0
    %3003 = vmatpush2.msra.mxu0 0.0
    %3004 = vmatprep.subr.mxu0 0.0
    %3005 = vmatpush2.msra.mxu0 0.0
    %3006 = vmatprep.subr.mxu0 0.0
    %3007 = vmatpush2.msra.mxu0 0.0
    %3008 = vmatprep.subr.mxu0 0.0
    %3009 = vmatpush2.msra.mxu0 0.0
    %3010 = vmatprep.subr.mxu0 0.0
    %3011 = vmatpush2.msra.mxu0 0.0
    %3012 = vmatprep.subr.mxu0 0.0
    %3013 = vmatpush2.msra.mxu0 0.0
    %3014 = vmatprep.subr.mxu0 0.0
    %3015 = vmatpush2.msra.mxu0 0.0
    %3016 = vmatprep.subr.mxu0 0.0
    %3017 = vmatpush2.msra.mxu0 0.0
    %3018 = vmatprep.subr.mxu0 0.0
    %3019 = vmatpush2.msra.mxu0 0.0
    %3020 = vmatprep.mubr.f32.mxu0 0.0
    %3021 = vmatmul.mubr.f32.gmra.mxu0 %v2884
    %v3022 = vpop.f32.mrf.mxu0
    %v3023 = vadd.f32 0.0, %v3022
    %v3024 = vpop.f32.mrf.mxu0
    %3025 = vdwg.mxu0
    %v3027 = vcombine.low %v3023, %v3023
    %v3029 = vunpack.c.l.s4 1983009808
    %v3030 = vunpack.c.0.s8 %v3029
    %v3031 = vlaneseq
    %v3032 = vshrl.u32 %v3031, 7
    %v3033 = vsub.s32 %v3030, %v3032
    %v3034 = vrot.slane %v3027, %v3033
    %v3035 = vcombine.low %v3034, %v3034
    %v3037 = vadd.f32 %v2278, %v3035
    %v3038 = vadd.f32 %v2283, %v3035
    %v3039 = vtanh.pop %v3037
    %v3040 = vtanh.pop %v3038
    %v3042 = vsel %vm25, %v3039, 0
    %v3045 = vsel %vm25, %v3040, 0
    %3047 = vmatprep.subr.mxu0 0.0
    %3048 = vmatpush1.msra.mxu0 0.0
    %3049 = vmatprep.subr.mxu0 0.0
    %3050 = vmatpush1.msra.mxu0 0.0
    %3051 = vmatprep.subr.mxu0 0.0
    %3052 = vmatpush1.msra.mxu0 0.0
    %3053 = vmatprep.subr.mxu0 0.0
    %3054 = vmatpush1.msra.mxu0 0.0
    %3055 = vmatprep.subr.mxu0 0.0
    %3056 = vmatpush1.msra.mxu0 0.0
    %3057 = vmatprep.subr.mxu0 0.0
    %3058 = vmatpush1.msra.mxu0 0.0
    %3059 = vmatprep.subr.mxu0 0.0
    %3060 = vmatpush1.msra.mxu0 0.0
    %3061 = vmatprep.subr.mxu0 0.0
    %3062 = vmatpush1.msra.mxu0 0.0
    %3063 = vmatprep.subr.mxu0 0.0
    %3064 = vmatpush1.msra.mxu0 0.0
    %3065 = vmatprep.subr.mxu0 0.0
    %3066 = vmatpush1.msra.mxu0 0.0
    %3067 = vmatprep.subr.mxu0 0.0
    %3068 = vmatpush1.msra.mxu0 0.0
    %3069 = vmatprep.subr.mxu0 0.0
    %3070 = vmatpush1.msra.mxu0 0.0
    %3071 = vmatprep.subr.mxu0 0.0
    %3072 = vmatpush1.msra.mxu0 %v2293
    %3073 = vmatprep.subr.mxu0 0.0
    %3074 = vmatpush1.msra.mxu0 %v2292
    %3075 = vmatprep.subr.mxu0 0.0
    %3076 = vmatpush1.msra.mxu0 %v2291
    %3077 = vmatprep.subr.mxu0 0.0
    %3078 = vmatpush1.msra.mxu0 %v2290
    %3079 = vmatprep.subr.mxu0 0.0
    %3080 = vmatpush2.msra.mxu0 0.0
    %3081 = vmatprep.subr.mxu0 0.0
    %3082 = vmatpush2.msra.mxu0 0.0
    %3083 = vmatprep.subr.mxu0 0.0
    %3084 = vmatpush2.msra.mxu0 0.0
    %3085 = vmatprep.subr.mxu0 0.0
    %3086 = vmatpush2.msra.mxu0 0.0
    %3087 = vmatprep.subr.mxu0 0.0
    %3088 = vmatpush2.msra.mxu0 0.0
    %3089 = vmatprep.subr.mxu0 0.0
    %3090 = vmatpush2.msra.mxu0 0.0
    %3091 = vmatprep.subr.mxu0 0.0
    %3092 = vmatpush2.msra.mxu0 0.0
    %3093 = vmatprep.subr.mxu0 0.0
    %3094 = vmatpush2.msra.mxu0 0.0
    %3095 = vmatprep.subr.mxu0 0.0
    %3096 = vmatpush2.msra.mxu0 0.0
    %3097 = vmatprep.subr.mxu0 0.0
    %3098 = vmatpush2.msra.mxu0 0.0
    %3099 = vmatprep.subr.mxu0 0.0
    %3100 = vmatpush2.msra.mxu0 0.0
    %3101 = vmatprep.subr.mxu0 0.0
    %3102 = vmatpush2.msra.mxu0 0.0
    %3103 = vmatprep.subr.mxu0 0.0
    %3104 = vmatpush2.msra.mxu0 0.0
    %3105 = vmatprep.subr.mxu0 0.0
    %3106 = vmatpush2.msra.mxu0 0.0
    %3107 = vmatprep.subr.mxu0 0.0
    %3108 = vmatpush2.msra.mxu0 0.0
    %3109 = vmatprep.subr.mxu0 0.0
    %3110 = vmatpush2.msra.mxu0 0.0
    %3111 = vmatprep.mubr.f32.mxu0 0.0
    %3112 = vmatmul.mubr.f32.gmra.mxu0 %v3042
    %v3113 = vpop.f32.mrf.mxu0
    %v3114 = vadd.f32 %v2472, %v3113
    %v3115 = vpop.f32.mrf.mxu0
    %3116 = vmatprep.mubr.f32.mxu0 0.0
    %3117 = vmatmul.mubr.f32.gmra.mxu0 %v3045
    %v3118 = vpop.f32.mrf.mxu0
    %v3119 = vadd.f32 %v2472, %v3118
    %v3120 = vpop.f32.mrf.mxu0
    %3121 = vdwg.mxu0
    %v3122 = vmax.f32 %v3114, 0.0
    %v3123 = vmax.f32 %v3119, 0.0
    %v3126 = vcombine.high %v3122, %v3122
    %v3128 = vunpack.c.l.s4 1983009808
    %v3129 = vunpack.c.0.s8 %v3128
    %v3130 = vlaneseq
    %v3131 = vshrl.u32 %v3130, 7
    %v3132 = vsub.s32 %v3129, %v3131
    %v3133 = vrot.slane %v3122, %v3132
    %v3135 = vunpack.c.l.s4 1983009808
    %v3136 = vunpack.c.0.s8 %v3135
    %v3137 = vlaneseq
    %v3138 = vshrl.u32 %v3137, 7
    %v3139 = vsub.s32 %v3136, %v3138
    %v3140 = vrot.slane %v3126, %v3139
    %v3141 = vcombine.high %v3133, %v3133
    %v3142 = vcombine.high %v3140, %v3140
    %v3143 = vcombine.high %v3123, %v3123
    %v3145 = vunpack.c.l.s4 1983009808
    %v3146 = vunpack.c.0.s8 %v3145
    %v3147 = vlaneseq
    %v3148 = vshrl.u32 %v3147, 7
    %v3149 = vsub.s32 %v3146, %v3148
    %v3150 = vrot.slane %v3123, %v3149
    %v3152 = vunpack.c.l.s4 1983009808
    %v3153 = vunpack.c.0.s8 %v3152
    %v3154 = vlaneseq
    %v3155 = vshrl.u32 %v3154, 7
    %v3156 = vsub.s32 %v3153, %v3155
    %v3157 = vrot.slane %v3143, %v3156
    %v3158 = vcombine.high %v3150, %v3150
    %v3159 = vcombine.high %v3157, %v3157
    %v3168 = vsel %vm2600, %v3133, -inf
    %v3169 = vsel %vm2600, %v3141, -inf
    %v3170 = vsel %vm2600, %v3140, -inf
    %v3171 = vsel %vm2600, %v3142, -inf
    %v3172 = vsel %vm2600, %v3150, -inf
    %v3173 = vmax.f32 %v3168, %v3172
    %v3174 = vsel %vm2600, %v3158, -inf
    %v3175 = vmax.f32 %v3169, %v3174
    %v3176 = vsel %vm2600, %v3157, -inf
    %v3177 = vmax.f32 %v3170, %v3176
    %v3178 = vsel %vm2600, %v3159, -inf
    %v3179 = vmax.f32 %v3171, %v3178
    %v3180 = vmax.f32 %v3173, %v3175
    %v3181 = vmax.f32 %v3177, %v3179
    %v3182 = vmax.f32 %v3180, %v3181
    %v3183 = vsub.f32 %v3133, %v3182
    %v3184 = vsub.f32 %v3141, %v3182
    %v3185 = vsub.f32 %v3140, %v3182
    %v3186 = vsub.f32 %v3142, %v3182
    %v3187 = vsub.f32 %v3150, %v3182
    %v3188 = vsub.f32 %v3158, %v3182
    %v3189 = vsub.f32 %v3157, %v3182
    %v3190 = vsub.f32 %v3159, %v3182
    %v3191 = vmul.f32 %v3183, 1.442695
    %v3192 = vpow.pop %v3191
    %v3193 = vmul.f32 %v3184, 1.442695
    %v3194 = vpow.pop %v3193
    %v3195 = vmul.f32 %v3185, 1.442695
    %v3196 = vpow.pop %v3195
    %v3197 = vmul.f32 %v3186, 1.442695
    %v3198 = vpow.pop %v3197
    %v3199 = vmul.f32 %v3187, 1.442695
    %v3200 = vpow.pop %v3199
    %v3201 = vmul.f32 %v3188, 1.442695
    %v3202 = vpow.pop %v3201
    %v3203 = vmul.f32 %v3189, 1.442695
    %v3204 = vpow.pop %v3203
    %v3205 = vmul.f32 %v3190, 1.442695
    %v3206 = vpow.pop %v3205
    %v3207 = vsel %vm2600, %v3192, 0.0
    %v3208 = vsel %vm2600, %v3194, 0.0
    %v3209 = vadd.f32 %v3207, %v3208
    %v3210 = vsel %vm2600, %v3196, 0.0
    %v3211 = vadd.f32 %v3209, %v3210
    %v3212 = vsel %vm2600, %v3198, 0.0
    %v3213 = vadd.f32 %v3211, %v3212
    %v3214 = vsel %vm2600, %v3200, 0.0
    %v3215 = vadd.f32 %v3213, %v3214
    %v3216 = vsel %vm2600, %v3202, 0.0
    %v3217 = vadd.f32 %v3215, %v3216
    %v3218 = vsel %vm2600, %v3204, 0.0
    %v3219 = vadd.f32 %v3217, %v3218
    %v3220 = vsel %vm2600, %v3206, 0.0
    %v3221 = vadd.f32 %v3219, %v3220
    %v3222 = vrcp.pop %v3221
    %v3223 = vmul.f32 %v3192, %v3222
    %v3224 = vmul.f32 %v3194, %v3222
    %v3225 = vmul.f32 %v3196, %v3222
    %v3226 = vmul.f32 %v3198, %v3222
    %v3227 = vmul.f32 %v3200, %v3222
    %v3228 = vmul.f32 %v3202, %v3222
    %v3229 = vmul.f32 %v3204, %v3222
    %v3230 = vmul.f32 %v3206, %v3222
    %3232 = vset.pattern.permute.xlu0 0
    %3233 = vperm.xlu0 %3232, %v3223
    %v3234 = vpop.permute.xlu0 %3233
    %v3237 = vunpack.c.l.s4 269488144
    %v3238 = vunpack.c.0.s8 %v3237
    %v3239 = vlaneseq
    %v3240 = vshrl.u32 %v3239, 7
    %v3241 = vsub.s32 %v3238, %v3240
    %v3242 = vrot.slane %v3234, %v3241
    %3244 = vset.pattern.permute.xlu0 0
    %3245 = vperm.xlu0 %3244, %v3224
    %v3246 = vpop.permute.xlu0 %3245
    %v3249 = vunpack.c.l.s4 269488144
    %v3250 = vunpack.c.0.s8 %v3249
    %v3251 = vlaneseq
    %v3252 = vshrl.u32 %v3251, 7
    %v3253 = vsub.s32 %v3250, %v3252
    %v3254 = vrot.slane %v3246, %v3253
    %3256 = vset.pattern.permute.xlu0 0
    %3257 = vperm.xlu0 %3256, %v3225
    %v3258 = vpop.permute.xlu0 %3257
    %v3261 = vunpack.c.l.s4 269488144
    %v3262 = vunpack.c.0.s8 %v3261
    %v3263 = vlaneseq
    %v3264 = vshrl.u32 %v3263, 7
    %v3265 = vsub.s32 %v3262, %v3264
    %v3266 = vrot.slane %v3258, %v3265
    %3268 = vset.pattern.permute.xlu0 0
    %3269 = vperm.xlu0 %3268, %v3226
    %v3270 = vpop.permute.xlu0 %3269
    %v3273 = vunpack.c.l.s4 269488144
    %v3274 = vunpack.c.0.s8 %v3273
    %v3275 = vlaneseq
    %v3276 = vshrl.u32 %v3275, 7
    %v3277 = vsub.s32 %v3274, %v3276
    %v3278 = vrot.slane %v3270, %v3277
    %3280 = vset.pattern.permute.xlu0 0
    %3281 = vperm.xlu0 %3280, %v3227
    %v3282 = vpop.permute.xlu0 %3281
    %v3285 = vunpack.c.l.s4 269488144
    %v3286 = vunpack.c.0.s8 %v3285
    %v3287 = vlaneseq
    %v3288 = vshrl.u32 %v3287, 7
    %v3289 = vsub.s32 %v3286, %v3288
    %v3290 = vrot.slane %v3282, %v3289
    %3292 = vset.pattern.permute.xlu0 0
    %3293 = vperm.xlu0 %3292, %v3228
    %v3294 = vpop.permute.xlu0 %3293
    %v3297 = vunpack.c.l.s4 269488144
    %v3298 = vunpack.c.0.s8 %v3297
    %v3299 = vlaneseq
    %v3300 = vshrl.u32 %v3299, 7
    %v3301 = vsub.s32 %v3298, %v3300
    %v3302 = vrot.slane %v3294, %v3301
    %3304 = vset.pattern.permute.xlu0 0
    %3305 = vperm.xlu0 %3304, %v3229
    %v3306 = vpop.permute.xlu0 %3305
    %v3309 = vunpack.c.l.s4 269488144
    %v3310 = vunpack.c.0.s8 %v3309
    %v3311 = vlaneseq
    %v3312 = vshrl.u32 %v3311, 7
    %v3313 = vsub.s32 %v3310, %v3312
    %v3314 = vrot.slane %v3306, %v3313
    %3316 = vset.pattern.permute.xlu0 0
    %3317 = vperm.xlu0 %3316, %v3230
    %v3318 = vpop.permute.xlu0 %3317
    %v3321 = vunpack.c.l.s4 269488144
    %v3322 = vunpack.c.0.s8 %v3321
    %v3323 = vlaneseq
    %v3324 = vshrl.u32 %v3323, 7
    %v3325 = vsub.s32 %v3322, %v3324
    %v3326 = vrot.slane %v3318, %v3325
    %v3327 = vmul.f32 %v3242, %v2159
    %v3328 = vmul.f32 %v3254, %v2167
    %v3329 = vmul.f32 %v3266, %v2166
    %v3330 = vmul.f32 %v3278, %v2168
    %v3331 = vmul.f32 %v3290, %v2176
    %v3332 = vmul.f32 %v3302, %v2184
    %v3333 = vmul.f32 %v3314, %v2183
    %v3334 = vmul.f32 %v3326, %v2185
    %v3335 = vsel %vm2768, %v3327, 0.0
    %v3336 = vsel %vm2768, %v3328, 0.0
    %v3337 = vadd.f32 %v3335, %v3336
    %v3338 = vsel %vm2768, %v3329, 0.0
    %v3339 = vadd.f32 %v3337, %v3338
    %v3340 = vsel %vm2768, %v3330, 0.0
    %v3341 = vadd.f32 %v3339, %v3340
    %v3342 = vsel %vm2768, %v3331, 0.0
    %v3343 = vadd.f32 %v3341, %v3342
    %v3344 = vsel %vm2768, %v3332, 0.0
    %v3345 = vadd.f32 %v3343, %v3344
    %v3346 = vsel %vm2768, %v3333, 0.0
    %v3347 = vadd.f32 %v3345, %v3346
    %v3348 = vsel %vm2768, %v3334, 0.0
    %v3349 = vadd.f32 %v3347, %v3348
    %v3351 = vsel %vm162, %v3349, 0
    %3353 = vmatprep.subr.mxu0 0.0
    %3354 = vmatpush1.msra.mxu0 0.0
    %3355 = vmatprep.subr.mxu0 0.0
    %3356 = vmatpush1.msra.mxu0 0.0
    %3357 = vmatprep.subr.mxu0 0.0
    %3358 = vmatpush1.msra.mxu0 0.0
    %3359 = vmatprep.subr.mxu0 0.0
    %3360 = vmatpush1.msra.mxu0 0.0
    %3361 = vmatprep.subr.mxu0 0.0
    %3362 = vmatpush1.msra.mxu0 0.0
    %3363 = vmatprep.subr.mxu0 0.0
    %3364 = vmatpush1.msra.mxu0 0.0
    %3365 = vmatprep.subr.mxu0 0.0
    %3366 = vmatpush1.msra.mxu0 0.0
    %3367 = vmatprep.subr.mxu0 0.0
    %3368 = vmatpush1.msra.mxu0 0.0
    %3369 = vmatprep.subr.mxu0 0.0
    %3370 = vmatpush1.msra.mxu0 %v2302
    %3371 = vmatprep.subr.mxu0 0.0
    %3372 = vmatpush1.msra.mxu0 %v2301
    %3373 = vmatprep.subr.mxu0 0.0
    %3374 = vmatpush1.msra.mxu0 %v2300
    %3375 = vmatprep.subr.mxu0 0.0
    %3376 = vmatpush1.msra.mxu0 %v2299
    %3377 = vmatprep.subr.mxu0 0.0
    %3378 = vmatpush1.msra.mxu0 %v2298
    %3379 = vmatprep.subr.mxu0 0.0
    %3380 = vmatpush1.msra.mxu0 %v2297
    %3381 = vmatprep.subr.mxu0 0.0
    %3382 = vmatpush1.msra.mxu0 %v2296
    %3383 = vmatprep.subr.mxu0 0.0
    %3384 = vmatpush1.msra.mxu0 %v2295
    %3385 = vmatprep.subr.mxu0 0.0
    %3386 = vmatpush2.msra.mxu0 0.0
    %3387 = vmatprep.subr.mxu0 0.0
    %3388 = vmatpush2.msra.mxu0 0.0
    %3389 = vmatprep.subr.mxu0 0.0
    %3390 = vmatpush2.msra.mxu0 0.0
    %3391 = vmatprep.subr.mxu0 0.0
    %3392 = vmatpush2.msra.mxu0 0.0
    %3393 = vmatprep.subr.mxu0 0.0
    %3394 = vmatpush2.msra.mxu0 0.0
    %3395 = vmatprep.subr.mxu0 0.0
    %3396 = vmatpush2.msra.mxu0 0.0
    %3397 = vmatprep.subr.mxu0 0.0
    %3398 = vmatpush2.msra.mxu0 0.0
    %3399 = vmatprep.subr.mxu0 0.0
    %3400 = vmatpush2.msra.mxu0 0.0
    %3401 = vmatprep.subr.mxu0 0.0
    %3402 = vmatpush2.msra.mxu0 0.0
    %3403 = vmatprep.subr.mxu0 0.0
    %3404 = vmatpush2.msra.mxu0 0.0
    %3405 = vmatprep.subr.mxu0 0.0
    %3406 = vmatpush2.msra.mxu0 0.0
    %3407 = vmatprep.subr.mxu0 0.0
    %3408 = vmatpush2.msra.mxu0 0.0
    %3409 = vmatprep.subr.mxu0 0.0
    %3410 = vmatpush2.msra.mxu0 0.0
    %3411 = vmatprep.subr.mxu0 0.0
    %3412 = vmatpush2.msra.mxu0 0.0
    %3413 = vmatprep.subr.mxu0 0.0
    %3414 = vmatpush2.msra.mxu0 0.0
    %3415 = vmatprep.subr.mxu0 0.0
    %3416 = vmatpush2.msra.mxu0 0.0
    %3417 = vmatprep.mubr.f32.mxu0 0.0
    %3418 = vmatmul.mubr.f32.gmra.mxu0 %v3351
    %v3419 = vpop.f32.mrf.mxu0
    %v3420 = vadd.f32 %v2953, %v3419
    %v3421 = vpop.f32.mrf.mxu0
    %3422 = vdwg.mxu0
    %v3423 = vxor.u32 %v3420, 2147483648
    %v3424 = vmul.f32 %v3423, 1.442695
    %v3425 = vpow.pop %v3424
    %v3426 = vadd.f32 %v3425, 1.0
    %v3427 = vrcp.pop %v3426
    %v3428 = vmul.f32 1.0, %v3427
    %v3429 = vtanh.pop %v3420
    %v3430 = vmul.f32 %v3428, %v2874
    %3432 = vrot.lane.b32.xlu0 %v3429, 32
    %v3433 = vpop.permute.xlu0 %3432
    %v3435 = vmul.f32 %v3428, %v3433
    %3437 = vrot.lane.b32.xlu0 %v3435, 32
    %v3438 = vpop.permute.xlu0 %3437
    %v3440 = vadd.f32 %v3430, %v3438
    %v3441 = vtanh.pop %v3440
    %3443 = vrot.lane.b32.xlu0 %v3441, 32
    %v3444 = vpop.permute.xlu0 %3443
    %v3446 = vmul.f32 %v3428, %v3444
    %3448 = vrot.lane.b32.xlu0 %v3446, 64
    %v3449 = vpop.permute.xlu0 %3448
    %v3450 = vsel %vm25, %v3449, 0
    %3452 = vmatprep.subr.mxu0 0.0
    %3453 = vmatpush1.msra.mxu0 0.0
    %3454 = vmatprep.subr.mxu0 0.0
    %3455 = vmatpush1.msra.mxu0 0.0
    %3456 = vmatprep.subr.mxu0 0.0
    %3457 = vmatpush1.msra.mxu0 0.0
    %3458 = vmatprep.subr.mxu0 0.0
    %3459 = vmatpush1.msra.mxu0 0.0
    %3460 = vmatprep.subr.mxu0 0.0
    %3461 = vmatpush1.msra.mxu0 0.0
    %3462 = vmatprep.subr.mxu0 0.0
    %3463 = vmatpush1.msra.mxu0 0.0
    %3464 = vmatprep.subr.mxu0 0.0
    %3465 = vmatpush1.msra.mxu0 0.0
    %3466 = vmatprep.subr.mxu0 0.0
    %3467 = vmatpush1.msra.mxu0 0.0
    %3468 = vmatprep.subr.mxu0 0.0
    %3469 = vmatpush1.msra.mxu0 0.0
    %3470 = vmatprep.subr.mxu0 0.0
    %3471 = vmatpush1.msra.mxu0 0.0
    %3472 = vmatprep.subr.mxu0 0.0
    %3473 = vmatpush1.msra.mxu0 0.0
    %3474 = vmatprep.subr.mxu0 0.0
    %3475 = vmatpush1.msra.mxu0 0.0
    %3476 = vmatprep.subr.mxu0 0.0
    %3477 = vmatpush1.msra.mxu0 %v2306
    %3478 = vmatprep.subr.mxu0 0.0
    %3479 = vmatpush1.msra.mxu0 %v2305
    %3480 = vmatprep.subr.mxu0 0.0
    %3481 = vmatpush1.msra.mxu0 %v2304
    %3482 = vmatprep.subr.mxu0 0.0
    %3483 = vmatpush1.msra.mxu0 %v2303
    %3484 = vmatprep.subr.mxu0 0.0
    %3485 = vmatpush2.msra.mxu0 0.0
    %3486 = vmatprep.subr.mxu0 0.0
    %3487 = vmatpush2.msra.mxu0 0.0
    %3488 = vmatprep.subr.mxu0 0.0
    %3489 = vmatpush2.msra.mxu0 0.0
    %3490 = vmatprep.subr.mxu0 0.0
    %3491 = vmatpush2.msra.mxu0 0.0
    %3492 = vmatprep.subr.mxu0 0.0
    %3493 = vmatpush2.msra.mxu0 0.0
    %3494 = vmatprep.subr.mxu0 0.0
    %3495 = vmatpush2.msra.mxu0 0.0
    %3496 = vmatprep.subr.mxu0 0.0
    %3497 = vmatpush2.msra.mxu0 0.0
    %3498 = vmatprep.subr.mxu0 0.0
    %3499 = vmatpush2.msra.mxu0 0.0
    %3500 = vmatprep.subr.mxu0 0.0
    %3501 = vmatpush2.msra.mxu0 0.0
    %3502 = vmatprep.subr.mxu0 0.0
    %3503 = vmatpush2.msra.mxu0 0.0
    %3504 = vmatprep.subr.mxu0 0.0
    %3505 = vmatpush2.msra.mxu0 0.0
    %3506 = vmatprep.subr.mxu0 0.0
    %3507 = vmatpush2.msra.mxu0 0.0
    %3508 = vmatprep.subr.mxu0 0.0
    %3509 = vmatpush2.msra.mxu0 0.0
    %3510 = vmatprep.subr.mxu0 0.0
    %3511 = vmatpush2.msra.mxu0 0.0
    %3512 = vmatprep.subr.mxu0 0.0
    %3513 = vmatpush2.msra.mxu0 0.0
    %3514 = vmatprep.subr.mxu0 0.0
    %3515 = vmatpush2.msra.mxu0 0.0
    %3516 = vmatprep.mubr.f32.mxu0 0.0
    %3517 = vmatmul.mubr.f32.gmra.mxu0 %v3450
    %v3518 = vpop.f32.mrf.mxu0
    %v3519 = vadd.f32 %v2311, %v3518
    %v3520 = vpop.f32.mrf.mxu0
    %3521 = vdwg.mxu0
    %3522 = vmatprep.subr.mxu0 0.0
    %3523 = vmatpush1.msra.mxu0 0.0
    %3524 = vmatprep.subr.mxu0 0.0
    %3525 = vmatpush1.msra.mxu0 0.0
    %3526 = vmatprep.subr.mxu0 0.0
    %3527 = vmatpush1.msra.mxu0 0.0
    %3528 = vmatprep.subr.mxu0 0.0
    %3529 = vmatpush1.msra.mxu0 0.0
    %3530 = vmatprep.subr.mxu0 0.0
    %3531 = vmatpush1.msra.mxu0 0.0
    %3532 = vmatprep.subr.mxu0 0.0
    %3533 = vmatpush1.msra.mxu0 0.0
    %3534 = vmatprep.subr.mxu0 0.0
    %3535 = vmatpush1.msra.mxu0 0.0
    %3536 = vmatprep.subr.mxu0 0.0
    %3537 = vmatpush1.msra.mxu0 0.0
    %3538 = vmatprep.subr.mxu0 0.0
    %3539 = vmatpush1.msra.mxu0 0.0
    %3540 = vmatprep.subr.mxu0 0.0
    %3541 = vmatpush1.msra.mxu0 0.0
    %3542 = vmatprep.subr.mxu0 0.0
    %3543 = vmatpush1.msra.mxu0 0.0
    %3544 = vmatprep.subr.mxu0 0.0
    %3545 = vmatpush1.msra.mxu0 0.0
    %3546 = vmatprep.subr.mxu0 0.0
    %3547 = vmatpush1.msra.mxu0 %v2289
    %3548 = vmatprep.subr.mxu0 0.0
    %3549 = vmatpush1.msra.mxu0 %v2288
    %3550 = vmatprep.subr.mxu0 0.0
    %3551 = vmatpush1.msra.mxu0 %v2287
    %3552 = vmatprep.subr.mxu0 0.0
    %3553 = vmatpush1.msra.mxu0 %v2286
    %3554 = vmatprep.subr.mxu0 0.0
    %3555 = vmatpush2.msra.mxu0 0.0
    %3556 = vmatprep.subr.mxu0 0.0
    %3557 = vmatpush2.msra.mxu0 0.0
    %3558 = vmatprep.subr.mxu0 0.0
    %3559 = vmatpush2.msra.mxu0 0.0
    %3560 = vmatprep.subr.mxu0 0.0
    %3561 = vmatpush2.msra.mxu0 0.0
    %3562 = vmatprep.subr.mxu0 0.0
    %3563 = vmatpush2.msra.mxu0 0.0
    %3564 = vmatprep.subr.mxu0 0.0
    %3565 = vmatpush2.msra.mxu0 0.0
    %3566 = vmatprep.subr.mxu0 0.0
    %3567 = vmatpush2.msra.mxu0 0.0
    %3568 = vmatprep.subr.mxu0 0.0
    %3569 = vmatpush2.msra.mxu0 0.0
    %3570 = vmatprep.subr.mxu0 0.0
    %3571 = vmatpush2.msra.mxu0 0.0
    %3572 = vmatprep.subr.mxu0 0.0
    %3573 = vmatpush2.msra.mxu0 0.0
    %3574 = vmatprep.subr.mxu0 0.0
    %3575 = vmatpush2.msra.mxu0 0.0
    %3576 = vmatprep.subr.mxu0 0.0
    %3577 = vmatpush2.msra.mxu0 0.0
    %3578 = vmatprep.subr.mxu0 0.0
    %3579 = vmatpush2.msra.mxu0 0.0
    %3580 = vmatprep.subr.mxu0 0.0
    %3581 = vmatpush2.msra.mxu0 0.0
    %3582 = vmatprep.subr.mxu0 0.0
    %3583 = vmatpush2.msra.mxu0 0.0
    %3584 = vmatprep.subr.mxu0 0.0
    %3585 = vmatpush2.msra.mxu0 0.0
    %3586 = vmatprep.mubr.f32.mxu0 0.0
    %3587 = vmatmul.mubr.f32.gmra.mxu0 %v3450
    %v3588 = vpop.f32.mrf.mxu0
    %v3589 = vadd.f32 0.0, %v3588
    %v3590 = vpop.f32.mrf.mxu0
    %3591 = vdwg.mxu0
    %v3593 = vcombine.low %v3589, %v3589
    %v3595 = vunpack.c.l.s4 1983009808
    %v3596 = vunpack.c.0.s8 %v3595
    %v3597 = vlaneseq
    %v3598 = vshrl.u32 %v3597, 7
    %v3599 = vsub.s32 %v3596, %v3598
    %v3600 = vrot.slane %v3593, %v3599
    %v3601 = vcombine.low %v3600, %v3600
    %v3603 = vadd.f32 %v2278, %v3601
    %v3604 = vadd.f32 %v2283, %v3601
    %v3605 = vtanh.pop %v3603
    %v3606 = vtanh.pop %v3604
    %v3608 = vsel %vm25, %v3605, 0
    %v3611 = vsel %vm25, %v3606, 0
    %3613 = vmatprep.subr.mxu0 0.0
    %3614 = vmatpush1.msra.mxu0 0.0
    %3615 = vmatprep.subr.mxu0 0.0
    %3616 = vmatpush1.msra.mxu0 0.0
    %3617 = vmatprep.subr.mxu0 0.0
    %3618 = vmatpush1.msra.mxu0 0.0
    %3619 = vmatprep.subr.mxu0 0.0
    %3620 = vmatpush1.msra.mxu0 0.0
    %3621 = vmatprep.subr.mxu0 0.0
    %3622 = vmatpush1.msra.mxu0 0.0
    %3623 = vmatprep.subr.mxu0 0.0
    %3624 = vmatpush1.msra.mxu0 0.0
    %3625 = vmatprep.subr.mxu0 0.0
    %3626 = vmatpush1.msra.mxu0 0.0
    %3627 = vmatprep.subr.mxu0 0.0
    %3628 = vmatpush1.msra.mxu0 0.0
    %3629 = vmatprep.subr.mxu0 0.0
    %3630 = vmatpush1.msra.mxu0 0.0
    %3631 = vmatprep.subr.mxu0 0.0
    %3632 = vmatpush1.msra.mxu0 0.0
    %3633 = vmatprep.subr.mxu0 0.0
    %3634 = vmatpush1.msra.mxu0 0.0
    %3635 = vmatprep.subr.mxu0 0.0
    %3636 = vmatpush1.msra.mxu0 0.0
    %3637 = vmatprep.subr.mxu0 0.0
    %3638 = vmatpush1.msra.mxu0 %v2293
    %3639 = vmatprep.subr.mxu0 0.0
    %3640 = vmatpush1.msra.mxu0 %v2292
    %3641 = vmatprep.subr.mxu0 0.0
    %3642 = vmatpush1.msra.mxu0 %v2291
    %3643 = vmatprep.subr.mxu0 0.0
    %3644 = vmatpush1.msra.mxu0 %v2290
    %3645 = vmatprep.subr.mxu0 0.0
    %3646 = vmatpush2.msra.mxu0 0.0
    %3647 = vmatprep.subr.mxu0 0.0
    %3648 = vmatpush2.msra.mxu0 0.0
    %3649 = vmatprep.subr.mxu0 0.0
    %3650 = vmatpush2.msra.mxu0 0.0
    %3651 = vmatprep.subr.mxu0 0.0
    %3652 = vmatpush2.msra.mxu0 0.0
    %3653 = vmatprep.subr.mxu0 0.0
    %3654 = vmatpush2.msra.mxu0 0.0
    %3655 = vmatprep.subr.mxu0 0.0
    %3656 = vmatpush2.msra.mxu0 0.0
    %3657 = vmatprep.subr.mxu0 0.0
    %3658 = vmatpush2.msra.mxu0 0.0
    %3659 = vmatprep.subr.mxu0 0.0
    %3660 = vmatpush2.msra.mxu0 0.0
    %3661 = vmatprep.subr.mxu0 0.0
    %3662 = vmatpush2.msra.mxu0 0.0
    %3663 = vmatprep.subr.mxu0 0.0
    %3664 = vmatpush2.msra.mxu0 0.0
    %3665 = vmatprep.subr.mxu0 0.0
    %3666 = vmatpush2.msra.mxu0 0.0
    %3667 = vmatprep.subr.mxu0 0.0
    %3668 = vmatpush2.msra.mxu0 0.0
    %3669 = vmatprep.subr.mxu0 0.0
    %3670 = vmatpush2.msra.mxu0 0.0
    %3671 = vmatprep.subr.mxu0 0.0
    %3672 = vmatpush2.msra.mxu0 0.0
    %3673 = vmatprep.subr.mxu0 0.0
    %3674 = vmatpush2.msra.mxu0 0.0
    %3675 = vmatprep.subr.mxu0 0.0
    %3676 = vmatpush2.msra.mxu0 0.0
    %3677 = vmatprep.mubr.f32.mxu0 0.0
    %3678 = vmatmul.mubr.f32.gmra.mxu0 %v3608
    %v3679 = vpop.f32.mrf.mxu0
    %v3680 = vadd.f32 %v2472, %v3679
    %v3681 = vpop.f32.mrf.mxu0
    %3682 = vmatprep.mubr.f32.mxu0 0.0
    %3683 = vmatmul.mubr.f32.gmra.mxu0 %v3611
    %v3684 = vpop.f32.mrf.mxu0
    %v3685 = vadd.f32 %v2472, %v3684
    %v3686 = vpop.f32.mrf.mxu0
    %3687 = vdwg.mxu0
    %v3688 = vmax.f32 %v3680, 0.0
    %v3689 = vmax.f32 %v3685, 0.0
    %v3692 = vcombine.high %v3688, %v3688
    %v3694 = vunpack.c.l.s4 1983009808
    %v3695 = vunpack.c.0.s8 %v3694
    %v3696 = vlaneseq
    %v3697 = vshrl.u32 %v3696, 7
    %v3698 = vsub.s32 %v3695, %v3697
    %v3699 = vrot.slane %v3688, %v3698
    %v3701 = vunpack.c.l.s4 1983009808
    %v3702 = vunpack.c.0.s8 %v3701
    %v3703 = vlaneseq
    %v3704 = vshrl.u32 %v3703, 7
    %v3705 = vsub.s32 %v3702, %v3704
    %v3706 = vrot.slane %v3692, %v3705
    %v3707 = vcombine.high %v3699, %v3699
    %v3708 = vcombine.high %v3706, %v3706
    %v3709 = vcombine.high %v3689, %v3689
    %v3711 = vunpack.c.l.s4 1983009808
    %v3712 = vunpack.c.0.s8 %v3711
    %v3713 = vlaneseq
    %v3714 = vshrl.u32 %v3713, 7
    %v3715 = vsub.s32 %v3712, %v3714
    %v3716 = vrot.slane %v3689, %v3715
    %v3718 = vunpack.c.l.s4 1983009808
    %v3719 = vunpack.c.0.s8 %v3718
    %v3720 = vlaneseq
    %v3721 = vshrl.u32 %v3720, 7
    %v3722 = vsub.s32 %v3719, %v3721
    %v3723 = vrot.slane %v3709, %v3722
    %v3724 = vcombine.high %v3716, %v3716
    %v3725 = vcombine.high %v3723, %v3723
    %v3734 = vsel %vm2600, %v3699, -inf
    %v3735 = vsel %vm2600, %v3707, -inf
    %v3736 = vsel %vm2600, %v3706, -inf
    %v3737 = vsel %vm2600, %v3708, -inf
    %v3738 = vsel %vm2600, %v3716, -inf
    %v3739 = vmax.f32 %v3734, %v3738
    %v3740 = vsel %vm2600, %v3724, -inf
    %v3741 = vmax.f32 %v3735, %v3740
    %v3742 = vsel %vm2600, %v3723, -inf
    %v3743 = vmax.f32 %v3736, %v3742
    %v3744 = vsel %vm2600, %v3725, -inf
    %v3745 = vmax.f32 %v3737, %v3744
    %v3746 = vmax.f32 %v3739, %v3741
    %v3747 = vmax.f32 %v3743, %v3745
    %v3748 = vmax.f32 %v3746, %v3747
    %v3749 = vsub.f32 %v3699, %v3748
    %v3750 = vsub.f32 %v3707, %v3748
    %v3751 = vsub.f32 %v3706, %v3748
    %v3752 = vsub.f32 %v3708, %v3748
    %v3753 = vsub.f32 %v3716, %v3748
    %v3754 = vsub.f32 %v3724, %v3748
    %v3755 = vsub.f32 %v3723, %v3748
    %v3756 = vsub.f32 %v3725, %v3748
    %v3757 = vmul.f32 %v3749, 1.442695
    %v3758 = vpow.pop %v3757
    %v3759 = vmul.f32 %v3750, 1.442695
    %v3760 = vpow.pop %v3759
    %v3761 = vmul.f32 %v3751, 1.442695
    %v3762 = vpow.pop %v3761
    %v3763 = vmul.f32 %v3752, 1.442695
    %v3764 = vpow.pop %v3763
    %v3765 = vmul.f32 %v3753, 1.442695
    %v3766 = vpow.pop %v3765
    %v3767 = vmul.f32 %v3754, 1.442695
    %v3768 = vpow.pop %v3767
    %v3769 = vmul.f32 %v3755, 1.442695
    %v3770 = vpow.pop %v3769
    %v3771 = vmul.f32 %v3756, 1.442695
    %v3772 = vpow.pop %v3771
    %v3773 = vsel %vm2600, %v3758, 0.0
    %v3774 = vsel %vm2600, %v3760, 0.0
    %v3775 = vadd.f32 %v3773, %v3774
    %v3776 = vsel %vm2600, %v3762, 0.0
    %v3777 = vadd.f32 %v3775, %v3776
    %v3778 = vsel %vm2600, %v3764, 0.0
    %v3779 = vadd.f32 %v3777, %v3778
    %v3780 = vsel %vm2600, %v3766, 0.0
    %v3781 = vadd.f32 %v3779, %v3780
    %v3782 = vsel %vm2600, %v3768, 0.0
    %v3783 = vadd.f32 %v3781, %v3782
    %v3784 = vsel %vm2600, %v3770, 0.0
    %v3785 = vadd.f32 %v3783, %v3784
    %v3786 = vsel %vm2600, %v3772, 0.0
    %v3787 = vadd.f32 %v3785, %v3786
    %v3788 = vrcp.pop %v3787
    %v3789 = vmul.f32 %v3758, %v3788
    %v3790 = vmul.f32 %v3760, %v3788
    %v3791 = vmul.f32 %v3762, %v3788
    %v3792 = vmul.f32 %v3764, %v3788
    %v3793 = vmul.f32 %v3766, %v3788
    %v3794 = vmul.f32 %v3768, %v3788
    %v3795 = vmul.f32 %v3770, %v3788
    %v3796 = vmul.f32 %v3772, %v3788
    %3798 = vset.pattern.permute.xlu0 0
    %3799 = vperm.xlu0 %3798, %v3789
    %v3800 = vpop.permute.xlu0 %3799
    %v3803 = vunpack.c.l.s4 269488144
    %v3804 = vunpack.c.0.s8 %v3803
    %v3805 = vlaneseq
    %v3806 = vshrl.u32 %v3805, 7
    %v3807 = vsub.s32 %v3804, %v3806
    %v3808 = vrot.slane %v3800, %v3807
    %3810 = vset.pattern.permute.xlu0 0
    %3811 = vperm.xlu0 %3810, %v3790
    %v3812 = vpop.permute.xlu0 %3811
    %v3815 = vunpack.c.l.s4 269488144
    %v3816 = vunpack.c.0.s8 %v3815
    %v3817 = vlaneseq
    %v3818 = vshrl.u32 %v3817, 7
    %v3819 = vsub.s32 %v3816, %v3818
    %v3820 = vrot.slane %v3812, %v3819
    %3822 = vset.pattern.permute.xlu0 0
    %3823 = vperm.xlu0 %3822, %v3791
    %v3824 = vpop.permute.xlu0 %3823
    %v3827 = vunpack.c.l.s4 269488144
    %v3828 = vunpack.c.0.s8 %v3827
    %v3829 = vlaneseq
    %v3830 = vshrl.u32 %v3829, 7
    %v3831 = vsub.s32 %v3828, %v3830
    %v3832 = vrot.slane %v3824, %v3831
    %3834 = vset.pattern.permute.xlu0 0
    %3835 = vperm.xlu0 %3834, %v3792
    %v3836 = vpop.permute.xlu0 %3835
    %v3839 = vunpack.c.l.s4 269488144
    %v3840 = vunpack.c.0.s8 %v3839
    %v3841 = vlaneseq
    %v3842 = vshrl.u32 %v3841, 7
    %v3843 = vsub.s32 %v3840, %v3842
    %v3844 = vrot.slane %v3836, %v3843
    %3846 = vset.pattern.permute.xlu0 0
    %3847 = vperm.xlu0 %3846, %v3793
    %v3848 = vpop.permute.xlu0 %3847
    %v3851 = vunpack.c.l.s4 269488144
    %v3852 = vunpack.c.0.s8 %v3851
    %v3853 = vlaneseq
    %v3854 = vshrl.u32 %v3853, 7
    %v3855 = vsub.s32 %v3852, %v3854
    %v3856 = vrot.slane %v3848, %v3855
    %3858 = vset.pattern.permute.xlu0 0
    %3859 = vperm.xlu0 %3858, %v3794
    %v3860 = vpop.permute.xlu0 %3859
    %v3863 = vunpack.c.l.s4 269488144
    %v3864 = vunpack.c.0.s8 %v3863
    %v3865 = vlaneseq
    %v3866 = vshrl.u32 %v3865, 7
    %v3867 = vsub.s32 %v3864, %v3866
    %v3868 = vrot.slane %v3860, %v3867
    %3870 = vset.pattern.permute.xlu0 0
    %3871 = vperm.xlu0 %3870, %v3795
    %v3872 = vpop.permute.xlu0 %3871
    %v3875 = vunpack.c.l.s4 269488144
    %v3876 = vunpack.c.0.s8 %v3875
    %v3877 = vlaneseq
    %v3878 = vshrl.u32 %v3877, 7
    %v3879 = vsub.s32 %v3876, %v3878
    %v3880 = vrot.slane %v3872, %v3879
    %3882 = vset.pattern.permute.xlu0 0
    %3883 = vperm.xlu0 %3882, %v3796
    %v3884 = vpop.permute.xlu0 %3883
    %v3887 = vunpack.c.l.s4 269488144
    %v3888 = vunpack.c.0.s8 %v3887
    %v3889 = vlaneseq
    %v3890 = vshrl.u32 %v3889, 7
    %v3891 = vsub.s32 %v3888, %v3890
    %v3892 = vrot.slane %v3884, %v3891
    %v3893 = vmul.f32 %v3808, %v2159
    %v3894 = vmul.f32 %v3820, %v2167
    %v3895 = vmul.f32 %v3832, %v2166
    %v3896 = vmul.f32 %v3844, %v2168
    %v3897 = vmul.f32 %v3856, %v2176
    %v3898 = vmul.f32 %v3868, %v2184
    %v3899 = vmul.f32 %v3880, %v2183
    %v3900 = vmul.f32 %v3892, %v2185
    %v3901 = vsel %vm2768, %v3893, 0.0
    %v3902 = vsel %vm2768, %v3894, 0.0
    %v3903 = vadd.f32 %v3901, %v3902
    %v3904 = vsel %vm2768, %v3895, 0.0
    %v3905 = vadd.f32 %v3903, %v3904
    %v3906 = vsel %vm2768, %v3896, 0.0
    %v3907 = vadd.f32 %v3905, %v3906
    %v3908 = vsel %vm2768, %v3897, 0.0
    %v3909 = vadd.f32 %v3907, %v3908
    %v3910 = vsel %vm2768, %v3898, 0.0
    %v3911 = vadd.f32 %v3909, %v3910
    %v3912 = vsel %vm2768, %v3899, 0.0
    %v3913 = vadd.f32 %v3911, %v3912
    %v3914 = vsel %vm2768, %v3900, 0.0
    %v3915 = vadd.f32 %v3913, %v3914
    %v3917 = vsel %vm162, %v3915, 0
    %3919 = vmatprep.subr.mxu0 0.0
    %3920 = vmatpush1.msra.mxu0 0.0
    %3921 = vmatprep.subr.mxu0 0.0
    %3922 = vmatpush1.msra.mxu0 0.0
    %3923 = vmatprep.subr.mxu0 0.0
    %3924 = vmatpush1.msra.mxu0 0.0
    %3925 = vmatprep.subr.mxu0 0.0
    %3926 = vmatpush1.msra.mxu0 0.0
    %3927 = vmatprep.subr.mxu0 0.0
    %3928 = vmatpush1.msra.mxu0 0.0
    %3929 = vmatprep.subr.mxu0 0.0
    %3930 = vmatpush1.msra.mxu0 0.0
    %3931 = vmatprep.subr.mxu0 0.0
    %3932 = vmatpush1.msra.mxu0 0.0
    %3933 = vmatprep.subr.mxu0 0.0
    %3934 = vmatpush1.msra.mxu0 0.0
    %3935 = vmatprep.subr.mxu0 0.0
    %3936 = vmatpush1.msra.mxu0 %v2302
    %3937 = vmatprep.subr.mxu0 0.0
    %3938 = vmatpush1.msra.mxu0 %v2301
    %3939 = vmatprep.subr.mxu0 0.0
    %3940 = vmatpush1.msra.mxu0 %v2300
    %3941 = vmatprep.subr.mxu0 0.0
    %3942 = vmatpush1.msra.mxu0 %v2299
    %3943 = vmatprep.subr.mxu0 0.0
    %3944 = vmatpush1.msra.mxu0 %v2298
    %3945 = vmatprep.subr.mxu0 0.0
    %3946 = vmatpush1.msra.mxu0 %v2297
    %3947 = vmatprep.subr.mxu0 0.0
    %3948 = vmatpush1.msra.mxu0 %v2296
    %3949 = vmatprep.subr.mxu0 0.0
    %3950 = vmatpush1.msra.mxu0 %v2295
    %3951 = vmatprep.subr.mxu0 0.0
    %3952 = vmatpush2.msra.mxu0 0.0
    %3953 = vmatprep.subr.mxu0 0.0
    %3954 = vmatpush2.msra.mxu0 0.0
    %3955 = vmatprep.subr.mxu0 0.0
    %3956 = vmatpush2.msra.mxu0 0.0
    %3957 = vmatprep.subr.mxu0 0.0
    %3958 = vmatpush2.msra.mxu0 0.0
    %3959 = vmatprep.subr.mxu0 0.0
    %3960 = vmatpush2.msra.mxu0 0.0
    %3961 = vmatprep.subr.mxu0 0.0
    %3962 = vmatpush2.msra.mxu0 0.0
    %3963 = vmatprep.subr.mxu0 0.0
    %3964 = vmatpush2.msra.mxu0 0.0
    %3965 = vmatprep.subr.mxu0 0.0
    %3966 = vmatpush2.msra.mxu0 0.0
    %3967 = vmatprep.subr.mxu0 0.0
    %3968 = vmatpush2.msra.mxu0 0.0
    %3969 = vmatprep.subr.mxu0 0.0
    %3970 = vmatpush2.msra.mxu0 0.0
    %3971 = vmatprep.subr.mxu0 0.0
    %3972 = vmatpush2.msra.mxu0 0.0
    %3973 = vmatprep.subr.mxu0 0.0
    %3974 = vmatpush2.msra.mxu0 0.0
    %3975 = vmatprep.subr.mxu0 0.0
    %3976 = vmatpush2.msra.mxu0 0.0
    %3977 = vmatprep.subr.mxu0 0.0
    %3978 = vmatpush2.msra.mxu0 0.0
    %3979 = vmatprep.subr.mxu0 0.0
    %3980 = vmatpush2.msra.mxu0 0.0
    %3981 = vmatprep.subr.mxu0 0.0
    %3982 = vmatpush2.msra.mxu0 0.0
    %3983 = vmatprep.mubr.f32.mxu0 0.0
    %3984 = vmatmul.mubr.f32.gmra.mxu0 %v3917
    %v3985 = vpop.f32.mrf.mxu0
    %v3986 = vadd.f32 %v3519, %v3985
    %v3987 = vpop.f32.mrf.mxu0
    %3988 = vdwg.mxu0
    %v3989 = vxor.u32 %v3986, 2147483648
    %v3990 = vmul.f32 %v3989, 1.442695
    %v3991 = vpow.pop %v3990
    %v3992 = vadd.f32 %v3991, 1.0
    %v3993 = vrcp.pop %v3992
    %v3994 = vmul.f32 1.0, %v3993
    %v3995 = vtanh.pop %v3986
    %v3996 = vmul.f32 %v3994, %v3440
    %3998 = vrot.lane.b32.xlu0 %v3995, 32
    %v3999 = vpop.permute.xlu0 %3998
    %v4001 = vmul.f32 %v3994, %v3999
    %4003 = vrot.lane.b32.xlu0 %v4001, 32
    %v4004 = vpop.permute.xlu0 %4003
    %v4006 = vadd.f32 %v3996, %v4004
    %v4007 = vtanh.pop %v4006
    %4009 = vrot.lane.b32.xlu0 %v4007, 32
    %v4010 = vpop.permute.xlu0 %4009
    %v4012 = vmul.f32 %v3994, %v4010
    %4014 = vrot.lane.b32.xlu0 %v4012, 64
    %v4015 = vpop.permute.xlu0 %4014
    %v4016 = vsel %vm25, %v4015, 0
    %4018 = vmatprep.subr.mxu0 0.0
    %4019 = vmatpush1.msra.mxu0 0.0
    %4020 = vmatprep.subr.mxu0 0.0
    %4021 = vmatpush1.msra.mxu0 0.0
    %4022 = vmatprep.subr.mxu0 0.0
    %4023 = vmatpush1.msra.mxu0 0.0
    %4024 = vmatprep.subr.mxu0 0.0
    %4025 = vmatpush1.msra.mxu0 0.0
    %4026 = vmatprep.subr.mxu0 0.0
    %4027 = vmatpush1.msra.mxu0 0.0
    %4028 = vmatprep.subr.mxu0 0.0
    %4029 = vmatpush1.msra.mxu0 0.0
    %4030 = vmatprep.subr.mxu0 0.0
    %4031 = vmatpush1.msra.mxu0 0.0
    %4032 = vmatprep.subr.mxu0 0.0
    %4033 = vmatpush1.msra.mxu0 0.0
    %4034 = vmatprep.subr.mxu0 0.0
    %4035 = vmatpush1.msra.mxu0 0.0
    %4036 = vmatprep.subr.mxu0 0.0
    %4037 = vmatpush1.msra.mxu0 0.0
    %4038 = vmatprep.subr.mxu0 0.0
    %4039 = vmatpush1.msra.mxu0 0.0
    %4040 = vmatprep.subr.mxu0 0.0
    %4041 = vmatpush1.msra.mxu0 0.0
    %4042 = vmatprep.subr.mxu0 0.0
    %4043 = vmatpush1.msra.mxu0 %v2306
    %4044 = vmatprep.subr.mxu0 0.0
    %4045 = vmatpush1.msra.mxu0 %v2305
    %4046 = vmatprep.subr.mxu0 0.0
    %4047 = vmatpush1.msra.mxu0 %v2304
    %4048 = vmatprep.subr.mxu0 0.0
    %4049 = vmatpush1.msra.mxu0 %v2303
    %4050 = vmatprep.subr.mxu0 0.0
    %4051 = vmatpush2.msra.mxu0 0.0
    %4052 = vmatprep.subr.mxu0 0.0
    %4053 = vmatpush2.msra.mxu0 0.0
    %4054 = vmatprep.subr.mxu0 0.0
    %4055 = vmatpush2.msra.mxu0 0.0
    %4056 = vmatprep.subr.mxu0 0.0
    %4057 = vmatpush2.msra.mxu0 0.0
    %4058 = vmatprep.subr.mxu0 0.0
    %4059 = vmatpush2.msra.mxu0 0.0
    %4060 = vmatprep.subr.mxu0 0.0
    %4061 = vmatpush2.msra.mxu0 0.0
    %4062 = vmatprep.subr.mxu0 0.0
    %4063 = vmatpush2.msra.mxu0 0.0
    %4064 = vmatprep.subr.mxu0 0.0
    %4065 = vmatpush2.msra.mxu0 0.0
    %4066 = vmatprep.subr.mxu0 0.0
    %4067 = vmatpush2.msra.mxu0 0.0
    %4068 = vmatprep.subr.mxu0 0.0
    %4069 = vmatpush2.msra.mxu0 0.0
    %4070 = vmatprep.subr.mxu0 0.0
    %4071 = vmatpush2.msra.mxu0 0.0
    %4072 = vmatprep.subr.mxu0 0.0
    %4073 = vmatpush2.msra.mxu0 0.0
    %4074 = vmatprep.subr.mxu0 0.0
    %4075 = vmatpush2.msra.mxu0 0.0
    %4076 = vmatprep.subr.mxu0 0.0
    %4077 = vmatpush2.msra.mxu0 0.0
    %4078 = vmatprep.subr.mxu0 0.0
    %4079 = vmatpush2.msra.mxu0 0.0
    %4080 = vmatprep.subr.mxu0 0.0
    %4081 = vmatpush2.msra.mxu0 0.0
    %4082 = vmatprep.mubr.f32.mxu0 0.0
    %4083 = vmatmul.mubr.f32.gmra.mxu0 %v4016
    %v4084 = vpop.f32.mrf.mxu0
    %v4085 = vadd.f32 %v2311, %v4084
    %v4086 = vpop.f32.mrf.mxu0
    %4087 = vdwg.mxu0
    %4088 = vmatprep.subr.mxu0 0.0
    %4089 = vmatpush1.msra.mxu0 0.0
    %4090 = vmatprep.subr.mxu0 0.0
    %4091 = vmatpush1.msra.mxu0 0.0
    %4092 = vmatprep.subr.mxu0 0.0
    %4093 = vmatpush1.msra.mxu0 0.0
    %4094 = vmatprep.subr.mxu0 0.0
    %4095 = vmatpush1.msra.mxu0 0.0
    %4096 = vmatprep.subr.mxu0 0.0
    %4097 = vmatpush1.msra.mxu0 0.0
    %4098 = vmatprep.subr.mxu0 0.0
    %4099 = vmatpush1.msra.mxu0 0.0
    %4100 = vmatprep.subr.mxu0 0.0
    %4101 = vmatpush1.msra.mxu0 0.0
    %4102 = vmatprep.subr.mxu0 0.0
    %4103 = vmatpush1.msra.mxu0 0.0
    %4104 = vmatprep.subr.mxu0 0.0
    %4105 = vmatpush1.msra.mxu0 0.0
    %4106 = vmatprep.subr.mxu0 0.0
    %4107 = vmatpush1.msra.mxu0 0.0
    %4108 = vmatprep.subr.mxu0 0.0
    %4109 = vmatpush1.msra.mxu0 0.0
    %4110 = vmatprep.subr.mxu0 0.0
    %4111 = vmatpush1.msra.mxu0 0.0
    %4112 = vmatprep.subr.mxu0 0.0
    %4113 = vmatpush1.msra.mxu0 %v2289
    %4114 = vmatprep.subr.mxu0 0.0
    %4115 = vmatpush1.msra.mxu0 %v2288
    %4116 = vmatprep.subr.mxu0 0.0
    %4117 = vmatpush1.msra.mxu0 %v2287
    %4118 = vmatprep.subr.mxu0 0.0
    %4119 = vmatpush1.msra.mxu0 %v2286
    %4120 = vmatprep.subr.mxu0 0.0
    %4121 = vmatpush2.msra.mxu0 0.0
    %4122 = vmatprep.subr.mxu0 0.0
    %4123 = vmatpush2.msra.mxu0 0.0
    %4124 = vmatprep.subr.mxu0 0.0
    %4125 = vmatpush2.msra.mxu0 0.0
    %4126 = vmatprep.subr.mxu0 0.0
    %4127 = vmatpush2.msra.mxu0 0.0
    %4128 = vmatprep.subr.mxu0 0.0
    %4129 = vmatpush2.msra.mxu0 0.0
    %4130 = vmatprep.subr.mxu0 0.0
    %4131 = vmatpush2.msra.mxu0 0.0
    %4132 = vmatprep.subr.mxu0 0.0
    %4133 = vmatpush2.msra.mxu0 0.0
    %4134 = vmatprep.subr.mxu0 0.0
    %4135 = vmatpush2.msra.mxu0 0.0
    %4136 = vmatprep.subr.mxu0 0.0
    %4137 = vmatpush2.msra.mxu0 0.0
    %4138 = vmatprep.subr.mxu0 0.0
    %4139 = vmatpush2.msra.mxu0 0.0
    %4140 = vmatprep.subr.mxu0 0.0
    %4141 = vmatpush2.msra.mxu0 0.0
    %4142 = vmatprep.subr.mxu0 0.0
    %4143 = vmatpush2.msra.mxu0 0.0
    %4144 = vmatprep.subr.mxu0 0.0
    %4145 = vmatpush2.msra.mxu0 0.0
    %4146 = vmatprep.subr.mxu0 0.0
    %4147 = vmatpush2.msra.mxu0 0.0
    %4148 = vmatprep.subr.mxu0 0.0
    %4149 = vmatpush2.msra.mxu0 0.0
    %4150 = vmatprep.subr.mxu0 0.0
    %4151 = vmatpush2.msra.mxu0 0.0
    %4152 = vmatprep.mubr.f32.mxu0 0.0
    %4153 = vmatmul.mubr.f32.gmra.mxu0 %v4016
    %v4154 = vpop.f32.mrf.mxu0
    %v4155 = vadd.f32 0.0, %v4154
    %v4156 = vpop.f32.mrf.mxu0
    %4157 = vdwg.mxu0
    %v4159 = vcombine.low %v4155, %v4155
    %v4161 = vunpack.c.l.s4 1983009808
    %v4162 = vunpack.c.0.s8 %v4161
    %v4163 = vlaneseq
    %v4164 = vshrl.u32 %v4163, 7
    %v4165 = vsub.s32 %v4162, %v4164
    %v4166 = vrot.slane %v4159, %v4165
    %v4167 = vcombine.low %v4166, %v4166
    %v4169 = vadd.f32 %v2278, %v4167
    %v4170 = vadd.f32 %v2283, %v4167
    %v4171 = vtanh.pop %v4169
    %v4172 = vtanh.pop %v4170
    %v4174 = vsel %vm25, %v4171, 0
    %v4177 = vsel %vm25, %v4172, 0
    %4179 = vmatprep.subr.mxu0 0.0
    %4180 = vmatpush1.msra.mxu0 0.0
    %4181 = vmatprep.subr.mxu0 0.0
    %4182 = vmatpush1.msra.mxu0 0.0
    %4183 = vmatprep.subr.mxu0 0.0
    %4184 = vmatpush1.msra.mxu0 0.0
    %4185 = vmatprep.subr.mxu0 0.0
    %4186 = vmatpush1.msra.mxu0 0.0
    %4187 = vmatprep.subr.mxu0 0.0
    %4188 = vmatpush1.msra.mxu0 0.0
    %4189 = vmatprep.subr.mxu0 0.0
    %4190 = vmatpush1.msra.mxu0 0.0
    %4191 = vmatprep.subr.mxu0 0.0
    %4192 = vmatpush1.msra.mxu0 0.0
    %4193 = vmatprep.subr.mxu0 0.0
    %4194 = vmatpush1.msra.mxu0 0.0
    %4195 = vmatprep.subr.mxu0 0.0
    %4196 = vmatpush1.msra.mxu0 0.0
    %4197 = vmatprep.subr.mxu0 0.0
    %4198 = vmatpush1.msra.mxu0 0.0
    %4199 = vmatprep.subr.mxu0 0.0
    %4200 = vmatpush1.msra.mxu0 0.0
    %4201 = vmatprep.subr.mxu0 0.0
    %4202 = vmatpush1.msra.mxu0 0.0
    %4203 = vmatprep.subr.mxu0 0.0
    %4204 = vmatpush1.msra.mxu0 %v2293
    %4205 = vmatprep.subr.mxu0 0.0
    %4206 = vmatpush1.msra.mxu0 %v2292
    %4207 = vmatprep.subr.mxu0 0.0
    %4208 = vmatpush1.msra.mxu0 %v2291
    %4209 = vmatprep.subr.mxu0 0.0
    %4210 = vmatpush1.msra.mxu0 %v2290
    %4211 = vmatprep.subr.mxu0 0.0
    %4212 = vmatpush2.msra.mxu0 0.0
    %4213 = vmatprep.subr.mxu0 0.0
    %4214 = vmatpush2.msra.mxu0 0.0
    %4215 = vmatprep.subr.mxu0 0.0
    %4216 = vmatpush2.msra.mxu0 0.0
    %4217 = vmatprep.subr.mxu0 0.0
    %4218 = vmatpush2.msra.mxu0 0.0
    %4219 = vmatprep.subr.mxu0 0.0
    %4220 = vmatpush2.msra.mxu0 0.0
    %4221 = vmatprep.subr.mxu0 0.0
    %4222 = vmatpush2.msra.mxu0 0.0
    %4223 = vmatprep.subr.mxu0 0.0
    %4224 = vmatpush2.msra.mxu0 0.0
    %4225 = vmatprep.subr.mxu0 0.0
    %4226 = vmatpush2.msra.mxu0 0.0
    %4227 = vmatprep.subr.mxu0 0.0
    %4228 = vmatpush2.msra.mxu0 0.0
    %4229 = vmatprep.subr.mxu0 0.0
    %4230 = vmatpush2.msra.mxu0 0.0
    %4231 = vmatprep.subr.mxu0 0.0
    %4232 = vmatpush2.msra.mxu0 0.0
    %4233 = vmatprep.subr.mxu0 0.0
    %4234 = vmatpush2.msra.mxu0 0.0
    %4235 = vmatprep.subr.mxu0 0.0
    %4236 = vmatpush2.msra.mxu0 0.0
    %4237 = vmatprep.subr.mxu0 0.0
    %4238 = vmatpush2.msra.mxu0 0.0
    %4239 = vmatprep.subr.mxu0 0.0
    %4240 = vmatpush2.msra.mxu0 0.0
    %4241 = vmatprep.subr.mxu0 0.0
    %4242 = vmatpush2.msra.mxu0 0.0
    %4243 = vmatprep.mubr.f32.mxu0 0.0
    %4244 = vmatmul.mubr.f32.gmra.mxu0 %v4174
    %v4245 = vpop.f32.mrf.mxu0
    %v4246 = vadd.f32 %v2472, %v4245
    %v4247 = vpop.f32.mrf.mxu0
    %4248 = vmatprep.mubr.f32.mxu0 0.0
    %4249 = vmatmul.mubr.f32.gmra.mxu0 %v4177
    %v4250 = vpop.f32.mrf.mxu0
    %v4251 = vadd.f32 %v2472, %v4250
    %v4252 = vpop.f32.mrf.mxu0
    %4253 = vdwg.mxu0
    %v4254 = vmax.f32 %v4246, 0.0
    %v4255 = vmax.f32 %v4251, 0.0
    %v4258 = vcombine.high %v4254, %v4254
    %v4260 = vunpack.c.l.s4 1983009808
    %v4261 = vunpack.c.0.s8 %v4260
    %v4262 = vlaneseq
    %v4263 = vshrl.u32 %v4262, 7
    %v4264 = vsub.s32 %v4261, %v4263
    %v4265 = vrot.slane %v4254, %v4264
    %v4267 = vunpack.c.l.s4 1983009808
    %v4268 = vunpack.c.0.s8 %v4267
    %v4269 = vlaneseq
    %v4270 = vshrl.u32 %v4269, 7
    %v4271 = vsub.s32 %v4268, %v4270
    %v4272 = vrot.slane %v4258, %v4271
    %v4273 = vcombine.high %v4265, %v4265
    %v4274 = vcombine.high %v4272, %v4272
    %v4275 = vcombine.high %v4255, %v4255
    %v4277 = vunpack.c.l.s4 1983009808
    %v4278 = vunpack.c.0.s8 %v4277
    %v4279 = vlaneseq
    %v4280 = vshrl.u32 %v4279, 7
    %v4281 = vsub.s32 %v4278, %v4280
    %v4282 = vrot.slane %v4255, %v4281
    %v4284 = vunpack.c.l.s4 1983009808
    %v4285 = vunpack.c.0.s8 %v4284
    %v4286 = vlaneseq
    %v4287 = vshrl.u32 %v4286, 7
    %v4288 = vsub.s32 %v4285, %v4287
    %v4289 = vrot.slane %v4275, %v4288
    %v4290 = vcombine.high %v4282, %v4282
    %v4291 = vcombine.high %v4289, %v4289
    %v4300 = vsel %vm2600, %v4265, -inf
    %v4301 = vsel %vm2600, %v4273, -inf
    %v4302 = vsel %vm2600, %v4272, -inf
    %v4303 = vsel %vm2600, %v4274, -inf
    %v4304 = vsel %vm2600, %v4282, -inf
    %v4305 = vmax.f32 %v4300, %v4304
    %v4306 = vsel %vm2600, %v4290, -inf
    %v4307 = vmax.f32 %v4301, %v4306
    %v4308 = vsel %vm2600, %v4289, -inf
    %v4309 = vmax.f32 %v4302, %v4308
    %v4310 = vsel %vm2600, %v4291, -inf
    %v4311 = vmax.f32 %v4303, %v4310
    %v4312 = vmax.f32 %v4305, %v4307
    %v4313 = vmax.f32 %v4309, %v4311
    %v4314 = vmax.f32 %v4312, %v4313
    %v4315 = vsub.f32 %v4265, %v4314
    %v4316 = vsub.f32 %v4273, %v4314
    %v4317 = vsub.f32 %v4272, %v4314
    %v4318 = vsub.f32 %v4274, %v4314
    %v4319 = vsub.f32 %v4282, %v4314
    %v4320 = vsub.f32 %v4290, %v4314
    %v4321 = vsub.f32 %v4289, %v4314
    %v4322 = vsub.f32 %v4291, %v4314
    %v4323 = vmul.f32 %v4315, 1.442695
    %v4324 = vpow.pop %v4323
    %v4325 = vmul.f32 %v4316, 1.442695
    %v4326 = vpow.pop %v4325
    %v4327 = vmul.f32 %v4317, 1.442695
    %v4328 = vpow.pop %v4327
    %v4329 = vmul.f32 %v4318, 1.442695
    %v4330 = vpow.pop %v4329
    %v4331 = vmul.f32 %v4319, 1.442695
    %v4332 = vpow.pop %v4331
    %v4333 = vmul.f32 %v4320, 1.442695
    %v4334 = vpow.pop %v4333
    %v4335 = vmul.f32 %v4321, 1.442695
    %v4336 = vpow.pop %v4335
    %v4337 = vmul.f32 %v4322, 1.442695
    %v4338 = vpow.pop %v4337
    %v4339 = vsel %vm2600, %v4324, 0.0
    %v4340 = vsel %vm2600, %v4326, 0.0
    %v4341 = vadd.f32 %v4339, %v4340
    %v4342 = vsel %vm2600, %v4328, 0.0
    %v4343 = vadd.f32 %v4341, %v4342
    %v4344 = vsel %vm2600, %v4330, 0.0
    %v4345 = vadd.f32 %v4343, %v4344
    %v4346 = vsel %vm2600, %v4332, 0.0
    %v4347 = vadd.f32 %v4345, %v4346
    %v4348 = vsel %vm2600, %v4334, 0.0
    %v4349 = vadd.f32 %v4347, %v4348
    %v4350 = vsel %vm2600, %v4336, 0.0
    %v4351 = vadd.f32 %v4349, %v4350
    %v4352 = vsel %vm2600, %v4338, 0.0
    %v4353 = vadd.f32 %v4351, %v4352
    %v4354 = vrcp.pop %v4353
    %v4355 = vmul.f32 %v4324, %v4354
    %v4356 = vmul.f32 %v4326, %v4354
    %v4357 = vmul.f32 %v4328, %v4354
    %v4358 = vmul.f32 %v4330, %v4354
    %v4359 = vmul.f32 %v4332, %v4354
    %v4360 = vmul.f32 %v4334, %v4354
    %v4361 = vmul.f32 %v4336, %v4354
    %v4362 = vmul.f32 %v4338, %v4354
    %4364 = vset.pattern.permute.xlu0 0
    %4365 = vperm.xlu0 %4364, %v4355
    %v4366 = vpop.permute.xlu0 %4365
    %v4369 = vunpack.c.l.s4 269488144
    %v4370 = vunpack.c.0.s8 %v4369
    %v4371 = vlaneseq
    %v4372 = vshrl.u32 %v4371, 7
    %v4373 = vsub.s32 %v4370, %v4372
    %v4374 = vrot.slane %v4366, %v4373
    %4376 = vset.pattern.permute.xlu0 0
    %4377 = vperm.xlu0 %4376, %v4356
    %v4378 = vpop.permute.xlu0 %4377
    %v4381 = vunpack.c.l.s4 269488144
    %v4382 = vunpack.c.0.s8 %v4381
    %v4383 = vlaneseq
    %v4384 = vshrl.u32 %v4383, 7
    %v4385 = vsub.s32 %v4382, %v4384
    %v4386 = vrot.slane %v4378, %v4385
    %4388 = vset.pattern.permute.xlu0 0
    %4389 = vperm.xlu0 %4388, %v4357
    %v4390 = vpop.permute.xlu0 %4389
    %v4393 = vunpack.c.l.s4 269488144
    %v4394 = vunpack.c.0.s8 %v4393
    %v4395 = vlaneseq
    %v4396 = vshrl.u32 %v4395, 7
    %v4397 = vsub.s32 %v4394, %v4396
    %v4398 = vrot.slane %v4390, %v4397
    %4400 = vset.pattern.permute.xlu0 0
    %4401 = vperm.xlu0 %4400, %v4358
    %v4402 = vpop.permute.xlu0 %4401
    %v4405 = vunpack.c.l.s4 269488144
    %v4406 = vunpack.c.0.s8 %v4405
    %v4407 = vlaneseq
    %v4408 = vshrl.u32 %v4407, 7
    %v4409 = vsub.s32 %v4406, %v4408
    %v4410 = vrot.slane %v4402, %v4409
    %4412 = vset.pattern.permute.xlu0 0
    %4413 = vperm.xlu0 %4412, %v4359
    %v4414 = vpop.permute.xlu0 %4413
    %v4417 = vunpack.c.l.s4 269488144
    %v4418 = vunpack.c.0.s8 %v4417
    %v4419 = vlaneseq
    %v4420 = vshrl.u32 %v4419, 7
    %v4421 = vsub.s32 %v4418, %v4420
    %v4422 = vrot.slane %v4414, %v4421
    %4424 = vset.pattern.permute.xlu0 0
    %4425 = vperm.xlu0 %4424, %v4360
    %v4426 = vpop.permute.xlu0 %4425
    %v4429 = vunpack.c.l.s4 269488144
    %v4430 = vunpack.c.0.s8 %v4429
    %v4431 = vlaneseq
    %v4432 = vshrl.u32 %v4431, 7
    %v4433 = vsub.s32 %v4430, %v4432
    %v4434 = vrot.slane %v4426, %v4433
    %4436 = vset.pattern.permute.xlu0 0
    %4437 = vperm.xlu0 %4436, %v4361
    %v4438 = vpop.permute.xlu0 %4437
    %v4441 = vunpack.c.l.s4 269488144
    %v4442 = vunpack.c.0.s8 %v4441
    %v4443 = vlaneseq
    %v4444 = vshrl.u32 %v4443, 7
    %v4445 = vsub.s32 %v4442, %v4444
    %v4446 = vrot.slane %v4438, %v4445
    %4448 = vset.pattern.permute.xlu0 0
    %4449 = vperm.xlu0 %4448, %v4362
    %v4450 = vpop.permute.xlu0 %4449
    %v4453 = vunpack.c.l.s4 269488144
    %v4454 = vunpack.c.0.s8 %v4453
    %v4455 = vlaneseq
    %v4456 = vshrl.u32 %v4455, 7
    %v4457 = vsub.s32 %v4454, %v4456
    %v4458 = vrot.slane %v4450, %v4457
    %v4459 = vmul.f32 %v4374, %v2159
    %v4460 = vmul.f32 %v4386, %v2167
    %v4461 = vmul.f32 %v4398, %v2166
    %v4462 = vmul.f32 %v4410, %v2168
    %v4463 = vmul.f32 %v4422, %v2176
    %v4464 = vmul.f32 %v4434, %v2184
    %v4465 = vmul.f32 %v4446, %v2183
    %v4466 = vmul.f32 %v4458, %v2185
    %v4467 = vsel %vm2768, %v4459, 0.0
    %v4468 = vsel %vm2768, %v4460, 0.0
    %v4469 = vadd.f32 %v4467, %v4468
    %v4470 = vsel %vm2768, %v4461, 0.0
    %v4471 = vadd.f32 %v4469, %v4470
    %v4472 = vsel %vm2768, %v4462, 0.0
    %v4473 = vadd.f32 %v4471, %v4472
    %v4474 = vsel %vm2768, %v4463, 0.0
    %v4475 = vadd.f32 %v4473, %v4474
    %v4476 = vsel %vm2768, %v4464, 0.0
    %v4477 = vadd.f32 %v4475, %v4476
    %v4478 = vsel %vm2768, %v4465, 0.0
    %v4479 = vadd.f32 %v4477, %v4478
    %v4480 = vsel %vm2768, %v4466, 0.0
    %v4481 = vadd.f32 %v4479, %v4480
    %v4483 = vsel %vm162, %v4481, 0
    %4485 = vmatprep.subr.mxu0 0.0
    %4486 = vmatpush1.msra.mxu0 0.0
    %4487 = vmatprep.subr.mxu0 0.0
    %4488 = vmatpush1.msra.mxu0 0.0
    %4489 = vmatprep.subr.mxu0 0.0
    %4490 = vmatpush1.msra.mxu0 0.0
    %4491 = vmatprep.subr.mxu0 0.0
    %4492 = vmatpush1.msra.mxu0 0.0
    %4493 = vmatprep.subr.mxu0 0.0
    %4494 = vmatpush1.msra.mxu0 0.0
    %4495 = vmatprep.subr.mxu0 0.0
    %4496 = vmatpush1.msra.mxu0 0.0
    %4497 = vmatprep.subr.mxu0 0.0
    %4498 = vmatpush1.msra.mxu0 0.0
    %4499 = vmatprep.subr.mxu0 0.0
    %4500 = vmatpush1.msra.mxu0 0.0
    %4501 = vmatprep.subr.mxu0 0.0
    %4502 = vmatpush1.msra.mxu0 %v2302
    %4503 = vmatprep.subr.mxu0 0.0
    %4504 = vmatpush1.msra.mxu0 %v2301
    %4505 = vmatprep.subr.mxu0 0.0
    %4506 = vmatpush1.msra.mxu0 %v2300
    %4507 = vmatprep.subr.mxu0 0.0
    %4508 = vmatpush1.msra.mxu0 %v2299
    %4509 = vmatprep.subr.mxu0 0.0
    %4510 = vmatpush1.msra.mxu0 %v2298
    %4511 = vmatprep.subr.mxu0 0.0
    %4512 = vmatpush1.msra.mxu0 %v2297
    %4513 = vmatprep.subr.mxu0 0.0
    %4514 = vmatpush1.msra.mxu0 %v2296
    %4515 = vmatprep.subr.mxu0 0.0
    %4516 = vmatpush1.msra.mxu0 %v2295
    %4517 = vmatprep.subr.mxu0 0.0
    %4518 = vmatpush2.msra.mxu0 0.0
    %4519 = vmatprep.subr.mxu0 0.0
    %4520 = vmatpush2.msra.mxu0 0.0
    %4521 = vmatprep.subr.mxu0 0.0
    %4522 = vmatpush2.msra.mxu0 0.0
    %4523 = vmatprep.subr.mxu0 0.0
    %4524 = vmatpush2.msra.mxu0 0.0
    %4525 = vmatprep.subr.mxu0 0.0
    %4526 = vmatpush2.msra.mxu0 0.0
    %4527 = vmatprep.subr.mxu0 0.0
    %4528 = vmatpush2.msra.mxu0 0.0
    %4529 = vmatprep.subr.mxu0 0.0
    %4530 = vmatpush2.msra.mxu0 0.0
    %4531 = vmatprep.subr.mxu0 0.0
    %4532 = vmatpush2.msra.mxu0 0.0
    %4533 = vmatprep.subr.mxu0 0.0
    %4534 = vmatpush2.msra.mxu0 0.0
    %4535 = vmatprep.subr.mxu0 0.0
    %4536 = vmatpush2.msra.mxu0 0.0
    %4537 = vmatprep.subr.mxu0 0.0
    %4538 = vmatpush2.msra.mxu0 0.0
    %4539 = vmatprep.subr.mxu0 0.0
    %4540 = vmatpush2.msra.mxu0 0.0
    %4541 = vmatprep.subr.mxu0 0.0
    %4542 = vmatpush2.msra.mxu0 0.0
    %4543 = vmatprep.subr.mxu0 0.0
    %4544 = vmatpush2.msra.mxu0 0.0
    %4545 = vmatprep.subr.mxu0 0.0
    %4546 = vmatpush2.msra.mxu0 0.0
    %4547 = vmatprep.subr.mxu0 0.0
    %4548 = vmatpush2.msra.mxu0 0.0
    %4549 = vmatprep.mubr.f32.mxu0 0.0
    %4550 = vmatmul.mubr.f32.gmra.mxu0 %v4483
    %v4551 = vpop.f32.mrf.mxu0
    %v4552 = vadd.f32 %v4085, %v4551
    %v4553 = vpop.f32.mrf.mxu0
    %4554 = vdwg.mxu0
    %v4555 = vxor.u32 %v4552, 2147483648
    %v4556 = vmul.f32 %v4555, 1.442695
    %v4557 = vpow.pop %v4556
    %v4558 = vadd.f32 %v4557, 1.0
    %v4559 = vrcp.pop %v4558
    %v4560 = vmul.f32 1.0, %v4559
    %v4561 = vtanh.pop %v4552
    %v4562 = vmul.f32 %v4560, %v4006
    %4564 = vrot.lane.b32.xlu0 %v4561, 32
    %v4565 = vpop.permute.xlu0 %4564
    %v4567 = vmul.f32 %v4560, %v4565
    %4569 = vrot.lane.b32.xlu0 %v4567, 32
    %v4570 = vpop.permute.xlu0 %4569
    %v4572 = vadd.f32 %v4562, %v4570
    %v4573 = vtanh.pop %v4572
    %4575 = vrot.lane.b32.xlu0 %v4573, 32
    %v4576 = vpop.permute.xlu0 %4575
    %v4578 = vmul.f32 %v4560, %v4576
    %v4579 = vrot.slane %v3446, 6
    %v4581 = vrot.slane %v4012, 4
    %v4584 = vrot.slane %v4578, 2
    %v4586 = vsel %vm31, %v2880, %v4579
    %vm4587 = vcmask 1043456
    %v4588 = vsel %vm4587, %v4586, %v4581
    %vm4589 = vcmask 1045504
    %v4590 = vsel %vm4589, %v4588, %v4584
    %v4591 = vld [vmem:[#allocation4 + $0x228] sm:$0xff]
    %v4592 = vld [vmem:[#allocation4 + $0x230] sm:$0xff]
    %v4593 = vld [vmem:[#allocation4 + $0x238] sm:$0xff]
    %v4594 = vld [vmem:[#allocation4 + $0x240] sm:$0xff]
    %v4595 = vld [vmem:[#allocation4 + $0x248] sm:$0x1]
    %v4596 = vlaneseq
    %v4597 = vshrl.u32 %v4596, 7
    %v4598 = vsub.s32 0, %v4597
    %v4599 = vrot.slane %v4595, %v4598
    %4601 = vrot.lane.b32.xlu0 %v4590, 64
    %v4602 = vpop.permute.xlu0 %4601
    %v4603 = vsel %vm25, %v4602, 0
    %4605 = vmatprep.subr.mxu0 0.0
    %4606 = vmatpush1.msra.mxu0 0.0
    %4607 = vmatprep.subr.mxu0 0.0
    %4608 = vmatpush1.msra.mxu0 0.0
    %4609 = vmatprep.subr.mxu0 0.0
    %4610 = vmatpush1.msra.mxu0 0.0
    %4611 = vmatprep.subr.mxu0 0.0
    %4612 = vmatpush1.msra.mxu0 0.0
    %4613 = vmatprep.subr.mxu0 0.0
    %4614 = vmatpush1.msra.mxu0 0.0
    %4615 = vmatprep.subr.mxu0 0.0
    %4616 = vmatpush1.msra.mxu0 0.0
    %4617 = vmatprep.subr.mxu0 0.0
    %4618 = vmatpush1.msra.mxu0 0.0
    %4619 = vmatprep.subr.mxu0 0.0
    %4620 = vmatpush1.msra.mxu0 0.0
    %4621 = vmatprep.subr.mxu0 0.0
    %4622 = vmatpush1.msra.mxu0 0.0
    %4623 = vmatprep.subr.mxu0 0.0
    %4624 = vmatpush1.msra.mxu0 0.0
    %4625 = vmatprep.subr.mxu0 0.0
    %4626 = vmatpush1.msra.mxu0 0.0
    %4627 = vmatprep.subr.mxu0 0.0
    %4628 = vmatpush1.msra.mxu0 0.0
    %4629 = vmatprep.subr.mxu0 0.0
    %4630 = vmatpush1.msra.mxu0 %v4594
    %4631 = vmatprep.subr.mxu0 0.0
    %4632 = vmatpush1.msra.mxu0 %v4593
    %4633 = vmatprep.subr.mxu0 0.0
    %4634 = vmatpush1.msra.mxu0 %v4592
    %4635 = vmatprep.subr.mxu0 0.0
    %4636 = vmatpush1.msra.mxu0 %v4591
    %4637 = vmatprep.subr.mxu0 0.0
    %4638 = vmatpush2.msra.mxu0 0.0
    %4639 = vmatprep.subr.mxu0 0.0
    %4640 = vmatpush2.msra.mxu0 0.0
    %4641 = vmatprep.subr.mxu0 0.0
    %4642 = vmatpush2.msra.mxu0 0.0
    %4643 = vmatprep.subr.mxu0 0.0
    %4644 = vmatpush2.msra.mxu0 0.0
    %4645 = vmatprep.subr.mxu0 0.0
    %4646 = vmatpush2.msra.mxu0 0.0
    %4647 = vmatprep.subr.mxu0 0.0
    %4648 = vmatpush2.msra.mxu0 0.0
    %4649 = vmatprep.subr.mxu0 0.0
    %4650 = vmatpush2.msra.mxu0 0.0
    %4651 = vmatprep.subr.mxu0 0.0
    %4652 = vmatpush2.msra.mxu0 0.0
    %4653 = vmatprep.subr.mxu0 0.0
    %4654 = vmatpush2.msra.mxu0 0.0
    %4655 = vmatprep.subr.mxu0 0.0
    %4656 = vmatpush2.msra.mxu0 0.0
    %4657 = vmatprep.subr.mxu0 0.0
    %4658 = vmatpush2.msra.mxu0 0.0
    %4659 = vmatprep.subr.mxu0 0.0
    %4660 = vmatpush2.msra.mxu0 0.0
    %4661 = vmatprep.subr.mxu0 0.0
    %4662 = vmatpush2.msra.mxu0 0.0
    %4663 = vmatprep.subr.mxu0 0.0
    %4664 = vmatpush2.msra.mxu0 0.0
    %4665 = vmatprep.subr.mxu0 0.0
    %4666 = vmatpush2.msra.mxu0 0.0
    %4667 = vmatprep.subr.mxu0 0.0
    %4668 = vmatpush2.msra.mxu0 0.0
    %4669 = vmatprep.mubr.f32.mxu0 0.0
    %4670 = vmatmul.mubr.f32.gmra.mxu0 %v4603
    %v4671 = vpop.f32.mrf.mxu0
    %v4672 = vadd.f32 %v4599, %v4671
    %v4673 = vpop.f32.mrf.mxu0
    %4674 = vdwg.mxu0
    %4675 = vst [vmem:[%s2] sm:$0xff] %v4672
    // Predicated region
    $region14: #{speech_rnn_forward.1} parent=1 // pred_check
      _
    $region15: #{speech_rnn_forward.1} parent=1 // pred_check_branch
      %4677 = sbr.rel (0) target = $region17
    $region16: #{speech_rnn_forward.1} parent=1 // pred_region
      _
    $region17: #{speech_rnn_forward.1} parent=1 // pred_fallthru
      _
    // Predicated region
    $region18: #{speech_rnn_forward.1} parent=1 // pred_check
      _
    $region19: #{speech_rnn_forward.1} parent=1 // pred_check_branch
      %4679 = sbr.rel (0) target = $region21
    $region20: #{speech_rnn_forward.1} parent=1 // pred_region
      _
    $region21: #{speech_rnn_forward.1} parent=1 // pred_fallthru
      _
    %4680 = vsyncpa [#allocation5], 1

</llo_original>
